<compile_context>
chip_gen: v6e
topology: v6e:2x2x1
jax: 0.10.0
libtpu: 0.0.40
codegen_flags: <defaults>
</compile_context>

<pallas_src>
import functools
import math

import jax
import jax.numpy as jnp
from jax.experimental import pallas as pl
from jax.experimental.pallas import tpu as pltpu

BN_EPS = 1e-5
VMEM_LIMIT_BYTES = 32 * 1024 * 1024


def _mosaic_params(*sem):
    return pltpu.CompilerParams(dimension_semantics=tuple(sem),
                                vmem_limit_bytes=VMEM_LIMIT_BYTES)


# ----------------------------------------------------------------------------
# helpers copied from the PyTorch reference
# ----------------------------------------------------------------------------
def _make_divisible(v, divisor, min_value=None):
    if min_value is None:
        min_value = divisor
    new_v = max(min_value, int(v + divisor / 2) // divisor * divisor)
    if new_v < 0.9 * v:
        new_v += divisor
    return new_v


def _spatial_tiles(S, limit=1024):
    """Pick a spatial tile: full S if small, else a divisor of S that is a
    multiple of 8 (keeps BlockSpecs legal with no padding copies)."""
    if S <= limit:
        return S, 1
    for ts in range(limit, 7, -8):
        if S % ts == 0:
            return ts, S // ts
    return S, 1


# ----------------------------------------------------------------------------
# Pallas kernels
# ----------------------------------------------------------------------------
def _pw_conv_kernel(*refs, act, has_se, has_res):
    """1x1 conv (matmul) + folded BN + optional SE gate on the input channels +
    optional fused residual add.  Blocks: x (1, ts, Cin), w (Cin, Cout)."""
    x_ref, w_ref, s_ref, b_ref = refs[:4]
    i = 4
    se_ref = res_ref = None
    if has_se:
        se_ref = refs[i]; i += 1
    if has_res:
        res_ref = refs[i]; i += 1
    o_ref = refs[i]

    x = x_ref[0]                                        # (ts, Cin) bf16
    if has_se:
        x = (x.astype(jnp.float32) * se_ref[0]).astype(jnp.bfloat16)
    y = jnp.dot(x, w_ref[...], preferred_element_type=jnp.float32)
    y = y * s_ref[...] + b_ref[...]                     # BN in f32
    if act == "silu":
        y = y * jax.nn.sigmoid(y)
    elif act == "sigmoid":
        y = jax.nn.sigmoid(y)
    if has_res:
        y = y + res_ref[0].astype(jnp.float32)
    o_ref[0] = y.astype(o_ref.dtype)


def pw_conv(x, w, scale, bias, act="none", se=None, residual=None):
    """x: (N, S, Cin) bf16, w: (Cin, Cout) bf16, scale/bias: (1, Cout) f32,
    se: (N, 1, Cin) f32 or None, residual: (N, S, Cout) bf16 or None."""
    N, S, Cin = x.shape
    Cout = w.shape[1]
    ts, n_t = _spatial_tiles(S)
    in_specs = [
        pl.BlockSpec((1, ts, Cin), lambda n, s: (n, s, 0)),
        pl.BlockSpec((Cin, Cout), lambda n, s: (0, 0)),
        pl.BlockSpec((1, Cout), lambda n, s: (0, 0)),
        pl.BlockSpec((1, Cout), lambda n, s: (0, 0)),
    ]
    args = [x, w, scale, bias]
    if se is not None:
        in_specs.append(pl.BlockSpec((1, 1, Cin), lambda n, s: (n, 0, 0)))
        args.append(se)
    if residual is not None:
        in_specs.append(pl.BlockSpec((1, ts, Cout), lambda n, s: (n, s, 0)))
        args.append(residual)
    # TODO(synk): add K/N weight tiling (grid over K with a VMEM accumulator)
    # for very large Cin/Cout so the full weight never has to sit in VMEM (v7x).
    return pl.pallas_call(
        functools.partial(_pw_conv_kernel, act=act,
                          has_se=se is not None, has_res=residual is not None),
        out_shape=jax.ShapeDtypeStruct((N, S, Cout), jnp.bfloat16),
        grid=(N, n_t),
        in_specs=in_specs,
        out_specs=pl.BlockSpec((1, ts, Cout), lambda n, s: (n, s, 0)),
        compiler_params=_mosaic_params("parallel", "parallel"),
    )(*args)


def _conv3x3_kernel(x_ref, w_ref, s_ref, b_ref, o_ref, *, flat_ok):
    """Full 3x3 conv (pad=1, stride handled outside) + BN + SiLU, accumulated
    over the 9 taps as shifted-window matmuls (no HBM im2col)."""
    H, W, Cout = o_ref.shape[1], o_ref.shape[2], o_ref.shape[3]
    Cin = x_ref.shape[3]
    xv = x_ref[0]                                       # (H+2, W+2, Cin) bf16
    s, b = s_ref[...], b_ref[...]
    if flat_ok:
        acc = jnp.zeros((H * W, Cout), jnp.float32)
        for dh in range(3):
            for dw in range(3):
                patch = xv[dh:dh + H, dw:dw + W, :].reshape(H * W, Cin)
                acc = acc + jnp.dot(patch, w_ref[3 * dh + dw],
                                    preferred_element_type=jnp.float32)
        y = acc * s + b
        y = y * jax.nn.sigmoid(y)
        o_ref[0] = y.reshape(H, W, Cout).astype(o_ref.dtype)
    else:
        # tiny-width fallback: per-row matmuls (avoids unaligned reshapes)
        for oh in range(H):
            acc = jnp.zeros((W, Cout), jnp.float32)
            for dh in range(3):
                for dw in range(3):
                    row = xv[oh + dh, dw:dw + W, :]
                    acc = acc + jnp.dot(row, w_ref[3 * dh + dw],
                                        preferred_element_type=jnp.float32)
            y = acc * s + b
            y = y * jax.nn.sigmoid(y)
            o_ref[0, oh] = y.astype(o_ref.dtype)


def conv3x3_bn_silu(x, w9, scale, bias, stride):
    """x: (N, H, W, Cin) bf16, w9: (9, Cin, Cout) bf16, scale/bias: (1, Cout)."""
    N, H, W, Cin = x.shape
    Cout = w9.shape[2]
    xp = jnp.pad(x, ((0, 0), (1, 1), (1, 1), (0, 0)))
    out = pl.pallas_call(
        functools.partial(_conv3x3_kernel, flat_ok=(W % 8 == 0)),
        out_shape=jax.ShapeDtypeStruct((N, H, W, Cout), jnp.bfloat16),
        grid=(N,),
        in_specs=[
            pl.BlockSpec((1, H + 2, W + 2, Cin), lambda n: (n, 0, 0, 0)),
            pl.BlockSpec((9, Cin, Cout), lambda n: (0, 0, 0)),
            pl.BlockSpec((1, Cout), lambda n: (0, 0)),
            pl.BlockSpec((1, Cout), lambda n: (0, 0)),
        ],
        out_specs=pl.BlockSpec((1, H, W, Cout), lambda n: (n, 0, 0, 0)),
        compiler_params=_mosaic_params("parallel"),
    )(xp, w9, scale, bias)
    if stride > 1:
        # TODO(synk): fold the stride directly into the in-kernel tap windows
        # instead of computing the stride-1 output and subsampling.
        out = out[:, ::stride, ::stride, :]
    return out


def _dw3x3_kernel(x_ref, w_ref, s_ref, b_ref, o_ref):
    """Depthwise 3x3 (pad=1) + BN + SiLU via 9 shifted VMEM slices."""
    H, W = o_ref.shape[1], o_ref.shape[2]
    xv = x_ref[0].astype(jnp.float32)                   # (H+2, W+2, C)
    wv = w_ref[...]                                     # (9, C) f32
    acc = None
    for dh in range(3):
        for dw in range(3):
            k = 3 * dh + dw
            tap = xv[dh:dh + H, dw:dw + W, :] * wv[k:k + 1, :]
            acc = tap if acc is None else acc + tap
    y = acc * s_ref[...] + b_ref[...]
    y = y * jax.nn.sigmoid(y)
    o_ref[0] = y.astype(o_ref.dtype)


def dwconv3x3_bn_silu(x, w9, scale, bias, stride):
    """x: (N, H, W, C) bf16, w9: (9, C) f32, scale/bias: (1, C) f32."""
    N, H, W, C = x.shape
    xp = jnp.pad(x, ((0, 0), (1, 1), (1, 1), (0, 0)))
    out = pl.pallas_call(
        _dw3x3_kernel,
        out_shape=jax.ShapeDtypeStruct((N, H, W, C), jnp.bfloat16),
        grid=(N,),
        in_specs=[
            pl.BlockSpec((1, H + 2, W + 2, C), lambda n: (n, 0, 0, 0)),
            pl.BlockSpec((9, C), lambda n: (0, 0)),
            pl.BlockSpec((1, C), lambda n: (0, 0)),
            pl.BlockSpec((1, C), lambda n: (0, 0)),
        ],
        out_specs=pl.BlockSpec((1, H, W, C), lambda n: (n, 0, 0, 0)),
        compiler_params=_mosaic_params("parallel"),
    )(xp, w9, scale, bias)
    if stride > 1:
        out = out[:, ::stride, ::stride, :]
    return out


def _se_kernel(x_ref, w1_ref, b1_ref, w2_ref, b2_ref, o_ref, acc_ref, *, inv_s):
    """Fused SE gate: running spatial mean -> fc1+SiLU -> fc2+Sigmoid."""
    @pl.when(pl.program_id(1) == 0)
    def _():
        acc_ref[...] = jnp.zeros_like(acc_ref)
    acc_ref[...] += jnp.sum(x_ref[0].astype(jnp.float32), axis=0, keepdims=True)

    @pl.when(pl.program_id(1) == pl.num_programs(1) - 1)
    def _():
        pooled = acc_ref[...] * inv_s                   # (1, C) f32
        h = jnp.dot(pooled.astype(jnp.bfloat16), w1_ref[...],
                    preferred_element_type=jnp.float32) + b1_ref[...]
        h = h * jax.nn.sigmoid(h)
        y = jnp.dot(h.astype(jnp.bfloat16), w2_ref[...],
                    preferred_element_type=jnp.float32) + b2_ref[...]
        o_ref[0] = jax.nn.sigmoid(y)


def se_vector(h, fc1, fc2):
    """h: (N, S, C) bf16 -> per-(batch, channel) gate (N, 1, C) f32."""
    N, S, C = h.shape
    w1, b1 = fc1                                        # (C, Ch) bf16, (1, Ch) f32
    w2, b2 = fc2                                        # (Ch, C) bf16, (1, C) f32
    Ch = w1.shape[1]
    ts, n_t = _spatial_tiles(S)
    return pl.pallas_call(
        functools.partial(_se_kernel, inv_s=1.0 / S),
        out_shape=jax.ShapeDtypeStruct((N, 1, C), jnp.float32),
        grid=(N, n_t),
        in_specs=[
            pl.BlockSpec((1, ts, C), lambda n, s: (n, s, 0)),
            pl.BlockSpec((C, Ch), lambda n, s: (0, 0)),
            pl.BlockSpec((1, Ch), lambda n, s: (0, 0)),
            pl.BlockSpec((Ch, C), lambda n, s: (0, 0)),
            pl.BlockSpec((1, C), lambda n, s: (0, 0)),
        ],
        out_specs=pl.BlockSpec((1, 1, C), lambda n, s: (n, 0, 0)),
        scratch_shapes=[pltpu.VMEM((1, C), jnp.float32)],
        compiler_params=_mosaic_params("parallel", "arbitrary"),
    )(h, w1, b1, w2, b2)


def _pool_fc_kernel(x_ref, w_ref, b_ref, o_ref, acc_ref, *, inv_s):
    """Fused global-average-pool + linear classifier."""
    @pl.when(pl.program_id(1) == 0)
    def _():
        acc_ref[...] = jnp.zeros_like(acc_ref)
    acc_ref[...] += jnp.sum(x_ref[0].astype(jnp.float32), axis=0, keepdims=True)

    @pl.when(pl.program_id(1) == pl.num_programs(1) - 1)
    def _():
        pooled = acc_ref[...] * inv_s                   # (1, C) f32
        o_ref[0] = jnp.dot(pooled.astype(jnp.bfloat16), w_ref[...],
                           preferred_element_type=jnp.float32) + b_ref[...]


def pool_classify(x, w, b):
    """x: (N, S, C) bf16, w: (C, nc) bf16, b: (1, nc) f32 -> (N, nc) f32."""
    N, S, C = x.shape
    nc = w.shape[1]
    ts, n_t = _spatial_tiles(S)
    out = pl.pallas_call(
        functools.partial(_pool_fc_kernel, inv_s=1.0 / S),
        out_shape=jax.ShapeDtypeStruct((N, 1, nc), jnp.float32),
        grid=(N, n_t),
        in_specs=[
            pl.BlockSpec((1, ts, C), lambda n, s: (n, s, 0)),
            pl.BlockSpec((C, nc), lambda n, s: (0, 0)),
            pl.BlockSpec((1, nc), lambda n, s: (0, 0)),
        ],
        out_specs=pl.BlockSpec((1, 1, nc), lambda n, s: (n, 0, 0)),
        scratch_shapes=[pltpu.VMEM((1, C), jnp.float32)],
        compiler_params=_mosaic_params("parallel", "arbitrary"),
    )(x, w, b)
    return out.reshape(N, nc)


# ----------------------------------------------------------------------------
# MBConv block and full forward
# ----------------------------------------------------------------------------
def mbconv_forward(x, blk):
    N, H, W, Cin = x.shape
    res = x.reshape(N, H * W, Cin) if blk["identity"] else None
    if blk["use_se"]:
        h = pw_conv(x.reshape(N, H * W, Cin), blk["expand_w"],
                    *blk["expand_bn"], act="silu")
        Chid = h.shape[-1]
        h = dwconv3x3_bn_silu(h.reshape(N, H, W, Chid), blk["dw_w"],
                              *blk["dw_bn"], stride=blk["stride"])
        _, Hh, Wh, _ = h.shape
        hs = h.reshape(N, Hh * Wh, Chid)
        gate = se_vector(hs, blk["se_fc1"], blk["se_fc2"])     # (N, 1, Chid)
        y = pw_conv(hs, blk["proj_w"], *blk["proj_bn"], act="none",
                    se=gate, residual=res)
    else:
        h = conv3x3_bn_silu(x, blk["conv1_w"], *blk["conv1_bn"],
                            stride=blk["stride"])
        _, Hh, Wh, Chid = h.shape
        y = pw_conv(h.reshape(N, Hh * Wh, Chid), blk["proj_w"],
                    *blk["proj_bn"], act="none", residual=res)
    Cout = y.shape[-1]
    return y.reshape(N, Hh, Wh, Cout)


def effnetv2_forward(params, x_nchw):
    x = jnp.transpose(x_nchw, (0, 2, 3, 1)).astype(jnp.bfloat16)   # NHWC bf16
    x = conv3x3_bn_silu(x, params["stem"]["w"], *params["stem"]["bn"], stride=2)
    for blk in params["blocks"]:
        x = mbconv_forward(x, blk)
    N, H, W, C = x.shape
    x = pw_conv(x.reshape(N, H * W, C), params["head"]["w"],
                *params["head"]["bn"], act="silu")
    w, b = params["clf"]
    return pool_classify(x, w, b)


# ----------------------------------------------------------------------------
# deterministic parameter initialization (synthetic, kernel-ready layouts)
# ----------------------------------------------------------------------------
def _init_conv(key, cout, cin_per_group, kh, kw):
    fan_in = cin_per_group * kh * kw
    return jax.random.normal(key, (cout, cin_per_group, kh, kw),
                             jnp.float32) * (2.0 / fan_in) ** 0.5


def _init_bn(key, c):
    k1, k2, k3, k4 = jax.random.split(key, 4)
    gamma = jax.random.uniform(k1, (c,), minval=0.5, maxval=1.5)
    beta = jax.random.normal(k2, (c,)) * 0.1
    mean = jax.random.normal(k3, (c,)) * 0.1
    var = jax.random.uniform(k4, (c,), minval=0.5, maxval=1.5)
    scale = gamma / jnp.sqrt(var + BN_EPS)
    bias = beta - mean * scale
    return (scale.reshape(1, c).astype(jnp.float32),
            bias.reshape(1, c).astype(jnp.float32))


def _init_linear(key, in_f, out_f):
    k1, k2 = jax.random.split(key)
    bound = 1.0 / math.sqrt(in_f)
    w = jax.random.uniform(k1, (out_f, in_f), minval=-bound, maxval=bound,
                           dtype=jnp.float32)
    b = jax.random.uniform(k2, (out_f,), minval=-bound, maxval=bound,
                           dtype=jnp.float32)
    # kernel layout: (in, out) bf16 weight, (1, out) f32 bias
    return w.T.astype(jnp.bfloat16), b.reshape(1, out_f).astype(jnp.float32)


def _conv3x3_to_taps(w_pt):
    cout, cin = w_pt.shape[0], w_pt.shape[1]
    return jnp.transpose(w_pt, (2, 3, 1, 0)).reshape(9, cin, cout).astype(jnp.bfloat16)


def _conv1x1_to_mm(w_pt):
    cout, cin = w_pt.shape[0], w_pt.shape[1]
    return w_pt.reshape(cout, cin).T.astype(jnp.bfloat16)


def _dw3x3_to_taps(w_pt):
    c = w_pt.shape[0]
    return jnp.transpose(w_pt, (2, 3, 0, 1)).reshape(9, c).astype(jnp.float32)


def build_params(key, cfgs, in_size, num_classes=10, width_mult=1.0):
    keys = iter(jax.random.split(key, 256))
    input_channel = _make_divisible(24 * width_mult, 8)

    stem = {
        "w": _conv3x3_to_taps(_init_conv(next(keys), input_channel, in_size, 3, 3)),
        "bn": _init_bn(next(keys), input_channel),
    }

    blocks = []
    for t, c, n, s, use_se in cfgs:
        output_channel = _make_divisible(c * width_mult, 8)
        for i in range(n):
            stride = s if i == 0 else 1
            hidden = int(round(input_channel * t))
            blk = {
                "stride": stride,
                "use_se": bool(use_se),
                "identity": stride == 1 and input_channel == output_channel,
            }
            if use_se:
                blk["expand_w"] = _conv1x1_to_mm(
                    _init_conv(next(keys), hidden, input_channel, 1, 1))
                blk["expand_bn"] = _init_bn(next(keys), hidden)
                blk["dw_w"] = _dw3x3_to_taps(_init_conv(next(keys), hidden, 1, 3, 3))
                blk["dw_bn"] = _init_bn(next(keys), hidden)
                se_hidden = _make_divisible(input_channel // 4, 8)
                blk["se_fc1"] = _init_linear(next(keys), hidden, se_hidden)
                blk["se_fc2"] = _init_linear(next(keys), se_hidden, hidden)
                blk["proj_w"] = _conv1x1_to_mm(
                    _init_conv(next(keys), output_channel, hidden, 1, 1))
                blk["proj_bn"] = _init_bn(next(keys), output_channel)
            else:
                blk["conv1_w"] = _conv3x3_to_taps(
                    _init_conv(next(keys), hidden, input_channel, 3, 3))
                blk["conv1_bn"] = _init_bn(next(keys), hidden)
                blk["proj_w"] = _conv1x1_to_mm(
                    _init_conv(next(keys), output_channel, hidden, 1, 1))
                blk["proj_bn"] = _init_bn(next(keys), output_channel)
            blocks.append(blk)
            input_channel = output_channel

    head_channel = _make_divisible(1792 * width_mult, 8) if width_mult > 1.0 else 1792
    head = {
        "w": _conv1x1_to_mm(_init_conv(next(keys), head_channel, input_channel, 1, 1)),
        "bn": _init_bn(next(keys), head_channel),
    }
    clf = _init_linear(next(keys), head_channel, num_classes)
    return {"stem": stem, "blocks": blocks, "head": head, "clf": clf}


if __name__ == "__main__":
    key = jax.random.PRNGKey(0)
    kx, kp = jax.random.split(key)

    # small EffNetV2-style config: (expand_ratio t, channels c, repeats n, stride s, use_se)
    cfgs = [
        (1, 16, 1, 1, 0),
        (2, 24, 2, 2, 0),
        (2, 32, 1, 2, 1),
    ]

    x = jax.random.normal(kx, (2, 4, 16, 16), jnp.float32)   # NCHW, in_size=4
    params = build_params(kp, cfgs, in_size=4, num_classes=10, width_mult=1.0)

    logits = effnetv2_forward(params, x)
    logits = jax.block_until_ready(logits)

    assert logits.shape == (2, 10), logits.shape
    assert jnp.all(jnp.isfinite(logits))
    print("KERNEL_OK")
</pallas_src>

<mosaic_0001>
module attributes {stable_mosaic.version = 11 : i64} {
  func.func @_conv3x3_kernel(%arg0: i32, %arg1: memref<1x18x18x4xbf16, #tpu.memory_space<vmem>>, %arg2: memref<9x4x24xbf16, #tpu.memory_space<vmem>>, %arg3: memref<1x24xf32, #tpu.memory_space<vmem>>, %arg4: memref<1x24xf32, #tpu.memory_space<vmem>>, %arg5: memref<1x16x16x24xbf16, #tpu.memory_space<vmem>>) attributes {dimension_semantics = [#tpu.dimension_semantics<parallel>], iteration_bounds = array<i64: 2>, scalar_prefetch = 0 : i64, scratch_operands = 0 : i64, tpu.core_type = #tpu.core_type<tc>, window_params = [{transform_indices = @transform_0, window_bounds = array<i64: 1, 18, 18, 4>}, {pipeline_mode = #tpu.pipeline_mode<synchronous>, transform_indices = @transform_1, window_bounds = array<i64: 9, 4, 24>}, {pipeline_mode = #tpu.pipeline_mode<synchronous>, transform_indices = @transform_2, window_bounds = array<i64: 1, 24>}, {pipeline_mode = #tpu.pipeline_mode<synchronous>, transform_indices = @transform_3, window_bounds = array<i64: 1, 24>}, {transform_indices = @transform_4, window_bounds = array<i64: 1, 16, 16, 24>}]} {
    %c0 = arith.constant 0 : index
    %c0_0 = arith.constant 0 : index
    %c0_1 = arith.constant 0 : index
    %c0_2 = arith.constant 0 : index
    %0 = vector.load %arg1[%c0, %c0_0, %c0_1, %c0_2] : memref<1x18x18x4xbf16, #tpu.memory_space<vmem>>, vector<1x18x18x4xbf16>
    %1 = vector.shape_cast %0 : vector<1x18x18x4xbf16> to vector<18x18x4xbf16>
    %c0_3 = arith.constant 0 : index
    %c0_4 = arith.constant 0 : index
    %2 = vector.load %arg3[%c0_3, %c0_4] : memref<1x24xf32, #tpu.memory_space<vmem>>, vector<1x24xf32>
    %c0_5 = arith.constant 0 : index
    %c0_6 = arith.constant 0 : index
    %3 = vector.load %arg4[%c0_5, %c0_6] : memref<1x24xf32, #tpu.memory_space<vmem>>, vector<1x24xf32>
    %cst = arith.constant 0.000000e+00 : f32
    %4 = vector.broadcast %cst : f32 to vector<256x24xf32>
    %5 = vector.extract_strided_slice %1 {offsets = [0, 0, 0], sizes = [16, 16, 4], strides = [1, 1, 1]} : vector<18x18x4xbf16> to vector<16x16x4xbf16>
    %6 = vector.shape_cast %5 : vector<16x16x4xbf16> to vector<256x4xbf16>
    %c0_7 = arith.constant 0 : index
    %c0_8 = arith.constant 0 : index
    %c0_9 = arith.constant 0 : index
    %7 = vector.load %arg2[%c0_7, %c0_8, %c0_9] : memref<9x4x24xbf16, #tpu.memory_space<vmem>>, vector<1x4x24xbf16>
    %8 = vector.shape_cast %7 : vector<1x4x24xbf16> to vector<4x24xbf16>
    %cst_10 = arith.constant dense<0.000000e+00> : vector<256x24xf32>
    %9 = tpu.matmul %6, %8, %cst_10 {dimension_numbers = #tpu.dot_dimension_numbers<[1], [0], [0], [1], [0, 0, 1, 1], [], []>} : vector<256x4xbf16>, vector<4x24xbf16>, vector<256x24xf32> -> vector<256x24xf32>
    %10 = arith.addf %4, %9 : vector<256x24xf32>
    %11 = vector.extract_strided_slice %1 {offsets = [0, 1, 0], sizes = [16, 16, 4], strides = [1, 1, 1]} : vector<18x18x4xbf16> to vector<16x16x4xbf16>
    %12 = vector.shape_cast %11 : vector<16x16x4xbf16> to vector<256x4xbf16>
    %c1 = arith.constant 1 : index
    %c0_11 = arith.constant 0 : index
    %c0_12 = arith.constant 0 : index
    %13 = vector.load %arg2[%c1, %c0_11, %c0_12] : memref<9x4x24xbf16, #tpu.memory_space<vmem>>, vector<1x4x24xbf16>
    %14 = vector.shape_cast %13 : vector<1x4x24xbf16> to vector<4x24xbf16>
    %cst_13 = arith.constant dense<0.000000e+00> : vector<256x24xf32>
    %15 = tpu.matmul %12, %14, %cst_13 {dimension_numbers = #tpu.dot_dimension_numbers<[1], [0], [0], [1], [0, 0, 1, 1], [], []>} : vector<256x4xbf16>, vector<4x24xbf16>, vector<256x24xf32> -> vector<256x24xf32>
    %16 = arith.addf %10, %15 : vector<256x24xf32>
    %17 = vector.extract_strided_slice %1 {offsets = [0, 2, 0], sizes = [16, 16, 4], strides = [1, 1, 1]} : vector<18x18x4xbf16> to vector<16x16x4xbf16>
    %18 = vector.shape_cast %17 : vector<16x16x4xbf16> to vector<256x4xbf16>
    %c2 = arith.constant 2 : index
    %c0_14 = arith.constant 0 : index
    %c0_15 = arith.constant 0 : index
    %19 = vector.load %arg2[%c2, %c0_14, %c0_15] : memref<9x4x24xbf16, #tpu.memory_space<vmem>>, vector<1x4x24xbf16>
    %20 = vector.shape_cast %19 : vector<1x4x24xbf16> to vector<4x24xbf16>
    %cst_16 = arith.constant dense<0.000000e+00> : vector<256x24xf32>
    %21 = tpu.matmul %18, %20, %cst_16 {dimension_numbers = #tpu.dot_dimension_numbers<[1], [0], [0], [1], [0, 0, 1, 1], [], []>} : vector<256x4xbf16>, vector<4x24xbf16>, vector<256x24xf32> -> vector<256x24xf32>
    %22 = arith.addf %16, %21 : vector<256x24xf32>
    %23 = vector.extract_strided_slice %1 {offsets = [1, 0, 0], sizes = [16, 16, 4], strides = [1, 1, 1]} : vector<18x18x4xbf16> to vector<16x16x4xbf16>
    %24 = vector.shape_cast %23 : vector<16x16x4xbf16> to vector<256x4xbf16>
    %c3 = arith.constant 3 : index
    %c0_17 = arith.constant 0 : index
    %c0_18 = arith.constant 0 : index
    %25 = vector.load %arg2[%c3, %c0_17, %c0_18] : memref<9x4x24xbf16, #tpu.memory_space<vmem>>, vector<1x4x24xbf16>
    %26 = vector.shape_cast %25 : vector<1x4x24xbf16> to vector<4x24xbf16>
    %cst_19 = arith.constant dense<0.000000e+00> : vector<256x24xf32>
    %27 = tpu.matmul %24, %26, %cst_19 {dimension_numbers = #tpu.dot_dimension_numbers<[1], [0], [0], [1], [0, 0, 1, 1], [], []>} : vector<256x4xbf16>, vector<4x24xbf16>, vector<256x24xf32> -> vector<256x24xf32>
    %28 = arith.addf %22, %27 : vector<256x24xf32>
    %29 = vector.extract_strided_slice %1 {offsets = [1, 1, 0], sizes = [16, 16, 4], strides = [1, 1, 1]} : vector<18x18x4xbf16> to vector<16x16x4xbf16>
    %30 = vector.shape_cast %29 : vector<16x16x4xbf16> to vector<256x4xbf16>
    %c4 = arith.constant 4 : index
    %c0_20 = arith.constant 0 : index
    %c0_21 = arith.constant 0 : index
    %31 = vector.load %arg2[%c4, %c0_20, %c0_21] : memref<9x4x24xbf16, #tpu.memory_space<vmem>>, vector<1x4x24xbf16>
    %32 = vector.shape_cast %31 : vector<1x4x24xbf16> to vector<4x24xbf16>
    %cst_22 = arith.constant dense<0.000000e+00> : vector<256x24xf32>
    %33 = tpu.matmul %30, %32, %cst_22 {dimension_numbers = #tpu.dot_dimension_numbers<[1], [0], [0], [1], [0, 0, 1, 1], [], []>} : vector<256x4xbf16>, vector<4x24xbf16>, vector<256x24xf32> -> vector<256x24xf32>
    %34 = arith.addf %28, %33 : vector<256x24xf32>
    %35 = vector.extract_strided_slice %1 {offsets = [1, 2, 0], sizes = [16, 16, 4], strides = [1, 1, 1]} : vector<18x18x4xbf16> to vector<16x16x4xbf16>
    %36 = vector.shape_cast %35 : vector<16x16x4xbf16> to vector<256x4xbf16>
    %c5 = arith.constant 5 : index
    %c0_23 = arith.constant 0 : index
    %c0_24 = arith.constant 0 : index
    %37 = vector.load %arg2[%c5, %c0_23, %c0_24] : memref<9x4x24xbf16, #tpu.memory_space<vmem>>, vector<1x4x24xbf16>
    %38 = vector.shape_cast %37 : vector<1x4x24xbf16> to vector<4x24xbf16>
    %cst_25 = arith.constant dense<0.000000e+00> : vector<256x24xf32>
    %39 = tpu.matmul %36, %38, %cst_25 {dimension_numbers = #tpu.dot_dimension_numbers<[1], [0], [0], [1], [0, 0, 1, 1], [], []>} : vector<256x4xbf16>, vector<4x24xbf16>, vector<256x24xf32> -> vector<256x24xf32>
    %40 = arith.addf %34, %39 : vector<256x24xf32>
    %41 = vector.extract_strided_slice %1 {offsets = [2, 0, 0], sizes = [16, 16, 4], strides = [1, 1, 1]} : vector<18x18x4xbf16> to vector<16x16x4xbf16>
    %42 = vector.shape_cast %41 : vector<16x16x4xbf16> to vector<256x4xbf16>
    %c6 = arith.constant 6 : index
    %c0_26 = arith.constant 0 : index
    %c0_27 = arith.constant 0 : index
    %43 = vector.load %arg2[%c6, %c0_26, %c0_27] : memref<9x4x24xbf16, #tpu.memory_space<vmem>>, vector<1x4x24xbf16>
    %44 = vector.shape_cast %43 : vector<1x4x24xbf16> to vector<4x24xbf16>
    %cst_28 = arith.constant dense<0.000000e+00> : vector<256x24xf32>
    %45 = tpu.matmul %42, %44, %cst_28 {dimension_numbers = #tpu.dot_dimension_numbers<[1], [0], [0], [1], [0, 0, 1, 1], [], []>} : vector<256x4xbf16>, vector<4x24xbf16>, vector<256x24xf32> -> vector<256x24xf32>
    %46 = arith.addf %40, %45 : vector<256x24xf32>
    %47 = vector.extract_strided_slice %1 {offsets = [2, 1, 0], sizes = [16, 16, 4], strides = [1, 1, 1]} : vector<18x18x4xbf16> to vector<16x16x4xbf16>
    %48 = vector.shape_cast %47 : vector<16x16x4xbf16> to vector<256x4xbf16>
    %c7 = arith.constant 7 : index
    %c0_29 = arith.constant 0 : index
    %c0_30 = arith.constant 0 : index
    %49 = vector.load %arg2[%c7, %c0_29, %c0_30] : memref<9x4x24xbf16, #tpu.memory_space<vmem>>, vector<1x4x24xbf16>
    %50 = vector.shape_cast %49 : vector<1x4x24xbf16> to vector<4x24xbf16>
    %cst_31 = arith.constant dense<0.000000e+00> : vector<256x24xf32>
    %51 = tpu.matmul %48, %50, %cst_31 {dimension_numbers = #tpu.dot_dimension_numbers<[1], [0], [0], [1], [0, 0, 1, 1], [], []>} : vector<256x4xbf16>, vector<4x24xbf16>, vector<256x24xf32> -> vector<256x24xf32>
    %52 = arith.addf %46, %51 : vector<256x24xf32>
    %53 = vector.extract_strided_slice %1 {offsets = [2, 2, 0], sizes = [16, 16, 4], strides = [1, 1, 1]} : vector<18x18x4xbf16> to vector<16x16x4xbf16>
    %54 = vector.shape_cast %53 : vector<16x16x4xbf16> to vector<256x4xbf16>
    %c8 = arith.constant 8 : index
    %c0_32 = arith.constant 0 : index
    %c0_33 = arith.constant 0 : index
    %55 = vector.load %arg2[%c8, %c0_32, %c0_33] : memref<9x4x24xbf16, #tpu.memory_space<vmem>>, vector<1x4x24xbf16>
    %56 = vector.shape_cast %55 : vector<1x4x24xbf16> to vector<4x24xbf16>
    %cst_34 = arith.constant dense<0.000000e+00> : vector<256x24xf32>
    %57 = tpu.matmul %54, %56, %cst_34 {dimension_numbers = #tpu.dot_dimension_numbers<[1], [0], [0], [1], [0, 0, 1, 1], [], []>} : vector<256x4xbf16>, vector<4x24xbf16>, vector<256x24xf32> -> vector<256x24xf32>
    %58 = arith.addf %52, %57 : vector<256x24xf32>
    %59 = vector.broadcast %2 : vector<1x24xf32> to vector<256x24xf32>
    %60 = arith.mulf %58, %59 : vector<256x24xf32>
    %61 = vector.broadcast %3 : vector<1x24xf32> to vector<256x24xf32>
    %62 = arith.addf %60, %61 : vector<256x24xf32>
    %63 = arith.negf %62 : vector<256x24xf32>
    %64 = math.exp %63 : vector<256x24xf32>
    %cst_35 = arith.constant 1.000000e+00 : f32
    %65 = vector.broadcast %cst_35 : f32 to vector<256x24xf32>
    %66 = arith.addf %65, %64 : vector<256x24xf32>
    %67 = arith.divf %65, %66 : vector<256x24xf32>
    %68 = arith.mulf %62, %67 : vector<256x24xf32>
    %69 = vector.shape_cast %68 : vector<256x24xf32> to vector<16x16x24xf32>
    %70 = arith.truncf %69 : vector<16x16x24xf32> to vector<16x16x24xbf16>
    %c0_36 = arith.constant 0 : index
    %c0_37 = arith.constant 0 : index
    %c0_38 = arith.constant 0 : index
    %c0_39 = arith.constant 0 : index
    %71 = vector.load %arg5[%c0_36, %c0_37, %c0_38, %c0_39] : memref<1x16x16x24xbf16, #tpu.memory_space<vmem>>, vector<1x16x16x24xbf16>
    %72 = vector.shape_cast %71 : vector<1x16x16x24xbf16> to vector<16x16x24xbf16>
    %73 = vector.shape_cast %70 : vector<16x16x24xbf16> to vector<1x16x16x24xbf16>
    tpu.vector_store %arg5[%c0_36, %c0_37, %c0_38, %c0_39], %73 {strides = array<i32>} : memref<1x16x16x24xbf16, #tpu.memory_space<vmem>>, vector<1x16x16x24xbf16>,
    return
  }
  func.func @transform_0(%arg0: i32) -> (i32, i32, i32, i32) {
    %c0_i32 = arith.constant 0 : i32
    %c0_i32_0 = arith.constant 0 : i32
    %c0_i32_1 = arith.constant 0 : i32
    %c0_i32_2 = arith.constant 0 : i32
    return %arg0, %c0_i32, %c0_i32_0, %c0_i32_1 : i32, i32, i32, i32
  }
  func.func @transform_1(%arg0: i32) -> (i32, i32, i32) {
    %c0_i32 = arith.constant 0 : i32
    %c0_i32_0 = arith.constant 0 : i32
    %c0_i32_1 = arith.constant 0 : i32
    %c0_i32_2 = arith.constant 0 : i32
    return %c0_i32, %c0_i32_0, %c0_i32_1 : i32, i32, i32
  }
  func.func @transform_2(%arg0: i32) -> (i32, i32) {
    %c0_i32 = arith.constant 0 : i32
    %c0_i32_0 = arith.constant 0 : i32
    %c0_i32_1 = arith.constant 0 : i32
    return %c0_i32, %c0_i32_0 : i32, i32
  }
  func.func @transform_3(%arg0: i32) -> (i32, i32) {
    %c0_i32 = arith.constant 0 : i32
    %c0_i32_0 = arith.constant 0 : i32
    %c0_i32_1 = arith.constant 0 : i32
    return %c0_i32, %c0_i32_0 : i32, i32
  }
  func.func @transform_4(%arg0: i32) -> (i32, i32, i32, i32) {
    %c0_i32 = arith.constant 0 : i32
    %c0_i32_0 = arith.constant 0 : i32
    %c0_i32_1 = arith.constant 0 : i32
    %c0_i32_2 = arith.constant 0 : i32
    return %arg0, %c0_i32, %c0_i32_0, %c0_i32_1 : i32, i32, i32, i32
  }
}

</mosaic_0001>

<llo_original>
// kernel: tpu_custom_call.1
$region0: #{tpu_custom_call.1}
  #allocation0 [shape = 'u32[]', space=smem, size = 0x4, offset = 0x4, fixed_abs, tag = 'smem constant byte address 0x4 - core index']
  #allocation1 [shape = 'u32[144,128]{1,0:T(1,128)}', space=vmem, size = 0x12000, scoped, tag = 'internal scratch']
  %s0 = inlined_call_operand.vmem [shape: bf16[2,18,18,4], index: 0, kind: input, shape index: {}]
  %s1 = inlined_call_operand.vmem [shape: bf16[9,4,24], index: 1, kind: input, shape index: {}]
  %s2 = inlined_call_operand.vmem [shape: f32[1,24], index: 2, kind: input, shape index: {}]
  %s3 = inlined_call_operand.vmem [shape: f32[1,24], index: 3, kind: input, shape index: {}]
  %s4 = inlined_call_operand.hbm [shape: bf16[2,16,16,24], index: 4, kind: output, shape index: {}]
  %s5 = sld [smem:[#allocation0]]
  $region49: #{tpu_custom_call.1} parent=0
    _
  %s7 = ssub.s32 1, %s5
  %s8 = scalar_select 0, %s7, %s5
  $region1: #{tpu_custom_call.1} parent=0
    #allocation2 [shape = 'u8[131072]{0}', space=vmem, size = 0x20000, scoped, tag = 'output window, operand 0']
    #allocation3 [shape = 's32[2]{0}', space=sflag, size = 0x8, scoped, tag = 'scoped memory for tpu_custom_call.1']
    %9 = vsyncpa [#allocation3], 0
    %s10 = scalar_lea.sflag [#allocation3], 1
    %11 = vsyncpa %s10, 0
    loop: start=0, step=1, limit=4
    $region2: #{tpu_custom_call.1} parent=1 // loop_pre_header
      _
    $region3: #{tpu_custom_call.1} parent=1 // loop_header
      %s13 = sphi 0, %s17
      %p14 = scmp.ge.s32.totalorder %s13, 4
      %s23 = sphi 0, %s25
      %s26 = sphi 0, %s23
      %s27 = sphi 0, %s26
      %s43 = sphi 0, %s27
      %s47 = sphi 0, %s47
      %s49 = sphi 0, %s47
      %s50 = sphi 0, %s49
      %s64 = sphi 0, %s50
      %s68 = sphi 0, %s68
      %s70 = sphi 0, %s68
      %s71 = sphi 0, %s70
      %s85 = sphi 0, %s71
      %s89 = sphi 0, %s89
      %s91 = sphi 0, %s89
      %s92 = sphi 0, %s91
      %s106 = sphi 0, %s92
      %s112 = sphi 0, %s114
      %s115 = sphi 0, %s112
      %s116 = sphi 0, %s115
      %s132 = sphi 0, %s116
    $region4: #{tpu_custom_call.1} parent=1 // loop_header_branch
      %16 = sbr.rel (%p14) target = $region8
    $region5: #{tpu_custom_call.1} parent=1 // loop_body
      %s18 = ssub.s32 %s13, 1
      %s19 = ssub.s32 %s13, 2
      %s20 = sadd.s32 %s13, 1
      %s21 = ssub.s32 %s13, %s20
      %p22 = scmp.eq.s32.totalorder %s21, 0
      %s24 = sadd.s32 %s23, 1
      %s25 = scalar_select %p22, %s23, %s24
      %p28 = pneg %p22
      %p29 = scmp.eq.s32.totalorder %s13, 1
      %p30 = por %p28, %p29
      %p31 = scmp.ne.s32.totalorder %s23, %s26
      %p32 = scmp.eq.s32.totalorder %s13, 0
      %p33 = por %p31, %p32
      %p34 = scmp.ne.s32.totalorder %s23, %s26
      %p35 = scmp.eq.s32.totalorder %s18, 1
      %p36 = por %p34, %p35
      %p37 = scmp.ne.s32.totalorder %s26, %s27
      %p38 = scmp.eq.s32.totalorder %s18, 0
      %p39 = por %p37, %p38
      %p40 = scmp.ne.s32.totalorder %s26, %s27
      %p41 = scmp.eq.s32.totalorder %s19, 1
      %p42 = por %p40, %p41
      %p44 = scmp.ne.s32.totalorder %s27, %s43
      %p45 = scmp.eq.s32.totalorder %s19, 0
      %p46 = por %p44, %p45
      %s48 = sadd.s32 %s47, 1
      %p51 = scmp.eq.s32.totalorder %s13, 1
      %p52 = scmp.ne.s32.totalorder %s47, %s49
      %p53 = scmp.eq.s32.totalorder %s13, 0
      %p54 = por %p52, %p53
      %p55 = scmp.ne.s32.totalorder %s47, %s49
      %p56 = scmp.eq.s32.totalorder %s18, 1
      %p57 = por %p55, %p56
      %p58 = scmp.ne.s32.totalorder %s49, %s50
      %p59 = scmp.eq.s32.totalorder %s18, 0
      %p60 = por %p58, %p59
      %p61 = scmp.ne.s32.totalorder %s49, %s50
      %p62 = scmp.eq.s32.totalorder %s19, 1
      %p63 = por %p61, %p62
      %p65 = scmp.ne.s32.totalorder %s50, %s64
      %p66 = scmp.eq.s32.totalorder %s19, 0
      %p67 = por %p65, %p66
      %s69 = sadd.s32 %s68, 1
      %p72 = scmp.eq.s32.totalorder %s13, 1
      %p73 = scmp.ne.s32.totalorder %s68, %s70
      %p74 = scmp.eq.s32.totalorder %s13, 0
      %p75 = por %p73, %p74
      %p76 = scmp.ne.s32.totalorder %s68, %s70
      %p77 = scmp.eq.s32.totalorder %s18, 1
      %p78 = por %p76, %p77
      %p79 = scmp.ne.s32.totalorder %s70, %s71
      %p80 = scmp.eq.s32.totalorder %s18, 0
      %p81 = por %p79, %p80
      %p82 = scmp.ne.s32.totalorder %s70, %s71
      %p83 = scmp.eq.s32.totalorder %s19, 1
      %p84 = por %p82, %p83
      %p86 = scmp.ne.s32.totalorder %s71, %s85
      %p87 = scmp.eq.s32.totalorder %s19, 0
      %p88 = por %p86, %p87
      %s90 = sadd.s32 %s89, 1
      %p93 = scmp.eq.s32.totalorder %s13, 1
      %p94 = scmp.ne.s32.totalorder %s89, %s91
      %p95 = scmp.eq.s32.totalorder %s13, 0
      %p96 = por %p94, %p95
      %p97 = scmp.ne.s32.totalorder %s89, %s91
      %p98 = scmp.eq.s32.totalorder %s18, 1
      %p99 = por %p97, %p98
      %p100 = scmp.ne.s32.totalorder %s91, %s92
      %p101 = scmp.eq.s32.totalorder %s18, 0
      %p102 = por %p100, %p101
      %p103 = scmp.ne.s32.totalorder %s91, %s92
      %p104 = scmp.eq.s32.totalorder %s19, 1
      %p105 = por %p103, %p104
      %p107 = scmp.ne.s32.totalorder %s92, %s106
      %p108 = scmp.eq.s32.totalorder %s19, 0
      %p109 = por %p107, %p108
      %s110 = ssub.s32 %s13, %s20
      %p111 = scmp.eq.s32.totalorder %s110, 0
      %s113 = sadd.s32 %s112, 1
      %s114 = scalar_select %p111, %s112, %s113
      %p117 = pneg %p111
      %p118 = scmp.eq.s32.totalorder %s13, 1
      %p119 = por %p117, %p118
      %p120 = scmp.ne.s32.totalorder %s112, %s115
      %p121 = scmp.eq.s32.totalorder %s13, 0
      %p122 = por %p120, %p121
      %p123 = scmp.ne.s32.totalorder %s112, %s115
      %p124 = scmp.eq.s32.totalorder %s18, 1
      %p125 = por %p123, %p124
      %p126 = scmp.ne.s32.totalorder %s115, %s116
      %p127 = scmp.eq.s32.totalorder %s18, 0
      %p128 = por %p126, %p127
      %p129 = scmp.ne.s32.totalorder %s115, %s116
      %p130 = scmp.eq.s32.totalorder %s19, 1
      %p131 = por %p129, %p130
      %p133 = scmp.ne.s32.totalorder %s116, %s132
      %p134 = scmp.eq.s32.totalorder %s19, 0
      %p135 = por %p133, %p134
      %p136 = scmp.le.s32.totalorder 1, %s13
      %p137 = scmp.lt.s32.totalorder %s13, 3
      %p138 = pnand %p136, %p137
      %p139 = pneg %p138
      // Predicated region
      $region9: #{tpu_custom_call.1} parent=5 // pred_check
        _
      $region10: #{tpu_custom_call.1} parent=5 // pred_check_branch
        %141 = sbr.rel (%p138) target = $region12
      $region11: #{tpu_custom_call.1} parent=5 // pred_region
        %s142 = ssub.s32 %s13, 1
        // Predicated region
        $region13: #{tpu_custom_call.1} parent=11 // pred_check
          %p143 = pneg %p60
        $region14: #{tpu_custom_call.1} parent=11 // pred_check_branch
          %145 = sbr.rel (%p143) target = $region16
        $region15: #{tpu_custom_call.1} parent=11 // pred_region
          _
        $region16: #{tpu_custom_call.1} parent=11 // pred_fallthru
          _
        // Predicated region
        $region17: #{tpu_custom_call.1} parent=11 // pred_check
          %p146 = pneg %p81
        $region18: #{tpu_custom_call.1} parent=11 // pred_check_branch
          %148 = sbr.rel (%p146) target = $region20
        $region19: #{tpu_custom_call.1} parent=11 // pred_region
          _
        $region20: #{tpu_custom_call.1} parent=11 // pred_fallthru
          _
        // Predicated region
        $region21: #{tpu_custom_call.1} parent=11 // pred_check
          %p149 = pneg %p102
        $region22: #{tpu_custom_call.1} parent=11 // pred_check_branch
          %151 = sbr.rel (%p149) target = $region24
        $region23: #{tpu_custom_call.1} parent=11 // pred_region
          _
        $region24: #{tpu_custom_call.1} parent=11 // pred_fallthru
          _
      $region12: #{tpu_custom_call.1} parent=5 // pred_fallthru
        _
      %p152 = scmp.lt.s32.totalorder %s13, 2
      // Predicated region
      $region25: #{tpu_custom_call.1} parent=5 // pred_check
        %p153 = pneg %p152
      $region26: #{tpu_custom_call.1} parent=5 // pred_check_branch
        %155 = sbr.rel (%p153) target = $region28
      $region27: #{tpu_custom_call.1} parent=5 // pred_region
        // Predicated region
        $region29: #{tpu_custom_call.1} parent=27 // pred_check
          %p156 = pneg %p33
        $region30: #{tpu_custom_call.1} parent=27 // pred_check_branch
          %158 = sbr.rel (%p156) target = $region32
        $region31: #{tpu_custom_call.1} parent=27 // pred_region
          %p159 = scmp.lt.s32.totalorder %s13, 1
          %s160 = scalar_select %p159, %s13, 1
          %s161 = smul.addr %s160, 54
          %s162 = smul.addr %s161, 4
          %s163 = scalar_lea.vmem %s0, %s162
        $region32: #{tpu_custom_call.1} parent=27 // pred_fallthru
          _
      $region28: #{tpu_custom_call.1} parent=5 // pred_fallthru
        _
      %p164 = scmp.le.s32.totalorder 1, %s13
      %p165 = scmp.lt.s32.totalorder %s13, 3
      %p166 = pnand %p164, %p165
      %p167 = pneg %p166
      // Predicated region
      $region33: #{tpu_custom_call.1} parent=5 // pred_check
        _
      $region34: #{tpu_custom_call.1} parent=5 // pred_check_branch
        %169 = sbr.rel (%p166) target = $region36
      $region35: #{tpu_custom_call.1} parent=5 // pred_region
        %s170 = ssub.s32 %s13, 1
        %p171 = scmp.lt.s32.totalorder %s18, 1
        %s172 = scalar_select %p171, %s18, 1
        %s173 = smul.addr %s172, 54
        %s174 = smul.addr %s173, 4
        %s175 = scalar_lea.vmem %s0, %s174
        %p176 = pneg %p39
        %p177 = pneg %p36
        %p178 = pneg %p60
        %p179 = pneg %p57
        %p180 = pneg %p81
        %p181 = pneg %p78
        %p182 = pneg %p102
        %p183 = pneg %p99
        %p184 = pneg %p128
        %p185 = pneg %p125
        %s186 = sand.u32 %s115, 1
        %s187 = scalar_lea.sflag [#allocation3], %s186
        %s188 = sand.u32 %s115, 1
        %s189 = smul.addr %s188, 128
        %s190 = scalar_lea.vmem [#allocation2], %s189
        %p191 = scmp.lt.s32.totalorder %s18, 1
        %s192 = scalar_select %p191, %s18, 1
        %s193 = smul.addr %s192, 54
        %s194 = smul.addr %s193, 4
        %s195 = scalar_lea.vmem %s0, %s194
        %v197 = vld [vmem:[%s195] sm:$0xf]
        %v198 = vld [vmem:[%s195 + $0x4] sm:$0xf]
        %v199 = vld [vmem:[%s195 + $0x8] sm:$0x1]
        %v200 = vld [vmem:[%s195 + $0xc] sm:$0xf]
        %v201 = vld [vmem:[%s195 + $0x10] sm:$0xf]
        %v202 = vld [vmem:[%s195 + $0x14] sm:$0x1]
        %v203 = vld [vmem:[%s195 + $0x18] sm:$0xf]
        %v204 = vld [vmem:[%s195 + $0x1c] sm:$0xf]
        %v205 = vld [vmem:[%s195 + $0x20] sm:$0x1]
        %v206 = vld [vmem:[%s195 + $0x24] sm:$0xf]
        %v207 = vld [vmem:[%s195 + $0x28] sm:$0xf]
        %v208 = vld [vmem:[%s195 + $0x2c] sm:$0x1]
        %v209 = vld [vmem:[%s195 + $0x30] sm:$0xf]
        %v210 = vld [vmem:[%s195 + $0x34] sm:$0xf]
        %v211 = vld [vmem:[%s195 + $0x38] sm:$0x1]
        %v212 = vld [vmem:[%s195 + $0x3c] sm:$0xf]
        %v213 = vld [vmem:[%s195 + $0x40] sm:$0xf]
        %v214 = vld [vmem:[%s195 + $0x44] sm:$0x1]
        %v215 = vld [vmem:[%s195 + $0x48] sm:$0xf]
        %v216 = vld [vmem:[%s195 + $0x4c] sm:$0xf]
        %v217 = vld [vmem:[%s195 + $0x50] sm:$0x1]
        %v218 = vld [vmem:[%s195 + $0x54] sm:$0xf]
        %v219 = vld [vmem:[%s195 + $0x58] sm:$0xf]
        %v220 = vld [vmem:[%s195 + $0x5c] sm:$0x1]
        %v221 = vld [vmem:[%s195 + $0x60] sm:$0xf]
        %v222 = vld [vmem:[%s195 + $0x64] sm:$0xf]
        %v223 = vld [vmem:[%s195 + $0x68] sm:$0x1]
        %v224 = vld [vmem:[%s195 + $0x6c] sm:$0xf]
        %v225 = vld [vmem:[%s195 + $0x70] sm:$0xf]
        %v226 = vld [vmem:[%s195 + $0x74] sm:$0x1]
        %v227 = vld [vmem:[%s195 + $0x78] sm:$0xf]
        %v228 = vld [vmem:[%s195 + $0x7c] sm:$0xf]
        %v229 = vld [vmem:[%s195 + $0x80] sm:$0x1]
        %v230 = vld [vmem:[%s195 + $0x84] sm:$0xf]
        %v231 = vld [vmem:[%s195 + $0x88] sm:$0xf]
        %v232 = vld [vmem:[%s195 + $0x8c] sm:$0x1]
        %v233 = vld [vmem:[%s195 + $0x90] sm:$0xf]
        %v234 = vld [vmem:[%s195 + $0x94] sm:$0xf]
        %v235 = vld [vmem:[%s195 + $0x98] sm:$0x1]
        %v236 = vld [vmem:[%s195 + $0x9c] sm:$0xf]
        %v237 = vld [vmem:[%s195 + $0xa0] sm:$0xf]
        %v238 = vld [vmem:[%s195 + $0xa4] sm:$0x1]
        %v239 = vld [vmem:[%s195 + $0xa8] sm:$0xf]
        %v240 = vld [vmem:[%s195 + $0xac] sm:$0xf]
        %v241 = vld [vmem:[%s195 + $0xb0] sm:$0x1]
        %v242 = vld [vmem:[%s195 + $0xb4] sm:$0xf]
        %v243 = vld [vmem:[%s195 + $0xb8] sm:$0xf]
        %v244 = vld [vmem:[%s195 + $0xbc] sm:$0x1]
        %v245 = vld [vmem:[%s195 + $0xc0] sm:$0xf]
        %v246 = vld [vmem:[%s195 + $0xc4] sm:$0xf]
        %v247 = vld [vmem:[%s195 + $0xc8] sm:$0x1]
        %v248 = vld [vmem:[%s195 + $0xcc] sm:$0xf]
        %v249 = vld [vmem:[%s195 + $0xd0] sm:$0xf]
        %v250 = vld [vmem:[%s195 + $0xd4] sm:$0x1]
        %v251 = vld [vmem:[%s2] sm:$0x1]
        %v252 = vld [vmem:[%s3] sm:$0x1]
        %v253 = vld [vmem:[%s1] sm:$0x3]
        %vm254 = vsmask.f32 3328
        %vm255 = vsmask.f32 7440
        %vm256 = vmor %vm254, %vm255
        %v258 = vshrl.u32 %v197, 16
        %v260 = vrot.slane %v258, 4
        %v261 = vshll.u32 %v197, 16
        %v263 = vrot.slane %v261, 5
        %v264 = vor.u32 %v260, %v263
        %v265 = vrot.slane %v264, 4
        %v267 = vshll.u32 %v198, 16
        %v269 = vrot.slane %v267, 5
        %v270 = vsel %vm256, %v265, %v269
        %v271 = vshrl.u32 %v198, 16
        %v273 = vrot.slane %v271, 4
        %v274 = vor.u32 %v273, %v269
        %v275 = vrot.slane %v274, 4
        %v277 = vshll.u32 %v199, 16
        %v279 = vrot.slane %v277, 5
        %v280 = vsel %vm256, %v275, %v279
        %v282 = vshrl.u32 %v200, 16
        %v284 = vrot.slane %v282, 4
        %v285 = vshll.u32 %v200, 16
        %v287 = vrot.slane %v285, 5
        %v288 = vor.u32 %v284, %v287
        %v289 = vrot.slane %v288, 4
        %v291 = vshll.u32 %v201, 16
        %v293 = vrot.slane %v291, 5
        %v294 = vsel %vm256, %v289, %v293
        %v295 = vshrl.u32 %v201, 16
        %v297 = vrot.slane %v295, 4
        %v298 = vor.u32 %v297, %v293
        %v299 = vrot.slane %v298, 4
        %v301 = vshll.u32 %v202, 16
        %v303 = vrot.slane %v301, 5
        %v304 = vsel %vm256, %v299, %v303
        %v306 = vshrl.u32 %v203, 16
        %v308 = vrot.slane %v306, 4
        %v309 = vshll.u32 %v203, 16
        %v311 = vrot.slane %v309, 5
        %v312 = vor.u32 %v308, %v311
        %v313 = vrot.slane %v312, 4
        %v315 = vshll.u32 %v204, 16
        %v317 = vrot.slane %v315, 5
        %v318 = vsel %vm256, %v313, %v317
        %v319 = vshrl.u32 %v204, 16
        %v321 = vrot.slane %v319, 4
        %v322 = vor.u32 %v321, %v317
        %v323 = vrot.slane %v322, 4
        %v325 = vshll.u32 %v205, 16
        %v327 = vrot.slane %v325, 5
        %v328 = vsel %vm256, %v323, %v327
        %v330 = vshrl.u32 %v206, 16
        %v332 = vrot.slane %v330, 4
        %v333 = vshll.u32 %v206, 16
        %v335 = vrot.slane %v333, 5
        %v336 = vor.u32 %v332, %v335
        %v337 = vrot.slane %v336, 4
        %v339 = vshll.u32 %v207, 16
        %v341 = vrot.slane %v339, 5
        %v342 = vsel %vm256, %v337, %v341
        %v343 = vshrl.u32 %v207, 16
        %v345 = vrot.slane %v343, 4
        %v346 = vor.u32 %v345, %v341
        %v347 = vrot.slane %v346, 4
        %v349 = vshll.u32 %v208, 16
        %v351 = vrot.slane %v349, 5
        %v352 = vsel %vm256, %v347, %v351
        %v354 = vshrl.u32 %v209, 16
        %v356 = vrot.slane %v354, 4
        %v357 = vshll.u32 %v209, 16
        %v359 = vrot.slane %v357, 5
        %v360 = vor.u32 %v356, %v359
        %v361 = vrot.slane %v360, 4
        %v363 = vshll.u32 %v210, 16
        %v365 = vrot.slane %v363, 5
        %v366 = vsel %vm256, %v361, %v365
        %v367 = vshrl.u32 %v210, 16
        %v369 = vrot.slane %v367, 4
        %v370 = vor.u32 %v369, %v365
        %v371 = vrot.slane %v370, 4
        %v373 = vshll.u32 %v211, 16
        %v375 = vrot.slane %v373, 5
        %v376 = vsel %vm256, %v371, %v375
        %v378 = vshrl.u32 %v212, 16
        %v380 = vrot.slane %v378, 4
        %v381 = vshll.u32 %v212, 16
        %v383 = vrot.slane %v381, 5
        %v384 = vor.u32 %v380, %v383
        %v385 = vrot.slane %v384, 4
        %v387 = vshll.u32 %v213, 16
        %v389 = vrot.slane %v387, 5
        %v390 = vsel %vm256, %v385, %v389
        %v391 = vshrl.u32 %v213, 16
        %v393 = vrot.slane %v391, 4
        %v394 = vor.u32 %v393, %v389
        %v395 = vrot.slane %v394, 4
        %v397 = vshll.u32 %v214, 16
        %v399 = vrot.slane %v397, 5
        %v400 = vsel %vm256, %v395, %v399
        %v402 = vshrl.u32 %v215, 16
        %v404 = vrot.slane %v402, 4
        %v405 = vshll.u32 %v215, 16
        %v407 = vrot.slane %v405, 5
        %v408 = vor.u32 %v404, %v407
        %v409 = vrot.slane %v408, 4
        %v411 = vshll.u32 %v216, 16
        %v413 = vrot.slane %v411, 5
        %v414 = vsel %vm256, %v409, %v413
        %v415 = vshrl.u32 %v216, 16
        %v417 = vrot.slane %v415, 4
        %v418 = vor.u32 %v417, %v413
        %v419 = vrot.slane %v418, 4
        %v421 = vshll.u32 %v217, 16
        %v423 = vrot.slane %v421, 5
        %v424 = vsel %vm256, %v419, %v423
        %v426 = vshrl.u32 %v218, 16
        %v428 = vrot.slane %v426, 4
        %v429 = vshll.u32 %v218, 16
        %v431 = vrot.slane %v429, 5
        %v432 = vor.u32 %v428, %v431
        %v433 = vrot.slane %v432, 4
        %v435 = vshll.u32 %v219, 16
        %v437 = vrot.slane %v435, 5
        %v438 = vsel %vm256, %v433, %v437
        %v439 = vshrl.u32 %v219, 16
        %v441 = vrot.slane %v439, 4
        %v442 = vor.u32 %v441, %v437
        %v443 = vrot.slane %v442, 4
        %v445 = vshll.u32 %v220, 16
        %v447 = vrot.slane %v445, 5
        %v448 = vsel %vm256, %v443, %v447
        %v450 = vshrl.u32 %v221, 16
        %v452 = vrot.slane %v450, 4
        %v453 = vshll.u32 %v221, 16
        %v455 = vrot.slane %v453, 5
        %v456 = vor.u32 %v452, %v455
        %v457 = vrot.slane %v456, 4
        %v459 = vshll.u32 %v222, 16
        %v461 = vrot.slane %v459, 5
        %v462 = vsel %vm256, %v457, %v461
        %v463 = vshrl.u32 %v222, 16
        %v465 = vrot.slane %v463, 4
        %v466 = vor.u32 %v465, %v461
        %v467 = vrot.slane %v466, 4
        %v469 = vshll.u32 %v223, 16
        %v471 = vrot.slane %v469, 5
        %v472 = vsel %vm256, %v467, %v471
        %v474 = vshrl.u32 %v224, 16
        %v476 = vrot.slane %v474, 4
        %v477 = vshll.u32 %v224, 16
        %v479 = vrot.slane %v477, 5
        %v480 = vor.u32 %v476, %v479
        %v481 = vrot.slane %v480, 4
        %v483 = vshll.u32 %v225, 16
        %v485 = vrot.slane %v483, 5
        %v486 = vsel %vm256, %v481, %v485
        %v487 = vshrl.u32 %v225, 16
        %v489 = vrot.slane %v487, 4
        %v490 = vor.u32 %v489, %v485
        %v491 = vrot.slane %v490, 4
        %v493 = vshll.u32 %v226, 16
        %v495 = vrot.slane %v493, 5
        %v496 = vsel %vm256, %v491, %v495
        %v498 = vshrl.u32 %v227, 16
        %v500 = vrot.slane %v498, 4
        %v501 = vshll.u32 %v227, 16
        %v503 = vrot.slane %v501, 5
        %v504 = vor.u32 %v500, %v503
        %v505 = vrot.slane %v504, 4
        %v507 = vshll.u32 %v228, 16
        %v509 = vrot.slane %v507, 5
        %v510 = vsel %vm256, %v505, %v509
        %v511 = vshrl.u32 %v228, 16
        %v513 = vrot.slane %v511, 4
        %v514 = vor.u32 %v513, %v509
        %v515 = vrot.slane %v514, 4
        %v517 = vshll.u32 %v229, 16
        %v519 = vrot.slane %v517, 5
        %v520 = vsel %vm256, %v515, %v519
        %v522 = vshrl.u32 %v230, 16
        %v524 = vrot.slane %v522, 4
        %v525 = vshll.u32 %v230, 16
        %v527 = vrot.slane %v525, 5
        %v528 = vor.u32 %v524, %v527
        %v529 = vrot.slane %v528, 4
        %v531 = vshll.u32 %v231, 16
        %v533 = vrot.slane %v531, 5
        %v534 = vsel %vm256, %v529, %v533
        %v535 = vshrl.u32 %v231, 16
        %v537 = vrot.slane %v535, 4
        %v538 = vor.u32 %v537, %v533
        %v539 = vrot.slane %v538, 4
        %v541 = vshll.u32 %v232, 16
        %v543 = vrot.slane %v541, 5
        %v544 = vsel %vm256, %v539, %v543
        %v546 = vshrl.u32 %v233, 16
        %v548 = vrot.slane %v546, 4
        %v549 = vshll.u32 %v233, 16
        %v551 = vrot.slane %v549, 5
        %v552 = vor.u32 %v548, %v551
        %v553 = vrot.slane %v552, 4
        %v555 = vshll.u32 %v234, 16
        %v557 = vrot.slane %v555, 5
        %v558 = vsel %vm256, %v553, %v557
        %v559 = vshrl.u32 %v234, 16
        %v561 = vrot.slane %v559, 4
        %v562 = vor.u32 %v561, %v557
        %v563 = vrot.slane %v562, 4
        %v565 = vshll.u32 %v235, 16
        %v567 = vrot.slane %v565, 5
        %v568 = vsel %vm256, %v563, %v567
        %v570 = vshrl.u32 %v236, 16
        %v572 = vrot.slane %v570, 4
        %v573 = vshll.u32 %v236, 16
        %v575 = vrot.slane %v573, 5
        %v576 = vor.u32 %v572, %v575
        %v577 = vrot.slane %v576, 4
        %v579 = vshll.u32 %v237, 16
        %v581 = vrot.slane %v579, 5
        %v582 = vsel %vm256, %v577, %v581
        %v583 = vshrl.u32 %v237, 16
        %v585 = vrot.slane %v583, 4
        %v586 = vor.u32 %v585, %v581
        %v587 = vrot.slane %v586, 4
        %v589 = vshll.u32 %v238, 16
        %v591 = vrot.slane %v589, 5
        %v592 = vsel %vm256, %v587, %v591
        %v594 = vshrl.u32 %v239, 16
        %v596 = vrot.slane %v594, 4
        %v597 = vshll.u32 %v239, 16
        %v599 = vrot.slane %v597, 5
        %v600 = vor.u32 %v596, %v599
        %v601 = vrot.slane %v600, 4
        %v603 = vshll.u32 %v240, 16
        %v605 = vrot.slane %v603, 5
        %v606 = vsel %vm256, %v601, %v605
        %v607 = vshrl.u32 %v240, 16
        %v609 = vrot.slane %v607, 4
        %v610 = vor.u32 %v609, %v605
        %v611 = vrot.slane %v610, 4
        %v613 = vshll.u32 %v241, 16
        %v615 = vrot.slane %v613, 5
        %v616 = vsel %vm256, %v611, %v615
        %v618 = vshrl.u32 %v242, 16
        %v620 = vrot.slane %v618, 4
        %v621 = vshll.u32 %v242, 16
        %v623 = vrot.slane %v621, 5
        %v624 = vor.u32 %v620, %v623
        %v625 = vrot.slane %v624, 4
        %v627 = vshll.u32 %v243, 16
        %v629 = vrot.slane %v627, 5
        %v630 = vsel %vm256, %v625, %v629
        %v631 = vshrl.u32 %v243, 16
        %v633 = vrot.slane %v631, 4
        %v634 = vor.u32 %v633, %v629
        %v635 = vrot.slane %v634, 4
        %v637 = vshll.u32 %v244, 16
        %v639 = vrot.slane %v637, 5
        %v640 = vsel %vm256, %v635, %v639
        %s641 = scalar_lea.vmem %s1, 2
        %v642 = vld [vmem:[%s641] sm:$0x3]
        %v643 = vunpack.c.l.b16 %v270
        %v644 = vunpack.c.l.b16 %v280
        %v645 = vunpack.c.l.b16 %v294
        %v646 = vunpack.c.l.b16 %v304
        %v647 = vunpack.c.l.b16 %v318
        %v648 = vunpack.c.l.b16 %v328
        %v649 = vunpack.c.l.b16 %v342
        %v650 = vunpack.c.l.b16 %v352
        %v651 = vunpack.c.l.b16 %v366
        %v652 = vunpack.c.l.b16 %v376
        %v653 = vunpack.c.l.b16 %v390
        %v654 = vunpack.c.l.b16 %v400
        %v655 = vunpack.c.l.b16 %v414
        %v656 = vunpack.c.l.b16 %v424
        %v657 = vunpack.c.l.b16 %v438
        %v658 = vunpack.c.l.b16 %v448
        %v659 = vunpack.c.l.b16 %v462
        %v660 = vunpack.c.l.b16 %v472
        %v661 = vunpack.c.l.b16 %v486
        %v662 = vunpack.c.l.b16 %v496
        %v663 = vunpack.c.l.b16 %v510
        %v664 = vunpack.c.l.b16 %v520
        %v665 = vunpack.c.l.b16 %v534
        %v666 = vunpack.c.l.b16 %v544
        %v667 = vunpack.c.l.b16 %v558
        %v668 = vunpack.c.l.b16 %v568
        %v669 = vunpack.c.l.b16 %v582
        %v670 = vunpack.c.l.b16 %v592
        %v671 = vunpack.c.l.b16 %v606
        %v672 = vunpack.c.l.b16 %v616
        %v673 = vunpack.c.l.b16 %v630
        %v674 = vunpack.c.l.b16 %v640
        %v675 = vpack.c.b16 %v644, %v643
        %v676 = vpack.c.b16 %v646, %v645
        %v677 = vpack.c.b16 %v648, %v647
        %v678 = vpack.c.b16 %v650, %v649
        %v679 = vpack.c.b16 %v652, %v651
        %v680 = vpack.c.b16 %v654, %v653
        %v681 = vpack.c.b16 %v656, %v655
        %v682 = vpack.c.b16 %v658, %v657
        %v683 = vpack.c.b16 %v660, %v659
        %v684 = vpack.c.b16 %v662, %v661
        %v685 = vpack.c.b16 %v664, %v663
        %v686 = vpack.c.b16 %v666, %v665
        %v687 = vpack.c.b16 %v668, %v667
        %v688 = vpack.c.b16 %v670, %v669
        %v689 = vpack.c.b16 %v672, %v671
        %v690 = vpack.c.b16 %v674, %v673
        %vm691 = vcmask 31744
        %v693 = vsel %vm691, %v675, 0
        %v696 = vsel %vm691, %v676, 0
        %v699 = vsel %vm691, %v677, 0
        %v702 = vsel %vm691, %v678, 0
        %v705 = vsel %vm691, %v679, 0
        %v708 = vsel %vm691, %v680, 0
        %v711 = vsel %vm691, %v681, 0
        %v714 = vsel %vm691, %v682, 0
        %v717 = vsel %vm691, %v683, 0
        %v720 = vsel %vm691, %v684, 0
        %v723 = vsel %vm691, %v685, 0
        %v726 = vsel %vm691, %v686, 0
        %v729 = vsel %vm691, %v687, 0
        %v732 = vsel %vm691, %v688, 0
        %v735 = vsel %vm691, %v689, 0
        %v738 = vsel %vm691, %v690, 0
        %vm740 = vcmask 1041408
        %v742 = vsel %vm740, %v642, 0
        %744 = vmatprep.subr.bf16.mxu0 0
        %745 = vmatpush1.bf16.msra.mxu0 0
        %746 = vmatprep.subr.bf16.mxu0 0
        %747 = vmatpush1.bf16.msra.mxu0 0
        %748 = vmatprep.subr.bf16.mxu0 0
        %749 = vmatpush1.bf16.msra.mxu0 0
        %750 = vmatprep.subr.bf16.mxu0 0
        %751 = vmatpush1.bf16.msra.mxu0 0
        %752 = vmatprep.subr.bf16.mxu0 0
        %753 = vmatpush1.bf16.msra.mxu0 0
        %754 = vmatprep.subr.bf16.mxu0 0
        %755 = vmatpush1.bf16.msra.mxu0 0
        %756 = vmatprep.subr.bf16.mxu0 0
        %757 = vmatpush1.bf16.msra.mxu0 0
        %758 = vmatprep.subr.bf16.mxu0 0
        %759 = vmatpush1.bf16.msra.mxu0 %v742
        %760 = vmatprep.subr.bf16.mxu0 0
        %761 = vmatpush2.bf16.msra.mxu0 0
        %762 = vmatprep.subr.bf16.mxu0 0
        %763 = vmatpush2.bf16.msra.mxu0 0
        %764 = vmatprep.subr.bf16.mxu0 0
        %765 = vmatpush2.bf16.msra.mxu0 0
        %766 = vmatprep.subr.bf16.mxu0 0
        %767 = vmatpush2.bf16.msra.mxu0 0
        %768 = vmatprep.subr.bf16.mxu0 0
        %769 = vmatpush2.bf16.msra.mxu0 0
        %770 = vmatprep.subr.bf16.mxu0 0
        %771 = vmatpush2.bf16.msra.mxu0 0
        %772 = vmatprep.subr.bf16.mxu0 0
        %773 = vmatpush2.bf16.msra.mxu0 0
        %774 = vmatprep.subr.bf16.mxu0 0
        %775 = vmatpush2.bf16.msra.mxu0 0
        %776 = vmatprep.mubr.bf16.mxu0 0
        %777 = vmatmul.mubr.bf16.gmra.mxu0 %v693
        %v778 = vpop.f32.mrf.mxu0
        %v779 = vadd.f32 0.0, %v778
        %v780 = vpop.f32.mrf.mxu0
        %v781 = vpop.f32.mrf.mxu0
        %v782 = vadd.f32 0.0, %v781
        %v783 = vpop.f32.mrf.mxu0
        %784 = vmatprep.mubr.bf16.mxu0 0
        %785 = vmatmul.mubr.bf16.gmra.mxu0 %v696
        %v786 = vpop.f32.mrf.mxu0
        %v787 = vadd.f32 0.0, %v786
        %v788 = vpop.f32.mrf.mxu0
        %v789 = vpop.f32.mrf.mxu0
        %v790 = vadd.f32 0.0, %v789
        %v791 = vpop.f32.mrf.mxu0
        %792 = vmatprep.mubr.bf16.mxu0 0
        %793 = vmatmul.mubr.bf16.gmra.mxu0 %v699
        %v794 = vpop.f32.mrf.mxu0
        %v795 = vadd.f32 0.0, %v794
        %v796 = vpop.f32.mrf.mxu0
        %v797 = vpop.f32.mrf.mxu0
        %v798 = vadd.f32 0.0, %v797
        %v799 = vpop.f32.mrf.mxu0
        %800 = vmatprep.mubr.bf16.mxu0 0
        %801 = vmatmul.mubr.bf16.gmra.mxu0 %v702
        %v802 = vpop.f32.mrf.mxu0
        %v803 = vadd.f32 0.0, %v802
        %v804 = vpop.f32.mrf.mxu0
        %v805 = vpop.f32.mrf.mxu0
        %v806 = vadd.f32 0.0, %v805
        %v807 = vpop.f32.mrf.mxu0
        %808 = vmatprep.mubr.bf16.mxu0 0
        %809 = vmatmul.mubr.bf16.gmra.mxu0 %v705
        %v810 = vpop.f32.mrf.mxu0
        %v811 = vadd.f32 0.0, %v810
        %v812 = vpop.f32.mrf.mxu0
        %v813 = vpop.f32.mrf.mxu0
        %v814 = vadd.f32 0.0, %v813
        %v815 = vpop.f32.mrf.mxu0
        %816 = vmatprep.mubr.bf16.mxu0 0
        %817 = vmatmul.mubr.bf16.gmra.mxu0 %v708
        %v818 = vpop.f32.mrf.mxu0
        %v819 = vadd.f32 0.0, %v818
        %v820 = vpop.f32.mrf.mxu0
        %v821 = vpop.f32.mrf.mxu0
        %v822 = vadd.f32 0.0, %v821
        %v823 = vpop.f32.mrf.mxu0
        %824 = vmatprep.mubr.bf16.mxu0 0
        %825 = vmatmul.mubr.bf16.gmra.mxu0 %v711
        %v826 = vpop.f32.mrf.mxu0
        %v827 = vadd.f32 0.0, %v826
        %v828 = vpop.f32.mrf.mxu0
        %v829 = vpop.f32.mrf.mxu0
        %v830 = vadd.f32 0.0, %v829
        %v831 = vpop.f32.mrf.mxu0
        %832 = vmatprep.mubr.bf16.mxu0 0
        %833 = vmatmul.mubr.bf16.gmra.mxu0 %v714
        %v834 = vpop.f32.mrf.mxu0
        %v835 = vadd.f32 0.0, %v834
        %v836 = vpop.f32.mrf.mxu0
        %v837 = vpop.f32.mrf.mxu0
        %v838 = vadd.f32 0.0, %v837
        %v839 = vpop.f32.mrf.mxu0
        %840 = vmatprep.mubr.bf16.mxu0 0
        %841 = vmatmul.mubr.bf16.gmra.mxu0 %v717
        %v842 = vpop.f32.mrf.mxu0
        %v843 = vadd.f32 0.0, %v842
        %v844 = vpop.f32.mrf.mxu0
        %v845 = vpop.f32.mrf.mxu0
        %v846 = vadd.f32 0.0, %v845
        %v847 = vpop.f32.mrf.mxu0
        %848 = vmatprep.mubr.bf16.mxu0 0
        %849 = vmatmul.mubr.bf16.gmra.mxu0 %v720
        %v850 = vpop.f32.mrf.mxu0
        %v851 = vadd.f32 0.0, %v850
        %v852 = vpop.f32.mrf.mxu0
        %v853 = vpop.f32.mrf.mxu0
        %v854 = vadd.f32 0.0, %v853
        %v855 = vpop.f32.mrf.mxu0
        %856 = vmatprep.mubr.bf16.mxu0 0
        %857 = vmatmul.mubr.bf16.gmra.mxu0 %v723
        %v858 = vpop.f32.mrf.mxu0
        %v859 = vadd.f32 0.0, %v858
        %v860 = vpop.f32.mrf.mxu0
        %v861 = vpop.f32.mrf.mxu0
        %v862 = vadd.f32 0.0, %v861
        %v863 = vpop.f32.mrf.mxu0
        %864 = vmatprep.mubr.bf16.mxu0 0
        %865 = vmatmul.mubr.bf16.gmra.mxu0 %v726
        %v866 = vpop.f32.mrf.mxu0
        %v867 = vadd.f32 0.0, %v866
        %v868 = vpop.f32.mrf.mxu0
        %v869 = vpop.f32.mrf.mxu0
        %v870 = vadd.f32 0.0, %v869
        %v871 = vpop.f32.mrf.mxu0
        %872 = vmatprep.mubr.bf16.mxu0 0
        %873 = vmatmul.mubr.bf16.gmra.mxu0 %v729
        %v874 = vpop.f32.mrf.mxu0
        %v875 = vadd.f32 0.0, %v874
        %v876 = vpop.f32.mrf.mxu0
        %v877 = vpop.f32.mrf.mxu0
        %v878 = vadd.f32 0.0, %v877
        %v879 = vpop.f32.mrf.mxu0
        %880 = vmatprep.mubr.bf16.mxu0 0
        %881 = vmatmul.mubr.bf16.gmra.mxu0 %v732
        %v882 = vpop.f32.mrf.mxu0
        %v883 = vadd.f32 0.0, %v882
        %v884 = vpop.f32.mrf.mxu0
        %v885 = vpop.f32.mrf.mxu0
        %v886 = vadd.f32 0.0, %v885
        %v887 = vpop.f32.mrf.mxu0
        %888 = vmatprep.mubr.bf16.mxu0 0
        %889 = vmatmul.mubr.bf16.gmra.mxu0 %v735
        %v890 = vpop.f32.mrf.mxu0
        %v891 = vadd.f32 0.0, %v890
        %v892 = vpop.f32.mrf.mxu0
        %v893 = vpop.f32.mrf.mxu0
        %v894 = vadd.f32 0.0, %v893
        %v895 = vpop.f32.mrf.mxu0
        %896 = vmatprep.mubr.bf16.mxu0 0
        %897 = vmatmul.mubr.bf16.gmra.mxu0 %v738
        %v898 = vpop.f32.mrf.mxu0
        %v899 = vadd.f32 0.0, %v898
        %v900 = vpop.f32.mrf.mxu0
        %v901 = vpop.f32.mrf.mxu0
        %v902 = vadd.f32 0.0, %v901
        %v903 = vpop.f32.mrf.mxu0
        %904 = vdwg.mxu0
        %v937 = vunpack.c.l.b16 %v197
        %v938 = vunpack.c.l.b16 %v198
        %v939 = vunpack.c.l.b16 %v200
        %v940 = vunpack.c.l.b16 %v201
        %v941 = vunpack.c.l.b16 %v203
        %v942 = vunpack.c.l.b16 %v204
        %v943 = vunpack.c.l.b16 %v206
        %v944 = vunpack.c.l.b16 %v207
        %v945 = vunpack.c.l.b16 %v209
        %v946 = vunpack.c.l.b16 %v210
        %v947 = vunpack.c.l.b16 %v212
        %v948 = vunpack.c.l.b16 %v213
        %v949 = vunpack.c.l.b16 %v215
        %v950 = vunpack.c.l.b16 %v216
        %v951 = vunpack.c.l.b16 %v218
        %v952 = vunpack.c.l.b16 %v219
        %v953 = vunpack.c.l.b16 %v221
        %v954 = vunpack.c.l.b16 %v222
        %v955 = vunpack.c.l.b16 %v224
        %v956 = vunpack.c.l.b16 %v225
        %v957 = vunpack.c.l.b16 %v227
        %v958 = vunpack.c.l.b16 %v228
        %v959 = vunpack.c.l.b16 %v230
        %v960 = vunpack.c.l.b16 %v231
        %v961 = vunpack.c.l.b16 %v233
        %v962 = vunpack.c.l.b16 %v234
        %v963 = vunpack.c.l.b16 %v236
        %v964 = vunpack.c.l.b16 %v237
        %v965 = vunpack.c.l.b16 %v239
        %v966 = vunpack.c.l.b16 %v240
        %v967 = vunpack.c.l.b16 %v242
        %v968 = vunpack.c.l.b16 %v243
        %v969 = vpack.c.b16 %v938, %v937
        %v970 = vpack.c.b16 %v940, %v939
        %v971 = vpack.c.b16 %v942, %v941
        %v972 = vpack.c.b16 %v944, %v943
        %v973 = vpack.c.b16 %v946, %v945
        %v974 = vpack.c.b16 %v948, %v947
        %v975 = vpack.c.b16 %v950, %v949
        %v976 = vpack.c.b16 %v952, %v951
        %v977 = vpack.c.b16 %v954, %v953
        %v978 = vpack.c.b16 %v956, %v955
        %v979 = vpack.c.b16 %v958, %v957
        %v980 = vpack.c.b16 %v960, %v959
        %v981 = vpack.c.b16 %v962, %v961
        %v982 = vpack.c.b16 %v964, %v963
        %v983 = vpack.c.b16 %v966, %v965
        %v984 = vpack.c.b16 %v968, %v967
        %v986 = vsel %vm691, %v969, 0
        %v989 = vsel %vm691, %v970, 0
        %v992 = vsel %vm691, %v971, 0
        %v995 = vsel %vm691, %v972, 0
        %v998 = vsel %vm691, %v973, 0
        %v1001 = vsel %vm691, %v974, 0
        %v1004 = vsel %vm691, %v975, 0
        %v1007 = vsel %vm691, %v976, 0
        %v1010 = vsel %vm691, %v977, 0
        %v1013 = vsel %vm691, %v978, 0
        %v1016 = vsel %vm691, %v979, 0
        %v1019 = vsel %vm691, %v980, 0
        %v1022 = vsel %vm691, %v981, 0
        %v1025 = vsel %vm691, %v982, 0
        %v1028 = vsel %vm691, %v983, 0
        %v1031 = vsel %vm691, %v984, 0
        %v1034 = vsel %vm740, %v253, 0
        %1036 = vmatprep.subr.bf16.mxu0 0
        %1037 = vmatpush1.bf16.msra.mxu0 0
        %1038 = vmatprep.subr.bf16.mxu0 0
        %1039 = vmatpush1.bf16.msra.mxu0 0
        %1040 = vmatprep.subr.bf16.mxu0 0
        %1041 = vmatpush1.bf16.msra.mxu0 0
        %1042 = vmatprep.subr.bf16.mxu0 0
        %1043 = vmatpush1.bf16.msra.mxu0 0
        %1044 = vmatprep.subr.bf16.mxu0 0
        %1045 = vmatpush1.bf16.msra.mxu0 0
        %1046 = vmatprep.subr.bf16.mxu0 0
        %1047 = vmatpush1.bf16.msra.mxu0 0
        %1048 = vmatprep.subr.bf16.mxu0 0
        %1049 = vmatpush1.bf16.msra.mxu0 0
        %1050 = vmatprep.subr.bf16.mxu0 0
        %1051 = vmatpush1.bf16.msra.mxu0 %v1034
        %1052 = vmatprep.subr.bf16.mxu0 0
        %1053 = vmatpush2.bf16.msra.mxu0 0
        %1054 = vmatprep.subr.bf16.mxu0 0
        %1055 = vmatpush2.bf16.msra.mxu0 0
        %1056 = vmatprep.subr.bf16.mxu0 0
        %1057 = vmatpush2.bf16.msra.mxu0 0
        %1058 = vmatprep.subr.bf16.mxu0 0
        %1059 = vmatpush2.bf16.msra.mxu0 0
        %1060 = vmatprep.subr.bf16.mxu0 0
        %1061 = vmatpush2.bf16.msra.mxu0 0
        %1062 = vmatprep.subr.bf16.mxu0 0
        %1063 = vmatpush2.bf16.msra.mxu0 0
        %1064 = vmatprep.subr.bf16.mxu0 0
        %1065 = vmatpush2.bf16.msra.mxu0 0
        %1066 = vmatprep.subr.bf16.mxu0 0
        %1067 = vmatpush2.bf16.msra.mxu0 0
        %1068 = vmatprep.mubr.bf16.mxu0 0
        %1069 = vmatmul.mubr.bf16.gmra.mxu0 %v986
        %v1070 = vpop.f32.mrf.mxu0
        %v1071 = vadd.f32 %v779, %v1070
        %v1072 = vpop.f32.mrf.mxu0
        %v1073 = vpop.f32.mrf.mxu0
        %v1074 = vadd.f32 %v782, %v1073
        %v1075 = vpop.f32.mrf.mxu0
        %1076 = vmatprep.mubr.bf16.mxu0 0
        %1077 = vmatmul.mubr.bf16.gmra.mxu0 %v989
        %v1078 = vpop.f32.mrf.mxu0
        %v1079 = vadd.f32 %v787, %v1078
        %v1080 = vpop.f32.mrf.mxu0
        %v1081 = vpop.f32.mrf.mxu0
        %v1082 = vadd.f32 %v790, %v1081
        %v1083 = vpop.f32.mrf.mxu0
        %1084 = vmatprep.mubr.bf16.mxu0 0
        %1085 = vmatmul.mubr.bf16.gmra.mxu0 %v992
        %v1086 = vpop.f32.mrf.mxu0
        %v1087 = vadd.f32 %v795, %v1086
        %v1088 = vpop.f32.mrf.mxu0
        %v1089 = vpop.f32.mrf.mxu0
        %v1090 = vadd.f32 %v798, %v1089
        %v1091 = vpop.f32.mrf.mxu0
        %1092 = vmatprep.mubr.bf16.mxu0 0
        %1093 = vmatmul.mubr.bf16.gmra.mxu0 %v995
        %v1094 = vpop.f32.mrf.mxu0
        %v1095 = vadd.f32 %v803, %v1094
        %v1096 = vpop.f32.mrf.mxu0
        %v1097 = vpop.f32.mrf.mxu0
        %v1098 = vadd.f32 %v806, %v1097
        %v1099 = vpop.f32.mrf.mxu0
        %1100 = vmatprep.mubr.bf16.mxu0 0
        %1101 = vmatmul.mubr.bf16.gmra.mxu0 %v998
        %v1102 = vpop.f32.mrf.mxu0
        %v1103 = vadd.f32 %v811, %v1102
        %v1104 = vpop.f32.mrf.mxu0
        %v1105 = vpop.f32.mrf.mxu0
        %v1106 = vadd.f32 %v814, %v1105
        %v1107 = vpop.f32.mrf.mxu0
        %1108 = vmatprep.mubr.bf16.mxu0 0
        %1109 = vmatmul.mubr.bf16.gmra.mxu0 %v1001
        %v1110 = vpop.f32.mrf.mxu0
        %v1111 = vadd.f32 %v819, %v1110
        %v1112 = vpop.f32.mrf.mxu0
        %v1113 = vpop.f32.mrf.mxu0
        %v1114 = vadd.f32 %v822, %v1113
        %v1115 = vpop.f32.mrf.mxu0
        %1116 = vmatprep.mubr.bf16.mxu0 0
        %1117 = vmatmul.mubr.bf16.gmra.mxu0 %v1004
        %v1118 = vpop.f32.mrf.mxu0
        %v1119 = vadd.f32 %v827, %v1118
        %v1120 = vpop.f32.mrf.mxu0
        %v1121 = vpop.f32.mrf.mxu0
        %v1122 = vadd.f32 %v830, %v1121
        %v1123 = vpop.f32.mrf.mxu0
        %1124 = vmatprep.mubr.bf16.mxu0 0
        %1125 = vmatmul.mubr.bf16.gmra.mxu0 %v1007
        %v1126 = vpop.f32.mrf.mxu0
        %v1127 = vadd.f32 %v835, %v1126
        %v1128 = vpop.f32.mrf.mxu0
        %v1129 = vpop.f32.mrf.mxu0
        %v1130 = vadd.f32 %v838, %v1129
        %v1131 = vpop.f32.mrf.mxu0
        %1132 = vmatprep.mubr.bf16.mxu0 0
        %1133 = vmatmul.mubr.bf16.gmra.mxu0 %v1010
        %v1134 = vpop.f32.mrf.mxu0
        %v1135 = vadd.f32 %v843, %v1134
        %v1136 = vpop.f32.mrf.mxu0
        %v1137 = vpop.f32.mrf.mxu0
        %v1138 = vadd.f32 %v846, %v1137
        %v1139 = vpop.f32.mrf.mxu0
        %1140 = vmatprep.mubr.bf16.mxu0 0
        %1141 = vmatmul.mubr.bf16.gmra.mxu0 %v1013
        %v1142 = vpop.f32.mrf.mxu0
        %v1143 = vadd.f32 %v851, %v1142
        %v1144 = vpop.f32.mrf.mxu0
        %v1145 = vpop.f32.mrf.mxu0
        %v1146 = vadd.f32 %v854, %v1145
        %v1147 = vpop.f32.mrf.mxu0
        %1148 = vmatprep.mubr.bf16.mxu0 0
        %1149 = vmatmul.mubr.bf16.gmra.mxu0 %v1016
        %v1150 = vpop.f32.mrf.mxu0
        %v1151 = vadd.f32 %v859, %v1150
        %v1152 = vpop.f32.mrf.mxu0
        %v1153 = vpop.f32.mrf.mxu0
        %v1154 = vadd.f32 %v862, %v1153
        %v1155 = vpop.f32.mrf.mxu0
        %1156 = vmatprep.mubr.bf16.mxu0 0
        %1157 = vmatmul.mubr.bf16.gmra.mxu0 %v1019
        %v1158 = vpop.f32.mrf.mxu0
        %v1159 = vadd.f32 %v867, %v1158
        %v1160 = vpop.f32.mrf.mxu0
        %v1161 = vpop.f32.mrf.mxu0
        %v1162 = vadd.f32 %v870, %v1161
        %v1163 = vpop.f32.mrf.mxu0
        %1164 = vmatprep.mubr.bf16.mxu0 0
        %1165 = vmatmul.mubr.bf16.gmra.mxu0 %v1022
        %v1166 = vpop.f32.mrf.mxu0
        %v1167 = vadd.f32 %v875, %v1166
        %v1168 = vpop.f32.mrf.mxu0
        %v1169 = vpop.f32.mrf.mxu0
        %v1170 = vadd.f32 %v878, %v1169
        %v1171 = vpop.f32.mrf.mxu0
        %1172 = vmatprep.mubr.bf16.mxu0 0
        %1173 = vmatmul.mubr.bf16.gmra.mxu0 %v1025
        %v1174 = vpop.f32.mrf.mxu0
        %v1175 = vadd.f32 %v883, %v1174
        %v1176 = vpop.f32.mrf.mxu0
        %v1177 = vpop.f32.mrf.mxu0
        %v1178 = vadd.f32 %v886, %v1177
        %v1179 = vpop.f32.mrf.mxu0
        %1180 = vmatprep.mubr.bf16.mxu0 0
        %1181 = vmatmul.mubr.bf16.gmra.mxu0 %v1028
        %v1182 = vpop.f32.mrf.mxu0
        %v1183 = vadd.f32 %v891, %v1182
        %v1184 = vpop.f32.mrf.mxu0
        %v1185 = vpop.f32.mrf.mxu0
        %v1186 = vadd.f32 %v894, %v1185
        %v1187 = vpop.f32.mrf.mxu0
        %1188 = vmatprep.mubr.bf16.mxu0 0
        %1189 = vmatmul.mubr.bf16.gmra.mxu0 %v1031
        %v1190 = vpop.f32.mrf.mxu0
        %v1191 = vadd.f32 %v899, %v1190
        %v1192 = vpop.f32.mrf.mxu0
        %v1193 = vpop.f32.mrf.mxu0
        %v1194 = vadd.f32 %v902, %v1193
        %v1195 = vpop.f32.mrf.mxu0
        %1196 = vdwg.mxu0
        %vm1213 = vcmask 1042432
        %vm1214 = vcmask 1046532
        %vm1215 = vmor %vm1213, %vm1214
        %v1216 = vrot.slane %v197, 5
        %v1217 = vrot.slane %v1216, 4
        %v1218 = vrot.slane %v198, 5
        %v1219 = vsel %vm1215, %v1217, %v1218
        %v1220 = vrot.slane %v1218, 4
        %v1221 = vrot.slane %v199, 5
        %v1222 = vsel %vm1215, %v1220, %v1221
        %v1223 = vrot.slane %v200, 5
        %v1224 = vrot.slane %v1223, 4
        %v1225 = vrot.slane %v201, 5
        %v1226 = vsel %vm1215, %v1224, %v1225
        %v1227 = vrot.slane %v1225, 4
        %v1228 = vrot.slane %v202, 5
        %v1229 = vsel %vm1215, %v1227, %v1228
        %v1230 = vrot.slane %v203, 5
        %v1231 = vrot.slane %v1230, 4
        %v1232 = vrot.slane %v204, 5
        %v1233 = vsel %vm1215, %v1231, %v1232
        %v1234 = vrot.slane %v1232, 4
        %v1235 = vrot.slane %v205, 5
        %v1236 = vsel %vm1215, %v1234, %v1235
        %v1237 = vrot.slane %v206, 5
        %v1238 = vrot.slane %v1237, 4
        %v1239 = vrot.slane %v207, 5
        %v1240 = vsel %vm1215, %v1238, %v1239
        %v1241 = vrot.slane %v1239, 4
        %v1242 = vrot.slane %v208, 5
        %v1243 = vsel %vm1215, %v1241, %v1242
        %v1244 = vrot.slane %v209, 5
        %v1245 = vrot.slane %v1244, 4
        %v1246 = vrot.slane %v210, 5
        %v1247 = vsel %vm1215, %v1245, %v1246
        %v1248 = vrot.slane %v1246, 4
        %v1249 = vrot.slane %v211, 5
        %v1250 = vsel %vm1215, %v1248, %v1249
        %v1251 = vrot.slane %v212, 5
        %v1252 = vrot.slane %v1251, 4
        %v1253 = vrot.slane %v213, 5
        %v1254 = vsel %vm1215, %v1252, %v1253
        %v1255 = vrot.slane %v1253, 4
        %v1256 = vrot.slane %v214, 5
        %v1257 = vsel %vm1215, %v1255, %v1256
        %v1258 = vrot.slane %v215, 5
        %v1259 = vrot.slane %v1258, 4
        %v1260 = vrot.slane %v216, 5
        %v1261 = vsel %vm1215, %v1259, %v1260
        %v1262 = vrot.slane %v1260, 4
        %v1263 = vrot.slane %v217, 5
        %v1264 = vsel %vm1215, %v1262, %v1263
        %v1265 = vrot.slane %v218, 5
        %v1266 = vrot.slane %v1265, 4
        %v1267 = vrot.slane %v219, 5
        %v1268 = vsel %vm1215, %v1266, %v1267
        %v1269 = vrot.slane %v1267, 4
        %v1270 = vrot.slane %v220, 5
        %v1271 = vsel %vm1215, %v1269, %v1270
        %v1272 = vrot.slane %v221, 5
        %v1273 = vrot.slane %v1272, 4
        %v1274 = vrot.slane %v222, 5
        %v1275 = vsel %vm1215, %v1273, %v1274
        %v1276 = vrot.slane %v1274, 4
        %v1277 = vrot.slane %v223, 5
        %v1278 = vsel %vm1215, %v1276, %v1277
        %v1279 = vrot.slane %v224, 5
        %v1280 = vrot.slane %v1279, 4
        %v1281 = vrot.slane %v225, 5
        %v1282 = vsel %vm1215, %v1280, %v1281
        %v1283 = vrot.slane %v1281, 4
        %v1284 = vrot.slane %v226, 5
        %v1285 = vsel %vm1215, %v1283, %v1284
        %v1286 = vrot.slane %v227, 5
        %v1287 = vrot.slane %v1286, 4
        %v1288 = vrot.slane %v228, 5
        %v1289 = vsel %vm1215, %v1287, %v1288
        %v1290 = vrot.slane %v1288, 4
        %v1291 = vrot.slane %v229, 5
        %v1292 = vsel %vm1215, %v1290, %v1291
        %v1293 = vrot.slane %v230, 5
        %v1294 = vrot.slane %v1293, 4
        %v1295 = vrot.slane %v231, 5
        %v1296 = vsel %vm1215, %v1294, %v1295
        %v1297 = vrot.slane %v1295, 4
        %v1298 = vrot.slane %v232, 5
        %v1299 = vsel %vm1215, %v1297, %v1298
        %v1300 = vrot.slane %v233, 5
        %v1301 = vrot.slane %v1300, 4
        %v1302 = vrot.slane %v234, 5
        %v1303 = vsel %vm1215, %v1301, %v1302
        %v1304 = vrot.slane %v1302, 4
        %v1305 = vrot.slane %v235, 5
        %v1306 = vsel %vm1215, %v1304, %v1305
        %v1307 = vrot.slane %v236, 5
        %v1308 = vrot.slane %v1307, 4
        %v1309 = vrot.slane %v237, 5
        %v1310 = vsel %vm1215, %v1308, %v1309
        %v1311 = vrot.slane %v1309, 4
        %v1312 = vrot.slane %v238, 5
        %v1313 = vsel %vm1215, %v1311, %v1312
        %v1314 = vrot.slane %v239, 5
        %v1315 = vrot.slane %v1314, 4
        %v1316 = vrot.slane %v240, 5
        %v1317 = vsel %vm1215, %v1315, %v1316
        %v1318 = vrot.slane %v1316, 4
        %v1319 = vrot.slane %v241, 5
        %v1320 = vsel %vm1215, %v1318, %v1319
        %v1321 = vrot.slane %v242, 5
        %v1322 = vrot.slane %v1321, 4
        %v1323 = vrot.slane %v243, 5
        %v1324 = vsel %vm1215, %v1322, %v1323
        %v1325 = vrot.slane %v1323, 4
        %v1326 = vrot.slane %v244, 5
        %v1327 = vsel %vm1215, %v1325, %v1326
        %s1328 = scalar_lea.vmem %s1, 4
        %v1329 = vld [vmem:[%s1328] sm:$0x3]
        %v1330 = vunpack.c.l.b16 %v1219
        %v1331 = vunpack.c.l.b16 %v1222
        %v1332 = vunpack.c.l.b16 %v1226
        %v1333 = vunpack.c.l.b16 %v1229
        %v1334 = vunpack.c.l.b16 %v1233
        %v1335 = vunpack.c.l.b16 %v1236
        %v1336 = vunpack.c.l.b16 %v1240
        %v1337 = vunpack.c.l.b16 %v1243
        %v1338 = vunpack.c.l.b16 %v1247
        %v1339 = vunpack.c.l.b16 %v1250
        %v1340 = vunpack.c.l.b16 %v1254
        %v1341 = vunpack.c.l.b16 %v1257
        %v1342 = vunpack.c.l.b16 %v1261
        %v1343 = vunpack.c.l.b16 %v1264
        %v1344 = vunpack.c.l.b16 %v1268
        %v1345 = vunpack.c.l.b16 %v1271
        %v1346 = vunpack.c.l.b16 %v1275
        %v1347 = vunpack.c.l.b16 %v1278
        %v1348 = vunpack.c.l.b16 %v1282
        %v1349 = vunpack.c.l.b16 %v1285
        %v1350 = vunpack.c.l.b16 %v1289
        %v1351 = vunpack.c.l.b16 %v1292
        %v1352 = vunpack.c.l.b16 %v1296
        %v1353 = vunpack.c.l.b16 %v1299
        %v1354 = vunpack.c.l.b16 %v1303
        %v1355 = vunpack.c.l.b16 %v1306
        %v1356 = vunpack.c.l.b16 %v1310
        %v1357 = vunpack.c.l.b16 %v1313
        %v1358 = vunpack.c.l.b16 %v1317
        %v1359 = vunpack.c.l.b16 %v1320
        %v1360 = vunpack.c.l.b16 %v1324
        %v1361 = vunpack.c.l.b16 %v1327
        %v1362 = vpack.c.b16 %v1331, %v1330
        %v1363 = vpack.c.b16 %v1333, %v1332
        %v1364 = vpack.c.b16 %v1335, %v1334
        %v1365 = vpack.c.b16 %v1337, %v1336
        %v1366 = vpack.c.b16 %v1339, %v1338
        %v1367 = vpack.c.b16 %v1341, %v1340
        %v1368 = vpack.c.b16 %v1343, %v1342
        %v1369 = vpack.c.b16 %v1345, %v1344
        %v1370 = vpack.c.b16 %v1347, %v1346
        %v1371 = vpack.c.b16 %v1349, %v1348
        %v1372 = vpack.c.b16 %v1351, %v1350
        %v1373 = vpack.c.b16 %v1353, %v1352
        %v1374 = vpack.c.b16 %v1355, %v1354
        %v1375 = vpack.c.b16 %v1357, %v1356
        %v1376 = vpack.c.b16 %v1359, %v1358
        %v1377 = vpack.c.b16 %v1361, %v1360
        %v1379 = vsel %vm691, %v1362, 0
        %v1382 = vsel %vm691, %v1363, 0
        %v1385 = vsel %vm691, %v1364, 0
        %v1388 = vsel %vm691, %v1365, 0
        %v1391 = vsel %vm691, %v1366, 0
        %v1394 = vsel %vm691, %v1367, 0
        %v1397 = vsel %vm691, %v1368, 0
        %v1400 = vsel %vm691, %v1369, 0
        %v1403 = vsel %vm691, %v1370, 0
        %v1406 = vsel %vm691, %v1371, 0
        %v1409 = vsel %vm691, %v1372, 0
        %v1412 = vsel %vm691, %v1373, 0
        %v1415 = vsel %vm691, %v1374, 0
        %v1418 = vsel %vm691, %v1375, 0
        %v1421 = vsel %vm691, %v1376, 0
        %v1424 = vsel %vm691, %v1377, 0
        %v1427 = vsel %vm740, %v1329, 0
        %1429 = vmatprep.subr.bf16.mxu0 0
        %1430 = vmatpush1.bf16.msra.mxu0 0
        %1431 = vmatprep.subr.bf16.mxu0 0
        %1432 = vmatpush1.bf16.msra.mxu0 0
        %1433 = vmatprep.subr.bf16.mxu0 0
        %1434 = vmatpush1.bf16.msra.mxu0 0
        %1435 = vmatprep.subr.bf16.mxu0 0
        %1436 = vmatpush1.bf16.msra.mxu0 0
        %1437 = vmatprep.subr.bf16.mxu0 0
        %1438 = vmatpush1.bf16.msra.mxu0 0
        %1439 = vmatprep.subr.bf16.mxu0 0
        %1440 = vmatpush1.bf16.msra.mxu0 0
        %1441 = vmatprep.subr.bf16.mxu0 0
        %1442 = vmatpush1.bf16.msra.mxu0 0
        %1443 = vmatprep.subr.bf16.mxu0 0
        %1444 = vmatpush1.bf16.msra.mxu0 %v1427
        %1445 = vmatprep.subr.bf16.mxu0 0
        %1446 = vmatpush2.bf16.msra.mxu0 0
        %1447 = vmatprep.subr.bf16.mxu0 0
        %1448 = vmatpush2.bf16.msra.mxu0 0
        %1449 = vmatprep.subr.bf16.mxu0 0
        %1450 = vmatpush2.bf16.msra.mxu0 0
        %1451 = vmatprep.subr.bf16.mxu0 0
        %1452 = vmatpush2.bf16.msra.mxu0 0
        %1453 = vmatprep.subr.bf16.mxu0 0
        %1454 = vmatpush2.bf16.msra.mxu0 0
        %1455 = vmatprep.subr.bf16.mxu0 0
        %1456 = vmatpush2.bf16.msra.mxu0 0
        %1457 = vmatprep.subr.bf16.mxu0 0
        %1458 = vmatpush2.bf16.msra.mxu0 0
        %1459 = vmatprep.subr.bf16.mxu0 0
        %1460 = vmatpush2.bf16.msra.mxu0 0
        %1461 = vmatprep.mubr.bf16.mxu0 0
        %1462 = vmatmul.mubr.bf16.gmra.mxu0 %v1379
        %v1463 = vpop.f32.mrf.mxu0
        %v1464 = vadd.f32 0.0, %v1463
        %v1465 = vpop.f32.mrf.mxu0
        %v1466 = vpop.f32.mrf.mxu0
        %v1467 = vadd.f32 0.0, %v1466
        %v1468 = vpop.f32.mrf.mxu0
        %1469 = vmatprep.mubr.bf16.mxu0 0
        %1470 = vmatmul.mubr.bf16.gmra.mxu0 %v1382
        %v1471 = vpop.f32.mrf.mxu0
        %v1472 = vadd.f32 0.0, %v1471
        %v1473 = vpop.f32.mrf.mxu0
        %v1474 = vpop.f32.mrf.mxu0
        %v1475 = vadd.f32 0.0, %v1474
        %v1476 = vpop.f32.mrf.mxu0
        %1477 = vmatprep.mubr.bf16.mxu0 0
        %1478 = vmatmul.mubr.bf16.gmra.mxu0 %v1385
        %v1479 = vpop.f32.mrf.mxu0
        %v1480 = vadd.f32 0.0, %v1479
        %v1481 = vpop.f32.mrf.mxu0
        %v1482 = vpop.f32.mrf.mxu0
        %v1483 = vadd.f32 0.0, %v1482
        %v1484 = vpop.f32.mrf.mxu0
        %1485 = vmatprep.mubr.bf16.mxu0 0
        %1486 = vmatmul.mubr.bf16.gmra.mxu0 %v1388
        %v1487 = vpop.f32.mrf.mxu0
        %v1488 = vadd.f32 0.0, %v1487
        %v1489 = vpop.f32.mrf.mxu0
        %v1490 = vpop.f32.mrf.mxu0
        %v1491 = vadd.f32 0.0, %v1490
        %v1492 = vpop.f32.mrf.mxu0
        %1493 = vmatprep.mubr.bf16.mxu0 0
        %1494 = vmatmul.mubr.bf16.gmra.mxu0 %v1391
        %v1495 = vpop.f32.mrf.mxu0
        %v1496 = vadd.f32 0.0, %v1495
        %v1497 = vpop.f32.mrf.mxu0
        %v1498 = vpop.f32.mrf.mxu0
        %v1499 = vadd.f32 0.0, %v1498
        %v1500 = vpop.f32.mrf.mxu0
        %1501 = vmatprep.mubr.bf16.mxu0 0
        %1502 = vmatmul.mubr.bf16.gmra.mxu0 %v1394
        %v1503 = vpop.f32.mrf.mxu0
        %v1504 = vadd.f32 0.0, %v1503
        %v1505 = vpop.f32.mrf.mxu0
        %v1506 = vpop.f32.mrf.mxu0
        %v1507 = vadd.f32 0.0, %v1506
        %v1508 = vpop.f32.mrf.mxu0
        %1509 = vmatprep.mubr.bf16.mxu0 0
        %1510 = vmatmul.mubr.bf16.gmra.mxu0 %v1397
        %v1511 = vpop.f32.mrf.mxu0
        %v1512 = vadd.f32 0.0, %v1511
        %v1513 = vpop.f32.mrf.mxu0
        %v1514 = vpop.f32.mrf.mxu0
        %v1515 = vadd.f32 0.0, %v1514
        %v1516 = vpop.f32.mrf.mxu0
        %1517 = vmatprep.mubr.bf16.mxu0 0
        %1518 = vmatmul.mubr.bf16.gmra.mxu0 %v1400
        %v1519 = vpop.f32.mrf.mxu0
        %v1520 = vadd.f32 0.0, %v1519
        %v1521 = vpop.f32.mrf.mxu0
        %v1522 = vpop.f32.mrf.mxu0
        %v1523 = vadd.f32 0.0, %v1522
        %v1524 = vpop.f32.mrf.mxu0
        %1525 = vmatprep.mubr.bf16.mxu0 0
        %1526 = vmatmul.mubr.bf16.gmra.mxu0 %v1403
        %v1527 = vpop.f32.mrf.mxu0
        %v1528 = vadd.f32 0.0, %v1527
        %v1529 = vpop.f32.mrf.mxu0
        %v1530 = vpop.f32.mrf.mxu0
        %v1531 = vadd.f32 0.0, %v1530
        %v1532 = vpop.f32.mrf.mxu0
        %1533 = vmatprep.mubr.bf16.mxu0 0
        %1534 = vmatmul.mubr.bf16.gmra.mxu0 %v1406
        %v1535 = vpop.f32.mrf.mxu0
        %v1536 = vadd.f32 0.0, %v1535
        %v1537 = vpop.f32.mrf.mxu0
        %v1538 = vpop.f32.mrf.mxu0
        %v1539 = vadd.f32 0.0, %v1538
        %v1540 = vpop.f32.mrf.mxu0
        %1541 = vmatprep.mubr.bf16.mxu0 0
        %1542 = vmatmul.mubr.bf16.gmra.mxu0 %v1409
        %v1543 = vpop.f32.mrf.mxu0
        %v1544 = vadd.f32 0.0, %v1543
        %v1545 = vpop.f32.mrf.mxu0
        %v1546 = vpop.f32.mrf.mxu0
        %v1547 = vadd.f32 0.0, %v1546
        %v1548 = vpop.f32.mrf.mxu0
        %1549 = vmatprep.mubr.bf16.mxu0 0
        %1550 = vmatmul.mubr.bf16.gmra.mxu0 %v1412
        %v1551 = vpop.f32.mrf.mxu0
        %v1552 = vadd.f32 0.0, %v1551
        %v1553 = vpop.f32.mrf.mxu0
        %v1554 = vpop.f32.mrf.mxu0
        %v1555 = vadd.f32 0.0, %v1554
        %v1556 = vpop.f32.mrf.mxu0
        %1557 = vmatprep.mubr.bf16.mxu0 0
        %1558 = vmatmul.mubr.bf16.gmra.mxu0 %v1415
        %v1559 = vpop.f32.mrf.mxu0
        %v1560 = vadd.f32 0.0, %v1559
        %v1561 = vpop.f32.mrf.mxu0
        %v1562 = vpop.f32.mrf.mxu0
        %v1563 = vadd.f32 0.0, %v1562
        %v1564 = vpop.f32.mrf.mxu0
        %1565 = vmatprep.mubr.bf16.mxu0 0
        %1566 = vmatmul.mubr.bf16.gmra.mxu0 %v1418
        %v1567 = vpop.f32.mrf.mxu0
        %v1568 = vadd.f32 0.0, %v1567
        %v1569 = vpop.f32.mrf.mxu0
        %v1570 = vpop.f32.mrf.mxu0
        %v1571 = vadd.f32 0.0, %v1570
        %v1572 = vpop.f32.mrf.mxu0
        %1573 = vmatprep.mubr.bf16.mxu0 0
        %1574 = vmatmul.mubr.bf16.gmra.mxu0 %v1421
        %v1575 = vpop.f32.mrf.mxu0
        %v1576 = vadd.f32 0.0, %v1575
        %v1577 = vpop.f32.mrf.mxu0
        %v1578 = vpop.f32.mrf.mxu0
        %v1579 = vadd.f32 0.0, %v1578
        %v1580 = vpop.f32.mrf.mxu0
        %1581 = vmatprep.mubr.bf16.mxu0 0
        %1582 = vmatmul.mubr.bf16.gmra.mxu0 %v1424
        %v1583 = vpop.f32.mrf.mxu0
        %v1584 = vadd.f32 0.0, %v1583
        %v1585 = vpop.f32.mrf.mxu0
        %v1586 = vpop.f32.mrf.mxu0
        %v1587 = vadd.f32 0.0, %v1586
        %v1588 = vpop.f32.mrf.mxu0
        %1589 = vdwg.mxu0
        %v1590 = vadd.f32 %v1071, %v1464
        %v1591 = vadd.f32 %v1074, %v1467
        %v1592 = vadd.f32 %v1079, %v1472
        %v1593 = vadd.f32 %v1082, %v1475
        %v1594 = vadd.f32 %v1087, %v1480
        %v1595 = vadd.f32 %v1090, %v1483
        %v1596 = vadd.f32 %v1095, %v1488
        %v1597 = vadd.f32 %v1098, %v1491
        %v1598 = vadd.f32 %v1103, %v1496
        %v1599 = vadd.f32 %v1106, %v1499
        %v1600 = vadd.f32 %v1111, %v1504
        %v1601 = vadd.f32 %v1114, %v1507
        %v1602 = vadd.f32 %v1119, %v1512
        %v1603 = vadd.f32 %v1122, %v1515
        %v1604 = vadd.f32 %v1127, %v1520
        %v1605 = vadd.f32 %v1130, %v1523
        %v1606 = vadd.f32 %v1135, %v1528
        %v1607 = vadd.f32 %v1138, %v1531
        %v1608 = vadd.f32 %v1143, %v1536
        %v1609 = vadd.f32 %v1146, %v1539
        %v1610 = vadd.f32 %v1151, %v1544
        %v1611 = vadd.f32 %v1154, %v1547
        %v1612 = vadd.f32 %v1159, %v1552
        %v1613 = vadd.f32 %v1162, %v1555
        %v1614 = vadd.f32 %v1167, %v1560
        %v1615 = vadd.f32 %v1170, %v1563
        %v1616 = vadd.f32 %v1175, %v1568
        %v1617 = vadd.f32 %v1178, %v1571
        %v1618 = vadd.f32 %v1183, %v1576
        %v1619 = vadd.f32 %v1186, %v1579
        %v1620 = vadd.f32 %v1191, %v1584
        %v1621 = vadd.f32 %v1194, %v1587
        %s1622 = scalar_lea.vmem %s1, 6
        %v1623 = vld [vmem:[%s1622] sm:$0x3]
        %v1626 = vunpack.c.l.b16 %v245
        %v1627 = vunpack.c.l.b16 %v246
        %v1628 = vpack.c.b16 %v1627, %v1626
        %v1630 = vsel %vm691, %v1628, 0
        %v1633 = vsel %vm740, %v1623, 0
        %1635 = vmatprep.subr.bf16.mxu0 0
        %1636 = vmatpush1.bf16.msra.mxu0 0
        %1637 = vmatprep.subr.bf16.mxu0 0
        %1638 = vmatpush1.bf16.msra.mxu0 0
        %1639 = vmatprep.subr.bf16.mxu0 0
        %1640 = vmatpush1.bf16.msra.mxu0 0
        %1641 = vmatprep.subr.bf16.mxu0 0
        %1642 = vmatpush1.bf16.msra.mxu0 0
        %1643 = vmatprep.subr.bf16.mxu0 0
        %1644 = vmatpush1.bf16.msra.mxu0 0
        %1645 = vmatprep.subr.bf16.mxu0 0
        %1646 = vmatpush1.bf16.msra.mxu0 0
        %1647 = vmatprep.subr.bf16.mxu0 0
        %1648 = vmatpush1.bf16.msra.mxu0 0
        %1649 = vmatprep.subr.bf16.mxu0 0
        %1650 = vmatpush1.bf16.msra.mxu0 %v1633
        %1651 = vmatprep.subr.bf16.mxu0 0
        %1652 = vmatpush2.bf16.msra.mxu0 0
        %1653 = vmatprep.subr.bf16.mxu0 0
        %1654 = vmatpush2.bf16.msra.mxu0 0
        %1655 = vmatprep.subr.bf16.mxu0 0
        %1656 = vmatpush2.bf16.msra.mxu0 0
        %1657 = vmatprep.subr.bf16.mxu0 0
        %1658 = vmatpush2.bf16.msra.mxu0 0
        %1659 = vmatprep.subr.bf16.mxu0 0
        %1660 = vmatpush2.bf16.msra.mxu0 0
        %1661 = vmatprep.subr.bf16.mxu0 0
        %1662 = vmatpush2.bf16.msra.mxu0 0
        %1663 = vmatprep.subr.bf16.mxu0 0
        %1664 = vmatpush2.bf16.msra.mxu0 0
        %1665 = vmatprep.subr.bf16.mxu0 0
        %1666 = vmatpush2.bf16.msra.mxu0 0
        %1667 = vmatprep.mubr.bf16.mxu0 0
        %1668 = vmatmul.mubr.bf16.gmra.mxu0 %v989
        %v1669 = vpop.f32.mrf.mxu0
        %v1670 = vadd.f32 0.0, %v1669
        %v1671 = vpop.f32.mrf.mxu0
        %v1672 = vpop.f32.mrf.mxu0
        %v1673 = vadd.f32 0.0, %v1672
        %v1674 = vpop.f32.mrf.mxu0
        %1675 = vmatprep.mubr.bf16.mxu0 0
        %1676 = vmatmul.mubr.bf16.gmra.mxu0 %v992
        %v1677 = vpop.f32.mrf.mxu0
        %v1678 = vadd.f32 0.0, %v1677
        %v1679 = vpop.f32.mrf.mxu0
        %v1680 = vpop.f32.mrf.mxu0
        %v1681 = vadd.f32 0.0, %v1680
        %v1682 = vpop.f32.mrf.mxu0
        %1683 = vmatprep.mubr.bf16.mxu0 0
        %1684 = vmatmul.mubr.bf16.gmra.mxu0 %v995
        %v1685 = vpop.f32.mrf.mxu0
        %v1686 = vadd.f32 0.0, %v1685
        %v1687 = vpop.f32.mrf.mxu0
        %v1688 = vpop.f32.mrf.mxu0
        %v1689 = vadd.f32 0.0, %v1688
        %v1690 = vpop.f32.mrf.mxu0
        %1691 = vmatprep.mubr.bf16.mxu0 0
        %1692 = vmatmul.mubr.bf16.gmra.mxu0 %v998
        %v1693 = vpop.f32.mrf.mxu0
        %v1694 = vadd.f32 0.0, %v1693
        %v1695 = vpop.f32.mrf.mxu0
        %v1696 = vpop.f32.mrf.mxu0
        %v1697 = vadd.f32 0.0, %v1696
        %v1698 = vpop.f32.mrf.mxu0
        %1699 = vmatprep.mubr.bf16.mxu0 0
        %1700 = vmatmul.mubr.bf16.gmra.mxu0 %v1001
        %v1701 = vpop.f32.mrf.mxu0
        %v1702 = vadd.f32 0.0, %v1701
        %v1703 = vpop.f32.mrf.mxu0
        %v1704 = vpop.f32.mrf.mxu0
        %v1705 = vadd.f32 0.0, %v1704
        %v1706 = vpop.f32.mrf.mxu0
        %1707 = vmatprep.mubr.bf16.mxu0 0
        %1708 = vmatmul.mubr.bf16.gmra.mxu0 %v1004
        %v1709 = vpop.f32.mrf.mxu0
        %v1710 = vadd.f32 0.0, %v1709
        %v1711 = vpop.f32.mrf.mxu0
        %v1712 = vpop.f32.mrf.mxu0
        %v1713 = vadd.f32 0.0, %v1712
        %v1714 = vpop.f32.mrf.mxu0
        %1715 = vmatprep.mubr.bf16.mxu0 0
        %1716 = vmatmul.mubr.bf16.gmra.mxu0 %v1007
        %v1717 = vpop.f32.mrf.mxu0
        %v1718 = vadd.f32 0.0, %v1717
        %v1719 = vpop.f32.mrf.mxu0
        %v1720 = vpop.f32.mrf.mxu0
        %v1721 = vadd.f32 0.0, %v1720
        %v1722 = vpop.f32.mrf.mxu0
        %1723 = vmatprep.mubr.bf16.mxu0 0
        %1724 = vmatmul.mubr.bf16.gmra.mxu0 %v1010
        %v1725 = vpop.f32.mrf.mxu0
        %v1726 = vadd.f32 0.0, %v1725
        %v1727 = vpop.f32.mrf.mxu0
        %v1728 = vpop.f32.mrf.mxu0
        %v1729 = vadd.f32 0.0, %v1728
        %v1730 = vpop.f32.mrf.mxu0
        %1731 = vmatprep.mubr.bf16.mxu0 0
        %1732 = vmatmul.mubr.bf16.gmra.mxu0 %v1013
        %v1733 = vpop.f32.mrf.mxu0
        %v1734 = vadd.f32 0.0, %v1733
        %v1735 = vpop.f32.mrf.mxu0
        %v1736 = vpop.f32.mrf.mxu0
        %v1737 = vadd.f32 0.0, %v1736
        %v1738 = vpop.f32.mrf.mxu0
        %1739 = vmatprep.mubr.bf16.mxu0 0
        %1740 = vmatmul.mubr.bf16.gmra.mxu0 %v1016
        %v1741 = vpop.f32.mrf.mxu0
        %v1742 = vadd.f32 0.0, %v1741
        %v1743 = vpop.f32.mrf.mxu0
        %v1744 = vpop.f32.mrf.mxu0
        %v1745 = vadd.f32 0.0, %v1744
        %v1746 = vpop.f32.mrf.mxu0
        %1747 = vmatprep.mubr.bf16.mxu0 0
        %1748 = vmatmul.mubr.bf16.gmra.mxu0 %v1019
        %v1749 = vpop.f32.mrf.mxu0
        %v1750 = vadd.f32 0.0, %v1749
        %v1751 = vpop.f32.mrf.mxu0
        %v1752 = vpop.f32.mrf.mxu0
        %v1753 = vadd.f32 0.0, %v1752
        %v1754 = vpop.f32.mrf.mxu0
        %1755 = vmatprep.mubr.bf16.mxu0 0
        %1756 = vmatmul.mubr.bf16.gmra.mxu0 %v1022
        %v1757 = vpop.f32.mrf.mxu0
        %v1758 = vadd.f32 0.0, %v1757
        %v1759 = vpop.f32.mrf.mxu0
        %v1760 = vpop.f32.mrf.mxu0
        %v1761 = vadd.f32 0.0, %v1760
        %v1762 = vpop.f32.mrf.mxu0
        %1763 = vmatprep.mubr.bf16.mxu0 0
        %1764 = vmatmul.mubr.bf16.gmra.mxu0 %v1025
        %v1765 = vpop.f32.mrf.mxu0
        %v1766 = vadd.f32 0.0, %v1765
        %v1767 = vpop.f32.mrf.mxu0
        %v1768 = vpop.f32.mrf.mxu0
        %v1769 = vadd.f32 0.0, %v1768
        %v1770 = vpop.f32.mrf.mxu0
        %1771 = vmatprep.mubr.bf16.mxu0 0
        %1772 = vmatmul.mubr.bf16.gmra.mxu0 %v1028
        %v1773 = vpop.f32.mrf.mxu0
        %v1774 = vadd.f32 0.0, %v1773
        %v1775 = vpop.f32.mrf.mxu0
        %v1776 = vpop.f32.mrf.mxu0
        %v1777 = vadd.f32 0.0, %v1776
        %v1778 = vpop.f32.mrf.mxu0
        %1779 = vmatprep.mubr.bf16.mxu0 0
        %1780 = vmatmul.mubr.bf16.gmra.mxu0 %v1031
        %v1781 = vpop.f32.mrf.mxu0
        %v1782 = vadd.f32 0.0, %v1781
        %v1783 = vpop.f32.mrf.mxu0
        %v1784 = vpop.f32.mrf.mxu0
        %v1785 = vadd.f32 0.0, %v1784
        %v1786 = vpop.f32.mrf.mxu0
        %1787 = vmatprep.mubr.bf16.mxu0 0
        %1788 = vmatmul.mubr.bf16.gmra.mxu0 %v1630
        %v1789 = vpop.f32.mrf.mxu0
        %v1790 = vadd.f32 0.0, %v1789
        %v1791 = vpop.f32.mrf.mxu0
        %v1792 = vpop.f32.mrf.mxu0
        %v1793 = vadd.f32 0.0, %v1792
        %v1794 = vpop.f32.mrf.mxu0
        %1795 = vdwg.mxu0
        %v1796 = vadd.f32 %v1590, %v1670
        %v1797 = vadd.f32 %v1591, %v1673
        %v1798 = vadd.f32 %v1592, %v1678
        %v1799 = vadd.f32 %v1593, %v1681
        %v1800 = vadd.f32 %v1594, %v1686
        %v1801 = vadd.f32 %v1595, %v1689
        %v1802 = vadd.f32 %v1596, %v1694
        %v1803 = vadd.f32 %v1597, %v1697
        %v1804 = vadd.f32 %v1598, %v1702
        %v1805 = vadd.f32 %v1599, %v1705
        %v1806 = vadd.f32 %v1600, %v1710
        %v1807 = vadd.f32 %v1601, %v1713
        %v1808 = vadd.f32 %v1602, %v1718
        %v1809 = vadd.f32 %v1603, %v1721
        %v1810 = vadd.f32 %v1604, %v1726
        %v1811 = vadd.f32 %v1605, %v1729
        %v1812 = vadd.f32 %v1606, %v1734
        %v1813 = vadd.f32 %v1607, %v1737
        %v1814 = vadd.f32 %v1608, %v1742
        %v1815 = vadd.f32 %v1609, %v1745
        %v1816 = vadd.f32 %v1610, %v1750
        %v1817 = vadd.f32 %v1611, %v1753
        %v1818 = vadd.f32 %v1612, %v1758
        %v1819 = vadd.f32 %v1613, %v1761
        %v1820 = vadd.f32 %v1614, %v1766
        %v1821 = vadd.f32 %v1615, %v1769
        %v1822 = vadd.f32 %v1616, %v1774
        %v1823 = vadd.f32 %v1617, %v1777
        %v1824 = vadd.f32 %v1618, %v1782
        %v1825 = vadd.f32 %v1619, %v1785
        %v1826 = vadd.f32 %v1620, %v1790
        %v1827 = vadd.f32 %v1621, %v1793
        %v1829 = vshrl.u32 %v245, 16
        %v1831 = vrot.slane %v1829, 4
        %v1832 = vshll.u32 %v245, 16
        %v1834 = vrot.slane %v1832, 5
        %v1835 = vor.u32 %v1831, %v1834
        %v1836 = vrot.slane %v1835, 4
        %v1838 = vshll.u32 %v246, 16
        %v1840 = vrot.slane %v1838, 5
        %v1841 = vsel %vm256, %v1836, %v1840
        %v1842 = vshrl.u32 %v246, 16
        %v1844 = vrot.slane %v1842, 4
        %v1845 = vor.u32 %v1844, %v1840
        %v1846 = vrot.slane %v1845, 4
        %v1848 = vshll.u32 %v247, 16
        %v1850 = vrot.slane %v1848, 5
        %v1851 = vsel %vm256, %v1846, %v1850
        %s1852 = scalar_lea.vmem %s1, 8
        %v1853 = vld [vmem:[%s1852] sm:$0x3]
        %v1854 = vunpack.c.l.b16 %v1841
        %v1855 = vunpack.c.l.b16 %v1851
        %v1856 = vpack.c.b16 %v1855, %v1854
        %v1858 = vsel %vm691, %v1856, 0
        %v1861 = vsel %vm740, %v1853, 0
        %1863 = vmatprep.subr.bf16.mxu0 0
        %1864 = vmatpush1.bf16.msra.mxu0 0
        %1865 = vmatprep.subr.bf16.mxu0 0
        %1866 = vmatpush1.bf16.msra.mxu0 0
        %1867 = vmatprep.subr.bf16.mxu0 0
        %1868 = vmatpush1.bf16.msra.mxu0 0
        %1869 = vmatprep.subr.bf16.mxu0 0
        %1870 = vmatpush1.bf16.msra.mxu0 0
        %1871 = vmatprep.subr.bf16.mxu0 0
        %1872 = vmatpush1.bf16.msra.mxu0 0
        %1873 = vmatprep.subr.bf16.mxu0 0
        %1874 = vmatpush1.bf16.msra.mxu0 0
        %1875 = vmatprep.subr.bf16.mxu0 0
        %1876 = vmatpush1.bf16.msra.mxu0 0
        %1877 = vmatprep.subr.bf16.mxu0 0
        %1878 = vmatpush1.bf16.msra.mxu0 %v1861
        %1879 = vmatprep.subr.bf16.mxu0 0
        %1880 = vmatpush2.bf16.msra.mxu0 0
        %1881 = vmatprep.subr.bf16.mxu0 0
        %1882 = vmatpush2.bf16.msra.mxu0 0
        %1883 = vmatprep.subr.bf16.mxu0 0
        %1884 = vmatpush2.bf16.msra.mxu0 0
        %1885 = vmatprep.subr.bf16.mxu0 0
        %1886 = vmatpush2.bf16.msra.mxu0 0
        %1887 = vmatprep.subr.bf16.mxu0 0
        %1888 = vmatpush2.bf16.msra.mxu0 0
        %1889 = vmatprep.subr.bf16.mxu0 0
        %1890 = vmatpush2.bf16.msra.mxu0 0
        %1891 = vmatprep.subr.bf16.mxu0 0
        %1892 = vmatpush2.bf16.msra.mxu0 0
        %1893 = vmatprep.subr.bf16.mxu0 0
        %1894 = vmatpush2.bf16.msra.mxu0 0
        %1895 = vmatprep.mubr.bf16.mxu0 0
        %1896 = vmatmul.mubr.bf16.gmra.mxu0 %v696
        %v1897 = vpop.f32.mrf.mxu0
        %v1898 = vadd.f32 0.0, %v1897
        %v1899 = vpop.f32.mrf.mxu0
        %v1900 = vpop.f32.mrf.mxu0
        %v1901 = vadd.f32 0.0, %v1900
        %v1902 = vpop.f32.mrf.mxu0
        %1903 = vmatprep.mubr.bf16.mxu0 0
        %1904 = vmatmul.mubr.bf16.gmra.mxu0 %v699
        %v1905 = vpop.f32.mrf.mxu0
        %v1906 = vadd.f32 0.0, %v1905
        %v1907 = vpop.f32.mrf.mxu0
        %v1908 = vpop.f32.mrf.mxu0
        %v1909 = vadd.f32 0.0, %v1908
        %v1910 = vpop.f32.mrf.mxu0
        %1911 = vmatprep.mubr.bf16.mxu0 0
        %1912 = vmatmul.mubr.bf16.gmra.mxu0 %v702
        %v1913 = vpop.f32.mrf.mxu0
        %v1914 = vadd.f32 0.0, %v1913
        %v1915 = vpop.f32.mrf.mxu0
        %v1916 = vpop.f32.mrf.mxu0
        %v1917 = vadd.f32 0.0, %v1916
        %v1918 = vpop.f32.mrf.mxu0
        %1919 = vmatprep.mubr.bf16.mxu0 0
        %1920 = vmatmul.mubr.bf16.gmra.mxu0 %v705
        %v1921 = vpop.f32.mrf.mxu0
        %v1922 = vadd.f32 0.0, %v1921
        %v1923 = vpop.f32.mrf.mxu0
        %v1924 = vpop.f32.mrf.mxu0
        %v1925 = vadd.f32 0.0, %v1924
        %v1926 = vpop.f32.mrf.mxu0
        %1927 = vmatprep.mubr.bf16.mxu0 0
        %1928 = vmatmul.mubr.bf16.gmra.mxu0 %v708
        %v1929 = vpop.f32.mrf.mxu0
        %v1930 = vadd.f32 0.0, %v1929
        %v1931 = vpop.f32.mrf.mxu0
        %v1932 = vpop.f32.mrf.mxu0
        %v1933 = vadd.f32 0.0, %v1932
        %v1934 = vpop.f32.mrf.mxu0
        %1935 = vmatprep.mubr.bf16.mxu0 0
        %1936 = vmatmul.mubr.bf16.gmra.mxu0 %v711
        %v1937 = vpop.f32.mrf.mxu0
        %v1938 = vadd.f32 0.0, %v1937
        %v1939 = vpop.f32.mrf.mxu0
        %v1940 = vpop.f32.mrf.mxu0
        %v1941 = vadd.f32 0.0, %v1940
        %v1942 = vpop.f32.mrf.mxu0
        %1943 = vmatprep.mubr.bf16.mxu0 0
        %1944 = vmatmul.mubr.bf16.gmra.mxu0 %v714
        %v1945 = vpop.f32.mrf.mxu0
        %v1946 = vadd.f32 0.0, %v1945
        %v1947 = vpop.f32.mrf.mxu0
        %v1948 = vpop.f32.mrf.mxu0
        %v1949 = vadd.f32 0.0, %v1948
        %v1950 = vpop.f32.mrf.mxu0
        %1951 = vmatprep.mubr.bf16.mxu0 0
        %1952 = vmatmul.mubr.bf16.gmra.mxu0 %v717
        %v1953 = vpop.f32.mrf.mxu0
        %v1954 = vadd.f32 0.0, %v1953
        %v1955 = vpop.f32.mrf.mxu0
        %v1956 = vpop.f32.mrf.mxu0
        %v1957 = vadd.f32 0.0, %v1956
        %v1958 = vpop.f32.mrf.mxu0
        %1959 = vmatprep.mubr.bf16.mxu0 0
        %1960 = vmatmul.mubr.bf16.gmra.mxu0 %v720
        %v1961 = vpop.f32.mrf.mxu0
        %v1962 = vadd.f32 0.0, %v1961
        %v1963 = vpop.f32.mrf.mxu0
        %v1964 = vpop.f32.mrf.mxu0
        %v1965 = vadd.f32 0.0, %v1964
        %v1966 = vpop.f32.mrf.mxu0
        %1967 = vmatprep.mubr.bf16.mxu0 0
        %1968 = vmatmul.mubr.bf16.gmra.mxu0 %v723
        %v1969 = vpop.f32.mrf.mxu0
        %v1970 = vadd.f32 0.0, %v1969
        %v1971 = vpop.f32.mrf.mxu0
        %v1972 = vpop.f32.mrf.mxu0
        %v1973 = vadd.f32 0.0, %v1972
        %v1974 = vpop.f32.mrf.mxu0
        %1975 = vmatprep.mubr.bf16.mxu0 0
        %1976 = vmatmul.mubr.bf16.gmra.mxu0 %v726
        %v1977 = vpop.f32.mrf.mxu0
        %v1978 = vadd.f32 0.0, %v1977
        %v1979 = vpop.f32.mrf.mxu0
        %v1980 = vpop.f32.mrf.mxu0
        %v1981 = vadd.f32 0.0, %v1980
        %v1982 = vpop.f32.mrf.mxu0
        %1983 = vmatprep.mubr.bf16.mxu0 0
        %1984 = vmatmul.mubr.bf16.gmra.mxu0 %v729
        %v1985 = vpop.f32.mrf.mxu0
        %v1986 = vadd.f32 0.0, %v1985
        %v1987 = vpop.f32.mrf.mxu0
        %v1988 = vpop.f32.mrf.mxu0
        %v1989 = vadd.f32 0.0, %v1988
        %v1990 = vpop.f32.mrf.mxu0
        %1991 = vmatprep.mubr.bf16.mxu0 0
        %1992 = vmatmul.mubr.bf16.gmra.mxu0 %v732
        %v1993 = vpop.f32.mrf.mxu0
        %v1994 = vadd.f32 0.0, %v1993
        %v1995 = vpop.f32.mrf.mxu0
        %v1996 = vpop.f32.mrf.mxu0
        %v1997 = vadd.f32 0.0, %v1996
        %v1998 = vpop.f32.mrf.mxu0
        %1999 = vmatprep.mubr.bf16.mxu0 0
        %2000 = vmatmul.mubr.bf16.gmra.mxu0 %v735
        %v2001 = vpop.f32.mrf.mxu0
        %v2002 = vadd.f32 0.0, %v2001
        %v2003 = vpop.f32.mrf.mxu0
        %v2004 = vpop.f32.mrf.mxu0
        %v2005 = vadd.f32 0.0, %v2004
        %v2006 = vpop.f32.mrf.mxu0
        %2007 = vmatprep.mubr.bf16.mxu0 0
        %2008 = vmatmul.mubr.bf16.gmra.mxu0 %v738
        %v2009 = vpop.f32.mrf.mxu0
        %v2010 = vadd.f32 0.0, %v2009
        %v2011 = vpop.f32.mrf.mxu0
        %v2012 = vpop.f32.mrf.mxu0
        %v2013 = vadd.f32 0.0, %v2012
        %v2014 = vpop.f32.mrf.mxu0
        %2015 = vmatprep.mubr.bf16.mxu0 0
        %2016 = vmatmul.mubr.bf16.gmra.mxu0 %v1858
        %v2017 = vpop.f32.mrf.mxu0
        %v2018 = vadd.f32 0.0, %v2017
        %v2019 = vpop.f32.mrf.mxu0
        %v2020 = vpop.f32.mrf.mxu0
        %v2021 = vadd.f32 0.0, %v2020
        %v2022 = vpop.f32.mrf.mxu0
        %2023 = vdwg.mxu0
        %v2024 = vadd.f32 %v1796, %v1898
        %v2025 = vadd.f32 %v1797, %v1901
        %v2026 = vadd.f32 %v1798, %v1906
        %v2027 = vadd.f32 %v1799, %v1909
        %v2028 = vadd.f32 %v1800, %v1914
        %v2029 = vadd.f32 %v1801, %v1917
        %v2030 = vadd.f32 %v1802, %v1922
        %v2031 = vadd.f32 %v1803, %v1925
        %v2032 = vadd.f32 %v1804, %v1930
        %v2033 = vadd.f32 %v1805, %v1933
        %v2034 = vadd.f32 %v1806, %v1938
        %v2035 = vadd.f32 %v1807, %v1941
        %v2036 = vadd.f32 %v1808, %v1946
        %v2037 = vadd.f32 %v1809, %v1949
        %v2038 = vadd.f32 %v1810, %v1954
        %v2039 = vadd.f32 %v1811, %v1957
        %v2040 = vadd.f32 %v1812, %v1962
        %v2041 = vadd.f32 %v1813, %v1965
        %v2042 = vadd.f32 %v1814, %v1970
        %v2043 = vadd.f32 %v1815, %v1973
        %v2044 = vadd.f32 %v1816, %v1978
        %v2045 = vadd.f32 %v1817, %v1981
        %v2046 = vadd.f32 %v1818, %v1986
        %v2047 = vadd.f32 %v1819, %v1989
        %v2048 = vadd.f32 %v1820, %v1994
        %v2049 = vadd.f32 %v1821, %v1997
        %v2050 = vadd.f32 %v1822, %v2002
        %v2051 = vadd.f32 %v1823, %v2005
        %v2052 = vadd.f32 %v1824, %v2010
        %v2053 = vadd.f32 %v1825, %v2013
        %v2054 = vadd.f32 %v1826, %v2018
        %v2055 = vadd.f32 %v1827, %v2021
        %v2057 = vrot.slane %v245, 5
        %v2058 = vrot.slane %v2057, 4
        %v2059 = vrot.slane %v246, 5
        %v2060 = vsel %vm1215, %v2058, %v2059
        %v2061 = vrot.slane %v2059, 4
        %v2062 = vrot.slane %v247, 5
        %v2063 = vsel %vm1215, %v2061, %v2062
        %s2064 = scalar_lea.vmem %s1, 10
        %v2065 = vld [vmem:[%s2064] sm:$0x3]
        %v2066 = vunpack.c.l.b16 %v2060
        %v2067 = vunpack.c.l.b16 %v2063
        %v2068 = vpack.c.b16 %v2067, %v2066
        %v2070 = vsel %vm691, %v2068, 0
        %v2073 = vsel %vm740, %v2065, 0
        %2075 = vmatprep.subr.bf16.mxu0 0
        %2076 = vmatpush1.bf16.msra.mxu0 0
        %2077 = vmatprep.subr.bf16.mxu0 0
        %2078 = vmatpush1.bf16.msra.mxu0 0
        %2079 = vmatprep.subr.bf16.mxu0 0
        %2080 = vmatpush1.bf16.msra.mxu0 0
        %2081 = vmatprep.subr.bf16.mxu0 0
        %2082 = vmatpush1.bf16.msra.mxu0 0
        %2083 = vmatprep.subr.bf16.mxu0 0
        %2084 = vmatpush1.bf16.msra.mxu0 0
        %2085 = vmatprep.subr.bf16.mxu0 0
        %2086 = vmatpush1.bf16.msra.mxu0 0
        %2087 = vmatprep.subr.bf16.mxu0 0
        %2088 = vmatpush1.bf16.msra.mxu0 0
        %2089 = vmatprep.subr.bf16.mxu0 0
        %2090 = vmatpush1.bf16.msra.mxu0 %v2073
        %2091 = vmatprep.subr.bf16.mxu0 0
        %2092 = vmatpush2.bf16.msra.mxu0 0
        %2093 = vmatprep.subr.bf16.mxu0 0
        %2094 = vmatpush2.bf16.msra.mxu0 0
        %2095 = vmatprep.subr.bf16.mxu0 0
        %2096 = vmatpush2.bf16.msra.mxu0 0
        %2097 = vmatprep.subr.bf16.mxu0 0
        %2098 = vmatpush2.bf16.msra.mxu0 0
        %2099 = vmatprep.subr.bf16.mxu0 0
        %2100 = vmatpush2.bf16.msra.mxu0 0
        %2101 = vmatprep.subr.bf16.mxu0 0
        %2102 = vmatpush2.bf16.msra.mxu0 0
        %2103 = vmatprep.subr.bf16.mxu0 0
        %2104 = vmatpush2.bf16.msra.mxu0 0
        %2105 = vmatprep.subr.bf16.mxu0 0
        %2106 = vmatpush2.bf16.msra.mxu0 0
        %2107 = vmatprep.mubr.bf16.mxu0 0
        %2108 = vmatmul.mubr.bf16.gmra.mxu0 %v1382
        %v2109 = vpop.f32.mrf.mxu0
        %v2110 = vadd.f32 0.0, %v2109
        %v2111 = vpop.f32.mrf.mxu0
        %v2112 = vpop.f32.mrf.mxu0
        %v2113 = vadd.f32 0.0, %v2112
        %v2114 = vpop.f32.mrf.mxu0
        %2115 = vmatprep.mubr.bf16.mxu0 0
        %2116 = vmatmul.mubr.bf16.gmra.mxu0 %v1385
        %v2117 = vpop.f32.mrf.mxu0
        %v2118 = vadd.f32 0.0, %v2117
        %v2119 = vpop.f32.mrf.mxu0
        %v2120 = vpop.f32.mrf.mxu0
        %v2121 = vadd.f32 0.0, %v2120
        %v2122 = vpop.f32.mrf.mxu0
        %2123 = vmatprep.mubr.bf16.mxu0 0
        %2124 = vmatmul.mubr.bf16.gmra.mxu0 %v1388
        %v2125 = vpop.f32.mrf.mxu0
        %v2126 = vadd.f32 0.0, %v2125
        %v2127 = vpop.f32.mrf.mxu0
        %v2128 = vpop.f32.mrf.mxu0
        %v2129 = vadd.f32 0.0, %v2128
        %v2130 = vpop.f32.mrf.mxu0
        %2131 = vmatprep.mubr.bf16.mxu0 0
        %2132 = vmatmul.mubr.bf16.gmra.mxu0 %v1391
        %v2133 = vpop.f32.mrf.mxu0
        %v2134 = vadd.f32 0.0, %v2133
        %v2135 = vpop.f32.mrf.mxu0
        %v2136 = vpop.f32.mrf.mxu0
        %v2137 = vadd.f32 0.0, %v2136
        %v2138 = vpop.f32.mrf.mxu0
        %2139 = vmatprep.mubr.bf16.mxu0 0
        %2140 = vmatmul.mubr.bf16.gmra.mxu0 %v1394
        %v2141 = vpop.f32.mrf.mxu0
        %v2142 = vadd.f32 0.0, %v2141
        %v2143 = vpop.f32.mrf.mxu0
        %v2144 = vpop.f32.mrf.mxu0
        %v2145 = vadd.f32 0.0, %v2144
        %v2146 = vpop.f32.mrf.mxu0
        %2147 = vmatprep.mubr.bf16.mxu0 0
        %2148 = vmatmul.mubr.bf16.gmra.mxu0 %v1397
        %v2149 = vpop.f32.mrf.mxu0
        %v2150 = vadd.f32 0.0, %v2149
        %v2151 = vpop.f32.mrf.mxu0
        %v2152 = vpop.f32.mrf.mxu0
        %v2153 = vadd.f32 0.0, %v2152
        %v2154 = vpop.f32.mrf.mxu0
        %2155 = vmatprep.mubr.bf16.mxu0 0
        %2156 = vmatmul.mubr.bf16.gmra.mxu0 %v1400
        %v2157 = vpop.f32.mrf.mxu0
        %v2158 = vadd.f32 0.0, %v2157
        %v2159 = vpop.f32.mrf.mxu0
        %v2160 = vpop.f32.mrf.mxu0
        %v2161 = vadd.f32 0.0, %v2160
        %v2162 = vpop.f32.mrf.mxu0
        %2163 = vmatprep.mubr.bf16.mxu0 0
        %2164 = vmatmul.mubr.bf16.gmra.mxu0 %v1403
        %v2165 = vpop.f32.mrf.mxu0
        %v2166 = vadd.f32 0.0, %v2165
        %v2167 = vpop.f32.mrf.mxu0
        %v2168 = vpop.f32.mrf.mxu0
        %v2169 = vadd.f32 0.0, %v2168
        %v2170 = vpop.f32.mrf.mxu0
        %2171 = vmatprep.mubr.bf16.mxu0 0
        %2172 = vmatmul.mubr.bf16.gmra.mxu0 %v1406
        %v2173 = vpop.f32.mrf.mxu0
        %v2174 = vadd.f32 0.0, %v2173
        %v2175 = vpop.f32.mrf.mxu0
        %v2176 = vpop.f32.mrf.mxu0
        %v2177 = vadd.f32 0.0, %v2176
        %v2178 = vpop.f32.mrf.mxu0
        %2179 = vmatprep.mubr.bf16.mxu0 0
        %2180 = vmatmul.mubr.bf16.gmra.mxu0 %v1409
        %v2181 = vpop.f32.mrf.mxu0
        %v2182 = vadd.f32 0.0, %v2181
        %v2183 = vpop.f32.mrf.mxu0
        %v2184 = vpop.f32.mrf.mxu0
        %v2185 = vadd.f32 0.0, %v2184
        %v2186 = vpop.f32.mrf.mxu0
        %2187 = vmatprep.mubr.bf16.mxu0 0
        %2188 = vmatmul.mubr.bf16.gmra.mxu0 %v1412
        %v2189 = vpop.f32.mrf.mxu0
        %v2190 = vadd.f32 0.0, %v2189
        %v2191 = vpop.f32.mrf.mxu0
        %v2192 = vpop.f32.mrf.mxu0
        %v2193 = vadd.f32 0.0, %v2192
        %v2194 = vpop.f32.mrf.mxu0
        %2195 = vmatprep.mubr.bf16.mxu0 0
        %2196 = vmatmul.mubr.bf16.gmra.mxu0 %v1415
        %v2197 = vpop.f32.mrf.mxu0
        %v2198 = vadd.f32 0.0, %v2197
        %v2199 = vpop.f32.mrf.mxu0
        %v2200 = vpop.f32.mrf.mxu0
        %v2201 = vadd.f32 0.0, %v2200
        %v2202 = vpop.f32.mrf.mxu0
        %2203 = vmatprep.mubr.bf16.mxu0 0
        %2204 = vmatmul.mubr.bf16.gmra.mxu0 %v1418
        %v2205 = vpop.f32.mrf.mxu0
        %v2206 = vadd.f32 0.0, %v2205
        %v2207 = vpop.f32.mrf.mxu0
        %v2208 = vpop.f32.mrf.mxu0
        %v2209 = vadd.f32 0.0, %v2208
        %v2210 = vpop.f32.mrf.mxu0
        %2211 = vmatprep.mubr.bf16.mxu0 0
        %2212 = vmatmul.mubr.bf16.gmra.mxu0 %v1421
        %v2213 = vpop.f32.mrf.mxu0
        %v2214 = vadd.f32 0.0, %v2213
        %v2215 = vpop.f32.mrf.mxu0
        %v2216 = vpop.f32.mrf.mxu0
        %v2217 = vadd.f32 0.0, %v2216
        %v2218 = vpop.f32.mrf.mxu0
        %2219 = vmatprep.mubr.bf16.mxu0 0
        %2220 = vmatmul.mubr.bf16.gmra.mxu0 %v1424
        %v2221 = vpop.f32.mrf.mxu0
        %v2222 = vadd.f32 0.0, %v2221
        %v2223 = vpop.f32.mrf.mxu0
        %v2224 = vpop.f32.mrf.mxu0
        %v2225 = vadd.f32 0.0, %v2224
        %v2226 = vpop.f32.mrf.mxu0
        %2227 = vmatprep.mubr.bf16.mxu0 0
        %2228 = vmatmul.mubr.bf16.gmra.mxu0 %v2070
        %v2229 = vpop.f32.mrf.mxu0
        %v2230 = vadd.f32 0.0, %v2229
        %v2231 = vpop.f32.mrf.mxu0
        %v2232 = vpop.f32.mrf.mxu0
        %v2233 = vadd.f32 0.0, %v2232
        %v2234 = vpop.f32.mrf.mxu0
        %2235 = vdwg.mxu0
        %v2236 = vadd.f32 %v2024, %v2110
        %v2237 = vadd.f32 %v2025, %v2113
        %v2238 = vadd.f32 %v2026, %v2118
        %v2239 = vadd.f32 %v2027, %v2121
        %v2240 = vadd.f32 %v2028, %v2126
        %v2241 = vadd.f32 %v2029, %v2129
        %v2242 = vadd.f32 %v2030, %v2134
        %v2243 = vadd.f32 %v2031, %v2137
        %v2244 = vadd.f32 %v2032, %v2142
        %v2245 = vadd.f32 %v2033, %v2145
        %v2246 = vadd.f32 %v2034, %v2150
        %v2247 = vadd.f32 %v2035, %v2153
        %v2248 = vadd.f32 %v2036, %v2158
        %v2249 = vadd.f32 %v2037, %v2161
        %v2250 = vadd.f32 %v2038, %v2166
        %v2251 = vadd.f32 %v2039, %v2169
        %v2252 = vadd.f32 %v2040, %v2174
        %v2253 = vadd.f32 %v2041, %v2177
        %v2254 = vadd.f32 %v2042, %v2182
        %v2255 = vadd.f32 %v2043, %v2185
        %v2256 = vadd.f32 %v2044, %v2190
        %v2257 = vadd.f32 %v2045, %v2193
        %v2258 = vadd.f32 %v2046, %v2198
        %v2259 = vadd.f32 %v2047, %v2201
        %v2260 = vadd.f32 %v2048, %v2206
        %v2261 = vadd.f32 %v2049, %v2209
        %v2262 = vadd.f32 %v2050, %v2214
        %v2263 = vadd.f32 %v2051, %v2217
        %v2264 = vadd.f32 %v2052, %v2222
        %v2265 = vadd.f32 %v2053, %v2225
        %v2266 = vadd.f32 %v2054, %v2230
        %v2267 = vadd.f32 %v2055, %v2233
        %s2268 = scalar_lea.vmem %s1, 12
        %v2269 = vld [vmem:[%s2268] sm:$0x3]
        %v2272 = vunpack.c.l.b16 %v248
        %v2273 = vunpack.c.l.b16 %v249
        %v2274 = vpack.c.b16 %v2273, %v2272
        %v2276 = vsel %vm691, %v2274, 0
        %v2279 = vsel %vm740, %v2269, 0
        %2281 = vmatprep.subr.bf16.mxu0 0
        %2282 = vmatpush1.bf16.msra.mxu0 0
        %2283 = vmatprep.subr.bf16.mxu0 0
        %2284 = vmatpush1.bf16.msra.mxu0 0
        %2285 = vmatprep.subr.bf16.mxu0 0
        %2286 = vmatpush1.bf16.msra.mxu0 0
        %2287 = vmatprep.subr.bf16.mxu0 0
        %2288 = vmatpush1.bf16.msra.mxu0 0
        %2289 = vmatprep.subr.bf16.mxu0 0
        %2290 = vmatpush1.bf16.msra.mxu0 0
        %2291 = vmatprep.subr.bf16.mxu0 0
        %2292 = vmatpush1.bf16.msra.mxu0 0
        %2293 = vmatprep.subr.bf16.mxu0 0
        %2294 = vmatpush1.bf16.msra.mxu0 0
        %2295 = vmatprep.subr.bf16.mxu0 0
        %2296 = vmatpush1.bf16.msra.mxu0 %v2279
        %2297 = vmatprep.subr.bf16.mxu0 0
        %2298 = vmatpush2.bf16.msra.mxu0 0
        %2299 = vmatprep.subr.bf16.mxu0 0
        %2300 = vmatpush2.bf16.msra.mxu0 0
        %2301 = vmatprep.subr.bf16.mxu0 0
        %2302 = vmatpush2.bf16.msra.mxu0 0
        %2303 = vmatprep.subr.bf16.mxu0 0
        %2304 = vmatpush2.bf16.msra.mxu0 0
        %2305 = vmatprep.subr.bf16.mxu0 0
        %2306 = vmatpush2.bf16.msra.mxu0 0
        %2307 = vmatprep.subr.bf16.mxu0 0
        %2308 = vmatpush2.bf16.msra.mxu0 0
        %2309 = vmatprep.subr.bf16.mxu0 0
        %2310 = vmatpush2.bf16.msra.mxu0 0
        %2311 = vmatprep.subr.bf16.mxu0 0
        %2312 = vmatpush2.bf16.msra.mxu0 0
        %2313 = vmatprep.mubr.bf16.mxu0 0
        %2314 = vmatmul.mubr.bf16.gmra.mxu0 %v992
        %v2315 = vpop.f32.mrf.mxu0
        %v2316 = vadd.f32 0.0, %v2315
        %v2317 = vpop.f32.mrf.mxu0
        %v2318 = vpop.f32.mrf.mxu0
        %v2319 = vadd.f32 0.0, %v2318
        %v2320 = vpop.f32.mrf.mxu0
        %2321 = vmatprep.mubr.bf16.mxu0 0
        %2322 = vmatmul.mubr.bf16.gmra.mxu0 %v995
        %v2323 = vpop.f32.mrf.mxu0
        %v2324 = vadd.f32 0.0, %v2323
        %v2325 = vpop.f32.mrf.mxu0
        %v2326 = vpop.f32.mrf.mxu0
        %v2327 = vadd.f32 0.0, %v2326
        %v2328 = vpop.f32.mrf.mxu0
        %2329 = vmatprep.mubr.bf16.mxu0 0
        %2330 = vmatmul.mubr.bf16.gmra.mxu0 %v998
        %v2331 = vpop.f32.mrf.mxu0
        %v2332 = vadd.f32 0.0, %v2331
        %v2333 = vpop.f32.mrf.mxu0
        %v2334 = vpop.f32.mrf.mxu0
        %v2335 = vadd.f32 0.0, %v2334
        %v2336 = vpop.f32.mrf.mxu0
        %2337 = vmatprep.mubr.bf16.mxu0 0
        %2338 = vmatmul.mubr.bf16.gmra.mxu0 %v1001
        %v2339 = vpop.f32.mrf.mxu0
        %v2340 = vadd.f32 0.0, %v2339
        %v2341 = vpop.f32.mrf.mxu0
        %v2342 = vpop.f32.mrf.mxu0
        %v2343 = vadd.f32 0.0, %v2342
        %v2344 = vpop.f32.mrf.mxu0
        %2345 = vmatprep.mubr.bf16.mxu0 0
        %2346 = vmatmul.mubr.bf16.gmra.mxu0 %v1004
        %v2347 = vpop.f32.mrf.mxu0
        %v2348 = vadd.f32 0.0, %v2347
        %v2349 = vpop.f32.mrf.mxu0
        %v2350 = vpop.f32.mrf.mxu0
        %v2351 = vadd.f32 0.0, %v2350
        %v2352 = vpop.f32.mrf.mxu0
        %2353 = vmatprep.mubr.bf16.mxu0 0
        %2354 = vmatmul.mubr.bf16.gmra.mxu0 %v1007
        %v2355 = vpop.f32.mrf.mxu0
        %v2356 = vadd.f32 0.0, %v2355
        %v2357 = vpop.f32.mrf.mxu0
        %v2358 = vpop.f32.mrf.mxu0
        %v2359 = vadd.f32 0.0, %v2358
        %v2360 = vpop.f32.mrf.mxu0
        %2361 = vmatprep.mubr.bf16.mxu0 0
        %2362 = vmatmul.mubr.bf16.gmra.mxu0 %v1010
        %v2363 = vpop.f32.mrf.mxu0
        %v2364 = vadd.f32 0.0, %v2363
        %v2365 = vpop.f32.mrf.mxu0
        %v2366 = vpop.f32.mrf.mxu0
        %v2367 = vadd.f32 0.0, %v2366
        %v2368 = vpop.f32.mrf.mxu0
        %2369 = vmatprep.mubr.bf16.mxu0 0
        %2370 = vmatmul.mubr.bf16.gmra.mxu0 %v1013
        %v2371 = vpop.f32.mrf.mxu0
        %v2372 = vadd.f32 0.0, %v2371
        %v2373 = vpop.f32.mrf.mxu0
        %v2374 = vpop.f32.mrf.mxu0
        %v2375 = vadd.f32 0.0, %v2374
        %v2376 = vpop.f32.mrf.mxu0
        %2377 = vmatprep.mubr.bf16.mxu0 0
        %2378 = vmatmul.mubr.bf16.gmra.mxu0 %v1016
        %v2379 = vpop.f32.mrf.mxu0
        %v2380 = vadd.f32 0.0, %v2379
        %v2381 = vpop.f32.mrf.mxu0
        %v2382 = vpop.f32.mrf.mxu0
        %v2383 = vadd.f32 0.0, %v2382
        %v2384 = vpop.f32.mrf.mxu0
        %2385 = vmatprep.mubr.bf16.mxu0 0
        %2386 = vmatmul.mubr.bf16.gmra.mxu0 %v1019
        %v2387 = vpop.f32.mrf.mxu0
        %v2388 = vadd.f32 0.0, %v2387
        %v2389 = vpop.f32.mrf.mxu0
        %v2390 = vpop.f32.mrf.mxu0
        %v2391 = vadd.f32 0.0, %v2390
        %v2392 = vpop.f32.mrf.mxu0
        %2393 = vmatprep.mubr.bf16.mxu0 0
        %2394 = vmatmul.mubr.bf16.gmra.mxu0 %v1022
        %v2395 = vpop.f32.mrf.mxu0
        %v2396 = vadd.f32 0.0, %v2395
        %v2397 = vpop.f32.mrf.mxu0
        %v2398 = vpop.f32.mrf.mxu0
        %v2399 = vadd.f32 0.0, %v2398
        %v2400 = vpop.f32.mrf.mxu0
        %2401 = vmatprep.mubr.bf16.mxu0 0
        %2402 = vmatmul.mubr.bf16.gmra.mxu0 %v1025
        %v2403 = vpop.f32.mrf.mxu0
        %v2404 = vadd.f32 0.0, %v2403
        %v2405 = vpop.f32.mrf.mxu0
        %v2406 = vpop.f32.mrf.mxu0
        %v2407 = vadd.f32 0.0, %v2406
        %v2408 = vpop.f32.mrf.mxu0
        %2409 = vmatprep.mubr.bf16.mxu0 0
        %2410 = vmatmul.mubr.bf16.gmra.mxu0 %v1028
        %v2411 = vpop.f32.mrf.mxu0
        %v2412 = vadd.f32 0.0, %v2411
        %v2413 = vpop.f32.mrf.mxu0
        %v2414 = vpop.f32.mrf.mxu0
        %v2415 = vadd.f32 0.0, %v2414
        %v2416 = vpop.f32.mrf.mxu0
        %2417 = vmatprep.mubr.bf16.mxu0 0
        %2418 = vmatmul.mubr.bf16.gmra.mxu0 %v1031
        %v2419 = vpop.f32.mrf.mxu0
        %v2420 = vadd.f32 0.0, %v2419
        %v2421 = vpop.f32.mrf.mxu0
        %v2422 = vpop.f32.mrf.mxu0
        %v2423 = vadd.f32 0.0, %v2422
        %v2424 = vpop.f32.mrf.mxu0
        %2425 = vmatprep.mubr.bf16.mxu0 0
        %2426 = vmatmul.mubr.bf16.gmra.mxu0 %v1630
        %v2427 = vpop.f32.mrf.mxu0
        %v2428 = vadd.f32 0.0, %v2427
        %v2429 = vpop.f32.mrf.mxu0
        %v2430 = vpop.f32.mrf.mxu0
        %v2431 = vadd.f32 0.0, %v2430
        %v2432 = vpop.f32.mrf.mxu0
        %2433 = vmatprep.mubr.bf16.mxu0 0
        %2434 = vmatmul.mubr.bf16.gmra.mxu0 %v2276
        %v2435 = vpop.f32.mrf.mxu0
        %v2436 = vadd.f32 0.0, %v2435
        %v2437 = vpop.f32.mrf.mxu0
        %v2438 = vpop.f32.mrf.mxu0
        %v2439 = vadd.f32 0.0, %v2438
        %v2440 = vpop.f32.mrf.mxu0
        %2441 = vdwg.mxu0
        %v2442 = vadd.f32 %v2236, %v2316
        %v2443 = vadd.f32 %v2237, %v2319
        %v2444 = vadd.f32 %v2238, %v2324
        %v2445 = vadd.f32 %v2239, %v2327
        %v2446 = vadd.f32 %v2240, %v2332
        %v2447 = vadd.f32 %v2241, %v2335
        %v2448 = vadd.f32 %v2242, %v2340
        %v2449 = vadd.f32 %v2243, %v2343
        %v2450 = vadd.f32 %v2244, %v2348
        %v2451 = vadd.f32 %v2245, %v2351
        %v2452 = vadd.f32 %v2246, %v2356
        %v2453 = vadd.f32 %v2247, %v2359
        %v2454 = vadd.f32 %v2248, %v2364
        %v2455 = vadd.f32 %v2249, %v2367
        %v2456 = vadd.f32 %v2250, %v2372
        %v2457 = vadd.f32 %v2251, %v2375
        %v2458 = vadd.f32 %v2252, %v2380
        %v2459 = vadd.f32 %v2253, %v2383
        %v2460 = vadd.f32 %v2254, %v2388
        %v2461 = vadd.f32 %v2255, %v2391
        %v2462 = vadd.f32 %v2256, %v2396
        %v2463 = vadd.f32 %v2257, %v2399
        %v2464 = vadd.f32 %v2258, %v2404
        %v2465 = vadd.f32 %v2259, %v2407
        %v2466 = vadd.f32 %v2260, %v2412
        %v2467 = vadd.f32 %v2261, %v2415
        %v2468 = vadd.f32 %v2262, %v2420
        %v2469 = vadd.f32 %v2263, %v2423
        %v2470 = vadd.f32 %v2264, %v2428
        %v2471 = vadd.f32 %v2265, %v2431
        %v2472 = vadd.f32 %v2266, %v2436
        %v2473 = vadd.f32 %v2267, %v2439
        %v2475 = vshrl.u32 %v248, 16
        %v2477 = vrot.slane %v2475, 4
        %v2478 = vshll.u32 %v248, 16
        %v2480 = vrot.slane %v2478, 5
        %v2481 = vor.u32 %v2477, %v2480
        %v2482 = vrot.slane %v2481, 4
        %v2484 = vshll.u32 %v249, 16
        %v2486 = vrot.slane %v2484, 5
        %v2487 = vsel %vm256, %v2482, %v2486
        %v2488 = vshrl.u32 %v249, 16
        %v2490 = vrot.slane %v2488, 4
        %v2491 = vor.u32 %v2490, %v2486
        %v2492 = vrot.slane %v2491, 4
        %v2494 = vshll.u32 %v250, 16
        %v2496 = vrot.slane %v2494, 5
        %v2497 = vsel %vm256, %v2492, %v2496
        %s2498 = scalar_lea.vmem %s1, 14
        %v2499 = vld [vmem:[%s2498] sm:$0x3]
        %v2500 = vunpack.c.l.b16 %v2487
        %v2501 = vunpack.c.l.b16 %v2497
        %v2502 = vpack.c.b16 %v2501, %v2500
        %v2504 = vsel %vm691, %v2502, 0
        %v2507 = vsel %vm740, %v2499, 0
        %2509 = vmatprep.subr.bf16.mxu0 0
        %2510 = vmatpush1.bf16.msra.mxu0 0
        %2511 = vmatprep.subr.bf16.mxu0 0
        %2512 = vmatpush1.bf16.msra.mxu0 0
        %2513 = vmatprep.subr.bf16.mxu0 0
        %2514 = vmatpush1.bf16.msra.mxu0 0
        %2515 = vmatprep.subr.bf16.mxu0 0
        %2516 = vmatpush1.bf16.msra.mxu0 0
        %2517 = vmatprep.subr.bf16.mxu0 0
        %2518 = vmatpush1.bf16.msra.mxu0 0
        %2519 = vmatprep.subr.bf16.mxu0 0
        %2520 = vmatpush1.bf16.msra.mxu0 0
        %2521 = vmatprep.subr.bf16.mxu0 0
        %2522 = vmatpush1.bf16.msra.mxu0 0
        %2523 = vmatprep.subr.bf16.mxu0 0
        %2524 = vmatpush1.bf16.msra.mxu0 %v2507
        %2525 = vmatprep.subr.bf16.mxu0 0
        %2526 = vmatpush2.bf16.msra.mxu0 0
        %2527 = vmatprep.subr.bf16.mxu0 0
        %2528 = vmatpush2.bf16.msra.mxu0 0
        %2529 = vmatprep.subr.bf16.mxu0 0
        %2530 = vmatpush2.bf16.msra.mxu0 0
        %2531 = vmatprep.subr.bf16.mxu0 0
        %2532 = vmatpush2.bf16.msra.mxu0 0
        %2533 = vmatprep.subr.bf16.mxu0 0
        %2534 = vmatpush2.bf16.msra.mxu0 0
        %2535 = vmatprep.subr.bf16.mxu0 0
        %2536 = vmatpush2.bf16.msra.mxu0 0
        %2537 = vmatprep.subr.bf16.mxu0 0
        %2538 = vmatpush2.bf16.msra.mxu0 0
        %2539 = vmatprep.subr.bf16.mxu0 0
        %2540 = vmatpush2.bf16.msra.mxu0 0
        %2541 = vmatprep.mubr.bf16.mxu0 0
        %2542 = vmatmul.mubr.bf16.gmra.mxu0 %v699
        %v2543 = vpop.f32.mrf.mxu0
        %v2544 = vadd.f32 0.0, %v2543
        %v2545 = vpop.f32.mrf.mxu0
        %v2546 = vpop.f32.mrf.mxu0
        %v2547 = vadd.f32 0.0, %v2546
        %v2548 = vpop.f32.mrf.mxu0
        %2549 = vmatprep.mubr.bf16.mxu0 0
        %2550 = vmatmul.mubr.bf16.gmra.mxu0 %v702
        %v2551 = vpop.f32.mrf.mxu0
        %v2552 = vadd.f32 0.0, %v2551
        %v2553 = vpop.f32.mrf.mxu0
        %v2554 = vpop.f32.mrf.mxu0
        %v2555 = vadd.f32 0.0, %v2554
        %v2556 = vpop.f32.mrf.mxu0
        %2557 = vmatprep.mubr.bf16.mxu0 0
        %2558 = vmatmul.mubr.bf16.gmra.mxu0 %v705
        %v2559 = vpop.f32.mrf.mxu0
        %v2560 = vadd.f32 0.0, %v2559
        %v2561 = vpop.f32.mrf.mxu0
        %v2562 = vpop.f32.mrf.mxu0
        %v2563 = vadd.f32 0.0, %v2562
        %v2564 = vpop.f32.mrf.mxu0
        %2565 = vmatprep.mubr.bf16.mxu0 0
        %2566 = vmatmul.mubr.bf16.gmra.mxu0 %v708
        %v2567 = vpop.f32.mrf.mxu0
        %v2568 = vadd.f32 0.0, %v2567
        %v2569 = vpop.f32.mrf.mxu0
        %v2570 = vpop.f32.mrf.mxu0
        %v2571 = vadd.f32 0.0, %v2570
        %v2572 = vpop.f32.mrf.mxu0
        %2573 = vmatprep.mubr.bf16.mxu0 0
        %2574 = vmatmul.mubr.bf16.gmra.mxu0 %v711
        %v2575 = vpop.f32.mrf.mxu0
        %v2576 = vadd.f32 0.0, %v2575
        %v2577 = vpop.f32.mrf.mxu0
        %v2578 = vpop.f32.mrf.mxu0
        %v2579 = vadd.f32 0.0, %v2578
        %v2580 = vpop.f32.mrf.mxu0
        %2581 = vmatprep.mubr.bf16.mxu0 0
        %2582 = vmatmul.mubr.bf16.gmra.mxu0 %v714
        %v2583 = vpop.f32.mrf.mxu0
        %v2584 = vadd.f32 0.0, %v2583
        %v2585 = vpop.f32.mrf.mxu0
        %v2586 = vpop.f32.mrf.mxu0
        %v2587 = vadd.f32 0.0, %v2586
        %v2588 = vpop.f32.mrf.mxu0
        %2589 = vmatprep.mubr.bf16.mxu0 0
        %2590 = vmatmul.mubr.bf16.gmra.mxu0 %v717
        %v2591 = vpop.f32.mrf.mxu0
        %v2592 = vadd.f32 0.0, %v2591
        %v2593 = vpop.f32.mrf.mxu0
        %v2594 = vpop.f32.mrf.mxu0
        %v2595 = vadd.f32 0.0, %v2594
        %v2596 = vpop.f32.mrf.mxu0
        %2597 = vmatprep.mubr.bf16.mxu0 0
        %2598 = vmatmul.mubr.bf16.gmra.mxu0 %v720
        %v2599 = vpop.f32.mrf.mxu0
        %v2600 = vadd.f32 0.0, %v2599
        %v2601 = vpop.f32.mrf.mxu0
        %v2602 = vpop.f32.mrf.mxu0
        %v2603 = vadd.f32 0.0, %v2602
        %v2604 = vpop.f32.mrf.mxu0
        %2605 = vmatprep.mubr.bf16.mxu0 0
        %2606 = vmatmul.mubr.bf16.gmra.mxu0 %v723
        %v2607 = vpop.f32.mrf.mxu0
        %v2608 = vadd.f32 0.0, %v2607
        %v2609 = vpop.f32.mrf.mxu0
        %v2610 = vpop.f32.mrf.mxu0
        %v2611 = vadd.f32 0.0, %v2610
        %v2612 = vpop.f32.mrf.mxu0
        %2613 = vmatprep.mubr.bf16.mxu0 0
        %2614 = vmatmul.mubr.bf16.gmra.mxu0 %v726
        %v2615 = vpop.f32.mrf.mxu0
        %v2616 = vadd.f32 0.0, %v2615
        %v2617 = vpop.f32.mrf.mxu0
        %v2618 = vpop.f32.mrf.mxu0
        %v2619 = vadd.f32 0.0, %v2618
        %v2620 = vpop.f32.mrf.mxu0
        %2621 = vmatprep.mubr.bf16.mxu0 0
        %2622 = vmatmul.mubr.bf16.gmra.mxu0 %v729
        %v2623 = vpop.f32.mrf.mxu0
        %v2624 = vadd.f32 0.0, %v2623
        %v2625 = vpop.f32.mrf.mxu0
        %v2626 = vpop.f32.mrf.mxu0
        %v2627 = vadd.f32 0.0, %v2626
        %v2628 = vpop.f32.mrf.mxu0
        %2629 = vmatprep.mubr.bf16.mxu0 0
        %2630 = vmatmul.mubr.bf16.gmra.mxu0 %v732
        %v2631 = vpop.f32.mrf.mxu0
        %v2632 = vadd.f32 0.0, %v2631
        %v2633 = vpop.f32.mrf.mxu0
        %v2634 = vpop.f32.mrf.mxu0
        %v2635 = vadd.f32 0.0, %v2634
        %v2636 = vpop.f32.mrf.mxu0
        %2637 = vmatprep.mubr.bf16.mxu0 0
        %2638 = vmatmul.mubr.bf16.gmra.mxu0 %v735
        %v2639 = vpop.f32.mrf.mxu0
        %v2640 = vadd.f32 0.0, %v2639
        %v2641 = vpop.f32.mrf.mxu0
        %v2642 = vpop.f32.mrf.mxu0
        %v2643 = vadd.f32 0.0, %v2642
        %v2644 = vpop.f32.mrf.mxu0
        %2645 = vmatprep.mubr.bf16.mxu0 0
        %2646 = vmatmul.mubr.bf16.gmra.mxu0 %v738
        %v2647 = vpop.f32.mrf.mxu0
        %v2648 = vadd.f32 0.0, %v2647
        %v2649 = vpop.f32.mrf.mxu0
        %v2650 = vpop.f32.mrf.mxu0
        %v2651 = vadd.f32 0.0, %v2650
        %v2652 = vpop.f32.mrf.mxu0
        %2653 = vmatprep.mubr.bf16.mxu0 0
        %2654 = vmatmul.mubr.bf16.gmra.mxu0 %v1858
        %v2655 = vpop.f32.mrf.mxu0
        %v2656 = vadd.f32 0.0, %v2655
        %v2657 = vpop.f32.mrf.mxu0
        %v2658 = vpop.f32.mrf.mxu0
        %v2659 = vadd.f32 0.0, %v2658
        %v2660 = vpop.f32.mrf.mxu0
        %2661 = vmatprep.mubr.bf16.mxu0 0
        %2662 = vmatmul.mubr.bf16.gmra.mxu0 %v2504
        %v2663 = vpop.f32.mrf.mxu0
        %v2664 = vadd.f32 0.0, %v2663
        %v2665 = vpop.f32.mrf.mxu0
        %v2666 = vpop.f32.mrf.mxu0
        %v2667 = vadd.f32 0.0, %v2666
        %v2668 = vpop.f32.mrf.mxu0
        %2669 = vdwg.mxu0
        %v2670 = vadd.f32 %v2442, %v2544
        %v2671 = vadd.f32 %v2443, %v2547
        %v2672 = vadd.f32 %v2444, %v2552
        %v2673 = vadd.f32 %v2445, %v2555
        %v2674 = vadd.f32 %v2446, %v2560
        %v2675 = vadd.f32 %v2447, %v2563
        %v2676 = vadd.f32 %v2448, %v2568
        %v2677 = vadd.f32 %v2449, %v2571
        %v2678 = vadd.f32 %v2450, %v2576
        %v2679 = vadd.f32 %v2451, %v2579
        %v2680 = vadd.f32 %v2452, %v2584
        %v2681 = vadd.f32 %v2453, %v2587
        %v2682 = vadd.f32 %v2454, %v2592
        %v2683 = vadd.f32 %v2455, %v2595
        %v2684 = vadd.f32 %v2456, %v2600
        %v2685 = vadd.f32 %v2457, %v2603
        %v2686 = vadd.f32 %v2458, %v2608
        %v2687 = vadd.f32 %v2459, %v2611
        %v2688 = vadd.f32 %v2460, %v2616
        %v2689 = vadd.f32 %v2461, %v2619
        %v2690 = vadd.f32 %v2462, %v2624
        %v2691 = vadd.f32 %v2463, %v2627
        %v2692 = vadd.f32 %v2464, %v2632
        %v2693 = vadd.f32 %v2465, %v2635
        %v2694 = vadd.f32 %v2466, %v2640
        %v2695 = vadd.f32 %v2467, %v2643
        %v2696 = vadd.f32 %v2468, %v2648
        %v2697 = vadd.f32 %v2469, %v2651
        %v2698 = vadd.f32 %v2470, %v2656
        %v2699 = vadd.f32 %v2471, %v2659
        %v2700 = vadd.f32 %v2472, %v2664
        %v2701 = vadd.f32 %v2473, %v2667
        %v2703 = vrot.slane %v248, 5
        %v2704 = vrot.slane %v2703, 4
        %v2705 = vrot.slane %v249, 5
        %v2706 = vsel %vm1215, %v2704, %v2705
        %v2707 = vrot.slane %v2705, 4
        %v2708 = vrot.slane %v250, 5
        %v2709 = vsel %vm1215, %v2707, %v2708
        %s2710 = scalar_lea.vmem %s1, 16
        %v2711 = vld [vmem:[%s2710] sm:$0x3]
        %v2712 = vunpack.c.l.b16 %v2706
        %v2713 = vunpack.c.l.b16 %v2709
        %v2714 = vpack.c.b16 %v2713, %v2712
        %v2716 = vsel %vm691, %v2714, 0
        %v2719 = vsel %vm740, %v2711, 0
        %2721 = vmatprep.subr.bf16.mxu0 0
        %2722 = vmatpush1.bf16.msra.mxu0 0
        %2723 = vmatprep.subr.bf16.mxu0 0
        %2724 = vmatpush1.bf16.msra.mxu0 0
        %2725 = vmatprep.subr.bf16.mxu0 0
        %2726 = vmatpush1.bf16.msra.mxu0 0
        %2727 = vmatprep.subr.bf16.mxu0 0
        %2728 = vmatpush1.bf16.msra.mxu0 0
        %2729 = vmatprep.subr.bf16.mxu0 0
        %2730 = vmatpush1.bf16.msra.mxu0 0
        %2731 = vmatprep.subr.bf16.mxu0 0
        %2732 = vmatpush1.bf16.msra.mxu0 0
        %2733 = vmatprep.subr.bf16.mxu0 0
        %2734 = vmatpush1.bf16.msra.mxu0 0
        %2735 = vmatprep.subr.bf16.mxu0 0
        %2736 = vmatpush1.bf16.msra.mxu0 %v2719
        %2737 = vmatprep.subr.bf16.mxu0 0
        %2738 = vmatpush2.bf16.msra.mxu0 0
        %2739 = vmatprep.subr.bf16.mxu0 0
        %2740 = vmatpush2.bf16.msra.mxu0 0
        %2741 = vmatprep.subr.bf16.mxu0 0
        %2742 = vmatpush2.bf16.msra.mxu0 0
        %2743 = vmatprep.subr.bf16.mxu0 0
        %2744 = vmatpush2.bf16.msra.mxu0 0
        %2745 = vmatprep.subr.bf16.mxu0 0
        %2746 = vmatpush2.bf16.msra.mxu0 0
        %2747 = vmatprep.subr.bf16.mxu0 0
        %2748 = vmatpush2.bf16.msra.mxu0 0
        %2749 = vmatprep.subr.bf16.mxu0 0
        %2750 = vmatpush2.bf16.msra.mxu0 0
        %2751 = vmatprep.subr.bf16.mxu0 0
        %2752 = vmatpush2.bf16.msra.mxu0 0
        %2753 = vmatprep.mubr.bf16.mxu0 0
        %2754 = vmatmul.mubr.bf16.gmra.mxu0 %v1385
        %v2755 = vpop.f32.mrf.mxu0
        %v2756 = vadd.f32 0.0, %v2755
        %v2757 = vpop.f32.mrf.mxu0
        %v2758 = vpop.f32.mrf.mxu0
        %v2759 = vadd.f32 0.0, %v2758
        %v2760 = vpop.f32.mrf.mxu0
        %2761 = vmatprep.mubr.bf16.mxu0 0
        %2762 = vmatmul.mubr.bf16.gmra.mxu0 %v1388
        %v2763 = vpop.f32.mrf.mxu0
        %v2764 = vadd.f32 0.0, %v2763
        %v2765 = vpop.f32.mrf.mxu0
        %v2766 = vpop.f32.mrf.mxu0
        %v2767 = vadd.f32 0.0, %v2766
        %v2768 = vpop.f32.mrf.mxu0
        %2769 = vmatprep.mubr.bf16.mxu0 0
        %2770 = vmatmul.mubr.bf16.gmra.mxu0 %v1391
        %v2771 = vpop.f32.mrf.mxu0
        %v2772 = vadd.f32 0.0, %v2771
        %v2773 = vpop.f32.mrf.mxu0
        %v2774 = vpop.f32.mrf.mxu0
        %v2775 = vadd.f32 0.0, %v2774
        %v2776 = vpop.f32.mrf.mxu0
        %2777 = vmatprep.mubr.bf16.mxu0 0
        %2778 = vmatmul.mubr.bf16.gmra.mxu0 %v1394
        %v2779 = vpop.f32.mrf.mxu0
        %v2780 = vadd.f32 0.0, %v2779
        %v2781 = vpop.f32.mrf.mxu0
        %v2782 = vpop.f32.mrf.mxu0
        %v2783 = vadd.f32 0.0, %v2782
        %v2784 = vpop.f32.mrf.mxu0
        %2785 = vmatprep.mubr.bf16.mxu0 0
        %2786 = vmatmul.mubr.bf16.gmra.mxu0 %v1397
        %v2787 = vpop.f32.mrf.mxu0
        %v2788 = vadd.f32 0.0, %v2787
        %v2789 = vpop.f32.mrf.mxu0
        %v2790 = vpop.f32.mrf.mxu0
        %v2791 = vadd.f32 0.0, %v2790
        %v2792 = vpop.f32.mrf.mxu0
        %2793 = vmatprep.mubr.bf16.mxu0 0
        %2794 = vmatmul.mubr.bf16.gmra.mxu0 %v1400
        %v2795 = vpop.f32.mrf.mxu0
        %v2796 = vadd.f32 0.0, %v2795
        %v2797 = vpop.f32.mrf.mxu0
        %v2798 = vpop.f32.mrf.mxu0
        %v2799 = vadd.f32 0.0, %v2798
        %v2800 = vpop.f32.mrf.mxu0
        %2801 = vmatprep.mubr.bf16.mxu0 0
        %2802 = vmatmul.mubr.bf16.gmra.mxu0 %v1403
        %v2803 = vpop.f32.mrf.mxu0
        %v2804 = vadd.f32 0.0, %v2803
        %v2805 = vpop.f32.mrf.mxu0
        %v2806 = vpop.f32.mrf.mxu0
        %v2807 = vadd.f32 0.0, %v2806
        %v2808 = vpop.f32.mrf.mxu0
        %2809 = vmatprep.mubr.bf16.mxu0 0
        %2810 = vmatmul.mubr.bf16.gmra.mxu0 %v1406
        %v2811 = vpop.f32.mrf.mxu0
        %v2812 = vadd.f32 0.0, %v2811
        %v2813 = vpop.f32.mrf.mxu0
        %v2814 = vpop.f32.mrf.mxu0
        %v2815 = vadd.f32 0.0, %v2814
        %v2816 = vpop.f32.mrf.mxu0
        %2817 = vmatprep.mubr.bf16.mxu0 0
        %2818 = vmatmul.mubr.bf16.gmra.mxu0 %v1409
        %v2819 = vpop.f32.mrf.mxu0
        %v2820 = vadd.f32 0.0, %v2819
        %v2821 = vpop.f32.mrf.mxu0
        %v2822 = vpop.f32.mrf.mxu0
        %v2823 = vadd.f32 0.0, %v2822
        %v2824 = vpop.f32.mrf.mxu0
        %2825 = vmatprep.mubr.bf16.mxu0 0
        %2826 = vmatmul.mubr.bf16.gmra.mxu0 %v1412
        %v2827 = vpop.f32.mrf.mxu0
        %v2828 = vadd.f32 0.0, %v2827
        %v2829 = vpop.f32.mrf.mxu0
        %v2830 = vpop.f32.mrf.mxu0
        %v2831 = vadd.f32 0.0, %v2830
        %v2832 = vpop.f32.mrf.mxu0
        %2833 = vmatprep.mubr.bf16.mxu0 0
        %2834 = vmatmul.mubr.bf16.gmra.mxu0 %v1415
        %v2835 = vpop.f32.mrf.mxu0
        %v2836 = vadd.f32 0.0, %v2835
        %v2837 = vpop.f32.mrf.mxu0
        %v2838 = vpop.f32.mrf.mxu0
        %v2839 = vadd.f32 0.0, %v2838
        %v2840 = vpop.f32.mrf.mxu0
        %2841 = vmatprep.mubr.bf16.mxu0 0
        %2842 = vmatmul.mubr.bf16.gmra.mxu0 %v1418
        %v2843 = vpop.f32.mrf.mxu0
        %v2844 = vadd.f32 0.0, %v2843
        %v2845 = vpop.f32.mrf.mxu0
        %v2846 = vpop.f32.mrf.mxu0
        %v2847 = vadd.f32 0.0, %v2846
        %v2848 = vpop.f32.mrf.mxu0
        %2849 = vmatprep.mubr.bf16.mxu0 0
        %2850 = vmatmul.mubr.bf16.gmra.mxu0 %v1421
        %v2851 = vpop.f32.mrf.mxu0
        %v2852 = vadd.f32 0.0, %v2851
        %v2853 = vpop.f32.mrf.mxu0
        %v2854 = vpop.f32.mrf.mxu0
        %v2855 = vadd.f32 0.0, %v2854
        %v2856 = vpop.f32.mrf.mxu0
        %2857 = vmatprep.mubr.bf16.mxu0 0
        %2858 = vmatmul.mubr.bf16.gmra.mxu0 %v1424
        %v2859 = vpop.f32.mrf.mxu0
        %v2860 = vadd.f32 0.0, %v2859
        %v2861 = vpop.f32.mrf.mxu0
        %v2862 = vpop.f32.mrf.mxu0
        %v2863 = vadd.f32 0.0, %v2862
        %v2864 = vpop.f32.mrf.mxu0
        %2865 = vmatprep.mubr.bf16.mxu0 0
        %2866 = vmatmul.mubr.bf16.gmra.mxu0 %v2070
        %v2867 = vpop.f32.mrf.mxu0
        %v2868 = vadd.f32 0.0, %v2867
        %v2869 = vpop.f32.mrf.mxu0
        %v2870 = vpop.f32.mrf.mxu0
        %v2871 = vadd.f32 0.0, %v2870
        %v2872 = vpop.f32.mrf.mxu0
        %2873 = vmatprep.mubr.bf16.mxu0 0
        %2874 = vmatmul.mubr.bf16.gmra.mxu0 %v2716
        %v2875 = vpop.f32.mrf.mxu0
        %v2876 = vadd.f32 0.0, %v2875
        %v2877 = vpop.f32.mrf.mxu0
        %v2878 = vpop.f32.mrf.mxu0
        %v2879 = vadd.f32 0.0, %v2878
        %v2880 = vpop.f32.mrf.mxu0
        %2881 = vdwg.mxu0
        %v2882 = vadd.f32 %v2670, %v2756
        %v2883 = vadd.f32 %v2671, %v2759
        %v2884 = vadd.f32 %v2672, %v2764
        %v2885 = vadd.f32 %v2673, %v2767
        %v2886 = vadd.f32 %v2674, %v2772
        %v2887 = vadd.f32 %v2675, %v2775
        %v2888 = vadd.f32 %v2676, %v2780
        %v2889 = vadd.f32 %v2677, %v2783
        %v2890 = vadd.f32 %v2678, %v2788
        %v2891 = vadd.f32 %v2679, %v2791
        %v2892 = vadd.f32 %v2680, %v2796
        %v2893 = vadd.f32 %v2681, %v2799
        %v2894 = vadd.f32 %v2682, %v2804
        %v2895 = vadd.f32 %v2683, %v2807
        %v2896 = vadd.f32 %v2684, %v2812
        %v2897 = vadd.f32 %v2685, %v2815
        %v2898 = vadd.f32 %v2686, %v2820
        %v2899 = vadd.f32 %v2687, %v2823
        %v2900 = vadd.f32 %v2688, %v2828
        %v2901 = vadd.f32 %v2689, %v2831
        %v2902 = vadd.f32 %v2690, %v2836
        %v2903 = vadd.f32 %v2691, %v2839
        %v2904 = vadd.f32 %v2692, %v2844
        %v2905 = vadd.f32 %v2693, %v2847
        %v2906 = vadd.f32 %v2694, %v2852
        %v2907 = vadd.f32 %v2695, %v2855
        %v2908 = vadd.f32 %v2696, %v2860
        %v2909 = vadd.f32 %v2697, %v2863
        %v2910 = vadd.f32 %v2698, %v2868
        %v2911 = vadd.f32 %v2699, %v2871
        %v2912 = vadd.f32 %v2700, %v2876
        %v2913 = vadd.f32 %v2701, %v2879
        %v2915 = vlaneseq
        %v2916 = vshrl.u32 %v2915, 7
        %v2917 = vsub.s32 0, %v2916
        %v2918 = vrot.slane %v251, %v2917
        %v2920 = vmul.f32 %v2882, %v2918
        %v2921 = vmul.f32 %v2883, %v2918
        %v2922 = vmul.f32 %v2884, %v2918
        %v2923 = vmul.f32 %v2885, %v2918
        %v2924 = vmul.f32 %v2886, %v2918
        %v2925 = vmul.f32 %v2887, %v2918
        %v2926 = vmul.f32 %v2888, %v2918
        %v2927 = vmul.f32 %v2889, %v2918
        %v2928 = vmul.f32 %v2890, %v2918
        %v2929 = vmul.f32 %v2891, %v2918
        %v2930 = vmul.f32 %v2892, %v2918
        %v2931 = vmul.f32 %v2893, %v2918
        %v2932 = vmul.f32 %v2894, %v2918
        %v2933 = vmul.f32 %v2895, %v2918
        %v2934 = vmul.f32 %v2896, %v2918
        %v2935 = vmul.f32 %v2897, %v2918
        %v2936 = vmul.f32 %v2898, %v2918
        %v2937 = vmul.f32 %v2899, %v2918
        %v2938 = vmul.f32 %v2900, %v2918
        %v2939 = vmul.f32 %v2901, %v2918
        %v2940 = vmul.f32 %v2902, %v2918
        %v2941 = vmul.f32 %v2903, %v2918
        %v2942 = vmul.f32 %v2904, %v2918
        %v2943 = vmul.f32 %v2905, %v2918
        %v2944 = vmul.f32 %v2906, %v2918
        %v2945 = vmul.f32 %v2907, %v2918
        %v2946 = vmul.f32 %v2908, %v2918
        %v2947 = vmul.f32 %v2909, %v2918
        %v2948 = vmul.f32 %v2910, %v2918
        %v2949 = vmul.f32 %v2911, %v2918
        %v2950 = vmul.f32 %v2912, %v2918
        %v2951 = vmul.f32 %v2913, %v2918
        %v2953 = vlaneseq
        %v2954 = vshrl.u32 %v2953, 7
        %v2955 = vsub.s32 0, %v2954
        %v2956 = vrot.slane %v252, %v2955
        %v2958 = vadd.f32 %v2920, %v2956
        %v2959 = vadd.f32 %v2921, %v2956
        %v2960 = vadd.f32 %v2922, %v2956
        %v2961 = vadd.f32 %v2923, %v2956
        %v2962 = vadd.f32 %v2924, %v2956
        %v2963 = vadd.f32 %v2925, %v2956
        %v2964 = vadd.f32 %v2926, %v2956
        %v2965 = vadd.f32 %v2927, %v2956
        %v2966 = vadd.f32 %v2928, %v2956
        %v2967 = vadd.f32 %v2929, %v2956
        %v2968 = vadd.f32 %v2930, %v2956
        %v2969 = vadd.f32 %v2931, %v2956
        %v2970 = vadd.f32 %v2932, %v2956
        %v2971 = vadd.f32 %v2933, %v2956
        %v2972 = vadd.f32 %v2934, %v2956
        %v2973 = vadd.f32 %v2935, %v2956
        %v2974 = vadd.f32 %v2936, %v2956
        %v2975 = vadd.f32 %v2937, %v2956
        %v2976 = vadd.f32 %v2938, %v2956
        %v2977 = vadd.f32 %v2939, %v2956
        %v2978 = vadd.f32 %v2940, %v2956
        %v2979 = vadd.f32 %v2941, %v2956
        %v2980 = vadd.f32 %v2942, %v2956
        %v2981 = vadd.f32 %v2943, %v2956
        %v2982 = vadd.f32 %v2944, %v2956
        %v2983 = vadd.f32 %v2945, %v2956
        %v2984 = vadd.f32 %v2946, %v2956
        %v2985 = vadd.f32 %v2947, %v2956
        %v2986 = vadd.f32 %v2948, %v2956
        %v2987 = vadd.f32 %v2949, %v2956
        %v2988 = vadd.f32 %v2950, %v2956
        %v2989 = vadd.f32 %v2951, %v2956
        %v2990 = vxor.u32 %v2958, 2147483648
        %v2991 = vxor.u32 %v2959, 2147483648
        %v2992 = vxor.u32 %v2960, 2147483648
        %v2993 = vxor.u32 %v2961, 2147483648
        %v2994 = vxor.u32 %v2962, 2147483648
        %v2995 = vxor.u32 %v2963, 2147483648
        %v2996 = vxor.u32 %v2964, 2147483648
        %v2997 = vxor.u32 %v2965, 2147483648
        %v2998 = vxor.u32 %v2966, 2147483648
        %v2999 = vxor.u32 %v2967, 2147483648
        %v3000 = vxor.u32 %v2968, 2147483648
        %v3001 = vxor.u32 %v2969, 2147483648
        %v3002 = vxor.u32 %v2970, 2147483648
        %v3003 = vxor.u32 %v2971, 2147483648
        %v3004 = vxor.u32 %v2972, 2147483648
        %v3005 = vxor.u32 %v2973, 2147483648
        %v3006 = vxor.u32 %v2974, 2147483648
        %v3007 = vxor.u32 %v2975, 2147483648
        %v3008 = vxor.u32 %v2976, 2147483648
        %v3009 = vxor.u32 %v2977, 2147483648
        %v3010 = vxor.u32 %v2978, 2147483648
        %v3011 = vxor.u32 %v2979, 2147483648
        %v3012 = vxor.u32 %v2980, 2147483648
        %v3013 = vxor.u32 %v2981, 2147483648
        %v3014 = vxor.u32 %v2982, 2147483648
        %v3015 = vxor.u32 %v2983, 2147483648
        %v3016 = vxor.u32 %v2984, 2147483648
        %v3017 = vxor.u32 %v2985, 2147483648
        %v3018 = vxor.u32 %v2986, 2147483648
        %v3019 = vxor.u32 %v2987, 2147483648
        %v3020 = vxor.u32 %v2988, 2147483648
        %v3021 = vxor.u32 %v2989, 2147483648
        %v3022 = vmul.f32 %v2990, 1.442695
        %v3023 = vpow.pop %v3022
        %v3024 = vmul.f32 %v2991, 1.442695
        %v3025 = vpow.pop %v3024
        %v3026 = vmul.f32 %v2992, 1.442695
        %v3027 = vpow.pop %v3026
        %v3028 = vmul.f32 %v2993, 1.442695
        %v3029 = vpow.pop %v3028
        %v3030 = vmul.f32 %v2994, 1.442695
        %v3031 = vpow.pop %v3030
        %v3032 = vmul.f32 %v2995, 1.442695
        %v3033 = vpow.pop %v3032
        %v3034 = vmul.f32 %v2996, 1.442695
        %v3035 = vpow.pop %v3034
        %v3036 = vmul.f32 %v2997, 1.442695
        %v3037 = vpow.pop %v3036
        %v3038 = vmul.f32 %v2998, 1.442695
        %v3039 = vpow.pop %v3038
        %v3040 = vmul.f32 %v2999, 1.442695
        %v3041 = vpow.pop %v3040
        %v3042 = vmul.f32 %v3000, 1.442695
        %v3043 = vpow.pop %v3042
        %v3044 = vmul.f32 %v3001, 1.442695
        %v3045 = vpow.pop %v3044
        %v3046 = vmul.f32 %v3002, 1.442695
        %v3047 = vpow.pop %v3046
        %v3048 = vmul.f32 %v3003, 1.442695
        %v3049 = vpow.pop %v3048
        %v3050 = vmul.f32 %v3004, 1.442695
        %v3051 = vpow.pop %v3050
        %v3052 = vmul.f32 %v3005, 1.442695
        %v3053 = vpow.pop %v3052
        %v3054 = vmul.f32 %v3006, 1.442695
        %v3055 = vpow.pop %v3054
        %v3056 = vmul.f32 %v3007, 1.442695
        %v3057 = vpow.pop %v3056
        %v3058 = vmul.f32 %v3008, 1.442695
        %v3059 = vpow.pop %v3058
        %v3060 = vmul.f32 %v3009, 1.442695
        %v3061 = vpow.pop %v3060
        %v3062 = vmul.f32 %v3010, 1.442695
        %v3063 = vpow.pop %v3062
        %v3064 = vmul.f32 %v3011, 1.442695
        %v3065 = vpow.pop %v3064
        %v3066 = vmul.f32 %v3012, 1.442695
        %v3067 = vpow.pop %v3066
        %v3068 = vmul.f32 %v3013, 1.442695
        %v3069 = vpow.pop %v3068
        %v3070 = vmul.f32 %v3014, 1.442695
        %v3071 = vpow.pop %v3070
        %v3072 = vmul.f32 %v3015, 1.442695
        %v3073 = vpow.pop %v3072
        %v3074 = vmul.f32 %v3016, 1.442695
        %v3075 = vpow.pop %v3074
        %v3076 = vmul.f32 %v3017, 1.442695
        %v3077 = vpow.pop %v3076
        %v3078 = vmul.f32 %v3018, 1.442695
        %v3079 = vpow.pop %v3078
        %v3080 = vmul.f32 %v3019, 1.442695
        %v3081 = vpow.pop %v3080
        %v3082 = vmul.f32 %v3020, 1.442695
        %v3083 = vpow.pop %v3082
        %v3084 = vmul.f32 %v3021, 1.442695
        %v3085 = vpow.pop %v3084
        %v3086 = vadd.f32 %v3023, 1.0
        %v3087 = vadd.f32 %v3025, 1.0
        %v3088 = vadd.f32 %v3027, 1.0
        %v3089 = vadd.f32 %v3029, 1.0
        %v3090 = vadd.f32 %v3031, 1.0
        %v3091 = vadd.f32 %v3033, 1.0
        %v3092 = vadd.f32 %v3035, 1.0
        %v3093 = vadd.f32 %v3037, 1.0
        %v3094 = vadd.f32 %v3039, 1.0
        %v3095 = vadd.f32 %v3041, 1.0
        %v3096 = vadd.f32 %v3043, 1.0
        %v3097 = vadd.f32 %v3045, 1.0
        %v3098 = vadd.f32 %v3047, 1.0
        %v3099 = vadd.f32 %v3049, 1.0
        %v3100 = vadd.f32 %v3051, 1.0
        %v3101 = vadd.f32 %v3053, 1.0
        %v3102 = vadd.f32 %v3055, 1.0
        %v3103 = vadd.f32 %v3057, 1.0
        %v3104 = vadd.f32 %v3059, 1.0
        %v3105 = vadd.f32 %v3061, 1.0
        %v3106 = vadd.f32 %v3063, 1.0
        %v3107 = vadd.f32 %v3065, 1.0
        %v3108 = vadd.f32 %v3067, 1.0
        %v3109 = vadd.f32 %v3069, 1.0
        %v3110 = vadd.f32 %v3071, 1.0
        %v3111 = vadd.f32 %v3073, 1.0
        %v3112 = vadd.f32 %v3075, 1.0
        %v3113 = vadd.f32 %v3077, 1.0
        %v3114 = vadd.f32 %v3079, 1.0
        %v3115 = vadd.f32 %v3081, 1.0
        %v3116 = vadd.f32 %v3083, 1.0
        %v3117 = vadd.f32 %v3085, 1.0
        %v3118 = vrcp.pop %v3086
        %v3119 = vmul.f32 1.0, %v3118
        %v3120 = vrcp.pop %v3087
        %v3121 = vmul.f32 1.0, %v3120
        %v3122 = vrcp.pop %v3088
        %v3123 = vmul.f32 1.0, %v3122
        %v3124 = vrcp.pop %v3089
        %v3125 = vmul.f32 1.0, %v3124
        %v3126 = vrcp.pop %v3090
        %v3127 = vmul.f32 1.0, %v3126
        %v3128 = vrcp.pop %v3091
        %v3129 = vmul.f32 1.0, %v3128
        %v3130 = vrcp.pop %v3092
        %v3131 = vmul.f32 1.0, %v3130
        %v3132 = vrcp.pop %v3093
        %v3133 = vmul.f32 1.0, %v3132
        %v3134 = vrcp.pop %v3094
        %v3135 = vmul.f32 1.0, %v3134
        %v3136 = vrcp.pop %v3095
        %v3137 = vmul.f32 1.0, %v3136
        %v3138 = vrcp.pop %v3096
        %v3139 = vmul.f32 1.0, %v3138
        %v3140 = vrcp.pop %v3097
        %v3141 = vmul.f32 1.0, %v3140
        %v3142 = vrcp.pop %v3098
        %v3143 = vmul.f32 1.0, %v3142
        %v3144 = vrcp.pop %v3099
        %v3145 = vmul.f32 1.0, %v3144
        %v3146 = vrcp.pop %v3100
        %v3147 = vmul.f32 1.0, %v3146
        %v3148 = vrcp.pop %v3101
        %v3149 = vmul.f32 1.0, %v3148
        %v3150 = vrcp.pop %v3102
        %v3151 = vmul.f32 1.0, %v3150
        %v3152 = vrcp.pop %v3103
        %v3153 = vmul.f32 1.0, %v3152
        %v3154 = vrcp.pop %v3104
        %v3155 = vmul.f32 1.0, %v3154
        %v3156 = vrcp.pop %v3105
        %v3157 = vmul.f32 1.0, %v3156
        %v3158 = vrcp.pop %v3106
        %v3159 = vmul.f32 1.0, %v3158
        %v3160 = vrcp.pop %v3107
        %v3161 = vmul.f32 1.0, %v3160
        %v3162 = vrcp.pop %v3108
        %v3163 = vmul.f32 1.0, %v3162
        %v3164 = vrcp.pop %v3109
        %v3165 = vmul.f32 1.0, %v3164
        %v3166 = vrcp.pop %v3110
        %v3167 = vmul.f32 1.0, %v3166
        %v3168 = vrcp.pop %v3111
        %v3169 = vmul.f32 1.0, %v3168
        %v3170 = vrcp.pop %v3112
        %v3171 = vmul.f32 1.0, %v3170
        %v3172 = vrcp.pop %v3113
        %v3173 = vmul.f32 1.0, %v3172
        %v3174 = vrcp.pop %v3114
        %v3175 = vmul.f32 1.0, %v3174
        %v3176 = vrcp.pop %v3115
        %v3177 = vmul.f32 1.0, %v3176
        %v3178 = vrcp.pop %v3116
        %v3179 = vmul.f32 1.0, %v3178
        %v3180 = vrcp.pop %v3117
        %v3181 = vmul.f32 1.0, %v3180
        %v3182 = vmul.f32 %v2958, %v3119
        %v3183 = vmul.f32 %v2959, %v3121
        %v3184 = vmul.f32 %v2960, %v3123
        %v3185 = vmul.f32 %v2961, %v3125
        %v3186 = vmul.f32 %v2962, %v3127
        %v3187 = vmul.f32 %v2963, %v3129
        %v3188 = vmul.f32 %v2964, %v3131
        %v3189 = vmul.f32 %v2965, %v3133
        %v3190 = vmul.f32 %v2966, %v3135
        %v3191 = vmul.f32 %v2967, %v3137
        %v3192 = vmul.f32 %v2968, %v3139
        %v3193 = vmul.f32 %v2969, %v3141
        %v3194 = vmul.f32 %v2970, %v3143
        %v3195 = vmul.f32 %v2971, %v3145
        %v3196 = vmul.f32 %v2972, %v3147
        %v3197 = vmul.f32 %v2973, %v3149
        %v3198 = vmul.f32 %v2974, %v3151
        %v3199 = vmul.f32 %v2975, %v3153
        %v3200 = vmul.f32 %v2976, %v3155
        %v3201 = vmul.f32 %v2977, %v3157
        %v3202 = vmul.f32 %v2978, %v3159
        %v3203 = vmul.f32 %v2979, %v3161
        %v3204 = vmul.f32 %v2980, %v3163
        %v3205 = vmul.f32 %v2981, %v3165
        %v3206 = vmul.f32 %v2982, %v3167
        %v3207 = vmul.f32 %v2983, %v3169
        %v3208 = vmul.f32 %v2984, %v3171
        %v3209 = vmul.f32 %v2985, %v3173
        %v3210 = vmul.f32 %v2986, %v3175
        %v3211 = vmul.f32 %v2987, %v3177
        %v3212 = vmul.f32 %v2988, %v3179
        %v3213 = vmul.f32 %v2989, %v3181
        %v3214 = vpack.c.bf16 %v3183, %v3182
        %v3215 = vpack.c.bf16 %v3185, %v3184
        %v3216 = vpack.c.bf16 %v3187, %v3186
        %v3217 = vpack.c.bf16 %v3189, %v3188
        %v3218 = vpack.c.bf16 %v3191, %v3190
        %v3219 = vpack.c.bf16 %v3193, %v3192
        %v3220 = vpack.c.bf16 %v3195, %v3194
        %v3221 = vpack.c.bf16 %v3197, %v3196
        %v3222 = vpack.c.bf16 %v3199, %v3198
        %v3223 = vpack.c.bf16 %v3201, %v3200
        %v3224 = vpack.c.bf16 %v3203, %v3202
        %v3225 = vpack.c.bf16 %v3205, %v3204
        %v3226 = vpack.c.bf16 %v3207, %v3206
        %v3227 = vpack.c.bf16 %v3209, %v3208
        %v3228 = vpack.c.bf16 %v3211, %v3210
        %v3229 = vpack.c.bf16 %v3213, %v3212
        %v3246 = vunpack.c.l.b16 %v3214
        %v3247 = vunpack.c.h.b16 %v3214
        %v3248 = vunpack.c.l.b16 %v3215
        %v3249 = vunpack.c.h.b16 %v3215
        %v3250 = vunpack.c.l.b16 %v3216
        %v3251 = vunpack.c.h.b16 %v3216
        %v3252 = vunpack.c.l.b16 %v3217
        %v3253 = vunpack.c.h.b16 %v3217
        %v3254 = vunpack.c.l.b16 %v3218
        %v3255 = vunpack.c.h.b16 %v3218
        %v3256 = vunpack.c.l.b16 %v3219
        %v3257 = vunpack.c.h.b16 %v3219
        %v3258 = vunpack.c.l.b16 %v3220
        %v3259 = vunpack.c.h.b16 %v3220
        %v3260 = vunpack.c.l.b16 %v3221
        %v3261 = vunpack.c.h.b16 %v3221
        %v3262 = vunpack.c.l.b16 %v3222
        %v3263 = vunpack.c.h.b16 %v3222
        %v3264 = vunpack.c.l.b16 %v3223
        %v3265 = vunpack.c.h.b16 %v3223
        %v3266 = vunpack.c.l.b16 %v3224
        %v3267 = vunpack.c.h.b16 %v3224
        %v3268 = vunpack.c.l.b16 %v3225
        %v3269 = vunpack.c.h.b16 %v3225
        %v3270 = vunpack.c.l.b16 %v3226
        %v3271 = vunpack.c.h.b16 %v3226
        %v3272 = vunpack.c.l.b16 %v3227
        %v3273 = vunpack.c.h.b16 %v3227
        %v3274 = vunpack.c.l.b16 %v3228
        %v3275 = vunpack.c.h.b16 %v3228
        %v3276 = vunpack.c.l.b16 %v3229
        %v3277 = vunpack.c.h.b16 %v3229
        %v3278 = vpack.c.b16 %v3246, %v3246
        %v3279 = vpack.c.b16 %v3247, %v3247
        %v3280 = vpack.c.b16 %v3248, %v3248
        %v3281 = vpack.c.b16 %v3249, %v3249
        %v3282 = vpack.c.b16 %v3250, %v3250
        %v3283 = vpack.c.b16 %v3251, %v3251
        %v3284 = vpack.c.b16 %v3252, %v3252
        %v3285 = vpack.c.b16 %v3253, %v3253
        %v3286 = vpack.c.b16 %v3254, %v3254
        %v3287 = vpack.c.b16 %v3255, %v3255
        %v3288 = vpack.c.b16 %v3256, %v3256
        %v3289 = vpack.c.b16 %v3257, %v3257
        %v3290 = vpack.c.b16 %v3258, %v3258
        %v3291 = vpack.c.b16 %v3259, %v3259
        %v3292 = vpack.c.b16 %v3260, %v3260
        %v3293 = vpack.c.b16 %v3261, %v3261
        %v3294 = vpack.c.b16 %v3262, %v3262
        %v3295 = vpack.c.b16 %v3263, %v3263
        %v3296 = vpack.c.b16 %v3264, %v3264
        %v3297 = vpack.c.b16 %v3265, %v3265
        %v3298 = vpack.c.b16 %v3266, %v3266
        %v3299 = vpack.c.b16 %v3267, %v3267
        %v3300 = vpack.c.b16 %v3268, %v3268
        %v3301 = vpack.c.b16 %v3269, %v3269
        %v3302 = vpack.c.b16 %v3270, %v3270
        %v3303 = vpack.c.b16 %v3271, %v3271
        %v3304 = vpack.c.b16 %v3272, %v3272
        %v3305 = vpack.c.b16 %v3273, %v3273
        %v3306 = vpack.c.b16 %v3274, %v3274
        %v3307 = vpack.c.b16 %v3275, %v3275
        %v3308 = vpack.c.b16 %v3276, %v3276
        %v3309 = vpack.c.b16 %v3277, %v3277
        %vm3342 = vcmask 191488
        %3343 = vst.msk [vmem:[%s190] sm:$0xf] %vm3342, %v3278
        %3344 = vst.msk [vmem:[%s190 + $0x4] sm:$0xf] %vm3342, %v3279
        %3345 = vst.msk [vmem:[%s190 + $0x8] sm:$0xf] %vm3342, %v3280
        %3346 = vst.msk [vmem:[%s190 + $0xc] sm:$0xf] %vm3342, %v3281
        %3347 = vst.msk [vmem:[%s190 + $0x10] sm:$0xf] %vm3342, %v3282
        %3348 = vst.msk [vmem:[%s190 + $0x14] sm:$0xf] %vm3342, %v3283
        %3349 = vst.msk [vmem:[%s190 + $0x18] sm:$0xf] %vm3342, %v3284
        %3350 = vst.msk [vmem:[%s190 + $0x1c] sm:$0xf] %vm3342, %v3285
        %3351 = vst.msk [vmem:[%s190 + $0x20] sm:$0xf] %vm3342, %v3286
        %3352 = vst.msk [vmem:[%s190 + $0x24] sm:$0xf] %vm3342, %v3287
        %3353 = vst.msk [vmem:[%s190 + $0x28] sm:$0xf] %vm3342, %v3288
        %3354 = vst.msk [vmem:[%s190 + $0x2c] sm:$0xf] %vm3342, %v3289
        %3355 = vst.msk [vmem:[%s190 + $0x30] sm:$0xf] %vm3342, %v3290
        %3356 = vst.msk [vmem:[%s190 + $0x34] sm:$0xf] %vm3342, %v3291
        %3357 = vst.msk [vmem:[%s190 + $0x38] sm:$0xf] %vm3342, %v3292
        %3358 = vst.msk [vmem:[%s190 + $0x3c] sm:$0xf] %vm3342, %v3293
        %3359 = vst.msk [vmem:[%s190 + $0x40] sm:$0xf] %vm3342, %v3294
        %3360 = vst.msk [vmem:[%s190 + $0x44] sm:$0xf] %vm3342, %v3295
        %3361 = vst.msk [vmem:[%s190 + $0x48] sm:$0xf] %vm3342, %v3296
        %3362 = vst.msk [vmem:[%s190 + $0x4c] sm:$0xf] %vm3342, %v3297
        %3363 = vst.msk [vmem:[%s190 + $0x50] sm:$0xf] %vm3342, %v3298
        %3364 = vst.msk [vmem:[%s190 + $0x54] sm:$0xf] %vm3342, %v3299
        %3365 = vst.msk [vmem:[%s190 + $0x58] sm:$0xf] %vm3342, %v3300
        %3366 = vst.msk [vmem:[%s190 + $0x5c] sm:$0xf] %vm3342, %v3301
        %3367 = vst.msk [vmem:[%s190 + $0x60] sm:$0xf] %vm3342, %v3302
        %3368 = vst.msk [vmem:[%s190 + $0x64] sm:$0xf] %vm3342, %v3303
        %3369 = vst.msk [vmem:[%s190 + $0x68] sm:$0xf] %vm3342, %v3304
        %3370 = vst.msk [vmem:[%s190 + $0x6c] sm:$0xf] %vm3342, %v3305
        %3371 = vst.msk [vmem:[%s190 + $0x70] sm:$0xf] %vm3342, %v3306
        %3372 = vst.msk [vmem:[%s190 + $0x74] sm:$0xf] %vm3342, %v3307
        %3373 = vst.msk [vmem:[%s190 + $0x78] sm:$0xf] %vm3342, %v3308
        %3374 = vst.msk [vmem:[%s190 + $0x7c] sm:$0xf] %vm3342, %v3309
        %s3375 = sand.u32 %s115, 1
        %s3376 = scalar_lea.sflag [#allocation3], %s3375
        %s3377 = sand.u32 %s115, 1
        %s3378 = smul.addr %s3377, 128
        %s3379 = scalar_lea.vmem [#allocation2], %s3378
        // Predicated region
        $region37: #{tpu_custom_call.1} parent=35 // pred_check
          %p3380 = pneg %p125
        $region38: #{tpu_custom_call.1} parent=35 // pred_check_branch
          %3382 = sbr.rel (%p3380) target = $region40
        $region39: #{tpu_custom_call.1} parent=35 // pred_region
          %s3384 = ssub.s32 2048, 2048
          %3385 = vsyncadd %s3376, %s3384
          %s3386 = smul.addr %s18, 32
          %s3387 = smul.addr %s3386, 64
          %s3388 = scalar_lea.hbm %s4, %s3387
          %s3389 = sshll.u32 %s3379, 4
          %s3390 = int_to_ptr.vmem [resolvable:$true] %s3389
          %3395 = dma.vmem_to_hbm [thread:$0]  %s3390, 2048, %s3388, %s3376, 64, 64, 4
        $region40: #{tpu_custom_call.1} parent=35 // pred_fallthru
          _
      $region36: #{tpu_custom_call.1} parent=5 // pred_fallthru
        _
      %p3396 = scmp.le.s32.totalorder 2, %s13
      // Predicated region
      $region41: #{tpu_custom_call.1} parent=5 // pred_check
        %p3397 = pneg %p3396
      $region42: #{tpu_custom_call.1} parent=5 // pred_check_branch
        %3399 = sbr.rel (%p3397) target = $region44
      $region43: #{tpu_custom_call.1} parent=5 // pred_region
        %s3400 = ssub.s32 %s13, 2
        // Predicated region
        $region45: #{tpu_custom_call.1} parent=43 // pred_check
          %p3401 = pneg %p131
        $region46: #{tpu_custom_call.1} parent=43 // pred_check_branch
          %3403 = sbr.rel (%p3401) target = $region48
        $region47: #{tpu_custom_call.1} parent=43 // pred_region
          %s3404 = sand.u32 %s116, 1
          %s3405 = scalar_lea.sflag [#allocation3], %s3404
          %s3406 = sand.u32 %s116, 1
          %s3407 = smul.addr %s3406, 128
          %s3408 = scalar_lea.vmem [#allocation2], %s3407
          %3409 = dma.done %s3405, 2048
        $region48: #{tpu_custom_call.1} parent=43 // pred_fallthru
          _
      $region44: #{tpu_custom_call.1} parent=5 // pred_fallthru
        _
    $region6: #{tpu_custom_call.1} parent=1 // loop_footer
      %s17 = sadd.s32 1, %s13
    $region7: #{tpu_custom_call.1} parent=1 // loop_footer_branch
      %12 = sbr.rel target = $region3
    $region8: #{tpu_custom_call.1} parent=1 // loop_exit
      _
    %3410 = vsyncpa [#allocation3], 1
    %s3411 = scalar_lea.sflag [#allocation3], 1
    %3412 = vsyncpa %s3411, 1

</llo_original>
